<compile_context>
chip_gen: v7x
topology: tpu7x:2x2x1
jax: 0.10.0
libtpu: 0.0.40
codegen_flags: <defaults>
</compile_context>

<pallas_src>
import jax
import jax.numpy as jnp
from jax import lax
from jax.experimental import pallas as pl
from jax.experimental.pallas import tpu as pltpu

LANE = 128
BN_EPS = 1e-5


def _round_up(x, m):
    return (x + m - 1) // m * m


def _vmem_budget_bytes():
    """Generation-aware VMEM limit: ~3/4 of physical, capped at 100 MiB."""
    phys = 64 * 1024 * 1024           # conservative fallback (v7x physical size)
    try:
        phys = int(pltpu.get_tpu_info().vmem_capacity_bytes)
    except Exception:
        pass
    return int(min(phys * 3 // 4, 100 * 1024 * 1024))


VMEM_LIMIT = _vmem_budget_bytes()


def _pad2(a, rows, cols):
    return jnp.pad(a, ((0, rows - a.shape[0]), (0, cols - a.shape[1])))


def _pick_block_tile(n_rows, feat, budget):
    """Square (tile x tile) adjacency block; largest candidate whose double-buffered
    per-step working set fits comfortably in the VMEM budget."""
    n128 = _round_up(max(n_rows, 1), LANE)
    resident = 2 * (2 * feat * feat * 2 + 2 * feat * 4)   # W1/W2 (bf16) + biases, x2 buffers
    for t in (1024, 512, 256, 128):
        if t > n128:
            continue
        need = (2 * t * t * 2          # A block (bf16), double buffered
                + 2 * t * feat * 2     # neighbour x block (bf16)
                + 2 * t * feat * 2     # self x block (bf16)
                + 2 * t * feat * 2     # hpre out block (bf16)
                + t * feat * 4         # f32 aggregation accumulator scratch
                + 2 * 2 * 8 * feat * 4 # per-tile stats output block
                + resident)
        if need <= budget // 2:
            return t
    return 128


def _pick_bn_tile(n_pad, feat, budget):
    """bn_relu is pure streaming: use the largest row tile that divides n_pad."""
    for t in (8192, 4096, 2048, 1024, 512, 256, 128):
        if t <= n_pad and n_pad % t == 0:
            need = 2 * t * feat * 2 + 2 * t * feat * 4 + 2 * feat * feat * 2 + 8 * feat * 4
            if need <= budget // 2:
                return t
    return 128


# --------------------------------------------------------------------------------------
# Adjacency + block-sparsity metadata
# --------------------------------------------------------------------------------------
def dense_adjacency(edge_index, n_pad):
    """A[dst, src] += 1 (GINConv 'add' aggregation). bf16 is exact while any (dst, src)
    edge multiplicity stays < 256 (typical graphs: multiplicity 1)."""
    src, dst = edge_index[0], edge_index[1]
    A = jnp.zeros((n_pad, n_pad), jnp.float32).at[dst, src].add(1.0)
    return A.astype(jnp.bfloat16)


def block_metadata(edge_index, tile, n_rt, n_ct):
    """Per destination-row-tile: #nonzero adjacency column-blocks and their front-compacted
    column-block indices.  Padded entries repeat the last valid index so padded grid steps
    never trigger a new DMA (Pallas skips re-fetch when the block index is unchanged)."""
    src, dst = edge_index[0], edge_index[1]
    nz = jnp.zeros((n_rt, n_ct), jnp.int32).at[dst // tile, src // tile].add(1) > 0
    nblocks = jnp.sum(nz, axis=1).astype(jnp.int32)                        # (n_rt,)
    order = jnp.argsort(jnp.logical_not(nz).astype(jnp.int32), axis=1)     # nonzero cols first
    last = jnp.take_along_axis(order, jnp.maximum(nblocks - 1, 0)[:, None], axis=1)
    s_iota = jnp.arange(n_ct, dtype=jnp.int32)[None, :]
    block_col = jnp.where(s_iota < nblocks[:, None], order, last).astype(jnp.int32)
    return nblocks, block_col.reshape(-1)                                  # (n_rt * n_ct,)


# --------------------------------------------------------------------------------------
# Kernel 1: block-sparse aggregation + GINConv MLP (pre-BatchNorm) + per-tile BN partials.
# --------------------------------------------------------------------------------------
def _make_pre_kernel(tile, n_true, feat):
    def kernel(nb_ref, bc_ref, eps_ref, A_ref, xn_ref, xs_ref,
               wa_ref, ba_ref, wb_ref, bb_ref,
               hpre_ref, stats_ref, acc_ref):
        i = pl.program_id(0)
        s = pl.program_id(1)
        nblk = nb_ref[i]

        @pl.when(s == 0)
        def _init():
            acc_ref[...] = jnp.zeros_like(acc_ref)

        # block-sparse 'add' aggregation: only nonzero adjacency blocks are visited
        @pl.when(s < nblk)
        def _accumulate():
            acc_ref[...] += jnp.dot(A_ref[...], xn_ref[...],
                                    preferred_element_type=jnp.float32)

        @pl.when(s == pl.num_programs(1) - 1)
        def _finalize():
            h = acc_ref[...] + (1.0 + eps_ref[0]) * xs_ref[...].astype(jnp.float32)
            h = jnp.maximum(
                jnp.dot(h.astype(jnp.bfloat16), wa_ref[...],
                        preferred_element_type=jnp.float32) + ba_ref[...], 0.0)
            h = jnp.maximum(
                jnp.dot(h.astype(jnp.bfloat16), wb_ref[...],
                        preferred_element_type=jnp.float32) + bb_ref[...], 0.0)
            hpre_ref[...] = h.astype(hpre_ref.dtype)          # bf16 store: halves writeback

            # per-tile BatchNorm partial stats (row 0: sum, row 1: sum of squares),
            # padded rows masked out; reduced across tiles in plain JAX.
            rows = lax.broadcasted_iota(jnp.int32, (tile, 1), 0) + i * tile
            hm = jnp.where(rows < n_true, h, 0.0)
            ssum = jnp.sum(hm, axis=0, keepdims=True)                    # (1, feat)
            ssq = jnp.sum(hm * hm, axis=0, keepdims=True)                # (1, feat)
            ridx = lax.broadcasted_iota(jnp.int32, (8, feat), 0)
            stats = jnp.where(ridx == 0, ssum, 0.0) + jnp.where(ridx == 1, ssq, 0.0)
            stats_ref[...] = stats[None, :, :]

    return kernel


def _pre_bn(eps, nblocks, block_col, A, x, wa_bf, ba, wb_bf, bb, *, tile, n_true, feat):
    n_pad = x.shape[0]
    n_rt = n_pad // tile
    n_ct = n_pad // tile

    a_map = lambda i, s, nb, bc: (i, bc[i * n_ct + s])
    xn_map = lambda i, s, nb, bc: (bc[i * n_ct + s], 0)
    row_map = lambda i, s, nb, bc: (i, 0)
    res_map = lambda i, s, nb, bc: (0, 0)

    # advisory cost estimate (dense A@x is a worst-case upper bound)
    flops = 2 * n_pad * n_pad * feat + 4 * n_pad * feat * feat
    bytes_acc = (A.size * 2 + 2 * x.size * 2 + 2 * feat * feat * 2
                 + n_pad * feat * 2 + n_rt * 8 * feat * 4)

    grid_spec = pltpu.PrefetchScalarGridSpec(
        num_scalar_prefetch=2,
        grid=(n_rt, n_ct),
        in_specs=[
            pl.BlockSpec(memory_space=pltpu.MemorySpace.SMEM),  # eps scalar
            pl.BlockSpec((tile, tile), a_map),                  # adjacency block (bf16)
            pl.BlockSpec((tile, feat), xn_map),                 # neighbour features (bf16)
            pl.BlockSpec((tile, feat), row_map),                # self features (bf16)
            pl.BlockSpec((feat, feat), res_map),                # W1 (bf16)
            pl.BlockSpec((1, feat), res_map),                   # b1
            pl.BlockSpec((feat, feat), res_map),                # W2 (bf16)
            pl.BlockSpec((1, feat), res_map),                   # b2
        ],
        out_specs=(
            pl.BlockSpec((tile, feat), row_map),                               # hpre (bf16)
            pl.BlockSpec((1, 8, feat), lambda i, s, nb, bc: (i, 0, 0)),        # BN partials
        ),
        scratch_shapes=[pltpu.VMEM((tile, feat), jnp.float32)],
    )

    return pl.pallas_call(
        _make_pre_kernel(tile, n_true, feat),
        grid_spec=grid_spec,
        out_shape=(
            jax.ShapeDtypeStruct((n_pad, feat), jnp.bfloat16),
            jax.ShapeDtypeStruct((n_rt, 8, feat), jnp.float32),
        ),
        compiler_params=pltpu.CompilerParams(
            dimension_semantics=("parallel", "arbitrary"),   # rows: megacore; col blocks: reduce
            vmem_limit_bytes=VMEM_LIMIT),
        cost_estimate=pl.CostEstimate(flops=int(flops), transcendentals=0,
                                      bytes_accessed=int(bytes_acc)),
    )(nblocks, block_col, eps, A, x, x, wa_bf, ba, wb_bf, bb)


# --------------------------------------------------------------------------------------
# Kernel 2: BatchNorm (pre-folded scale/shift) + outer ReLU (+ optional final Linear).
# --------------------------------------------------------------------------------------
def _make_bn_relu_kernel(with_linear):
    if with_linear:
        def kernel(h_ref, scale_ref, shift_ref, wlin_ref, blin_ref, out_ref):
            h = jnp.maximum(h_ref[...].astype(jnp.float32) * scale_ref[...] + shift_ref[...], 0.0)
            y = jnp.dot(h.astype(jnp.bfloat16), wlin_ref[...],
                        preferred_element_type=jnp.float32) + blin_ref[...]
            out_ref[...] = y.astype(out_ref.dtype)
    else:
        def kernel(h_ref, scale_ref, shift_ref, out_ref):
            h = jnp.maximum(h_ref[...].astype(jnp.float32) * scale_ref[...] + shift_ref[...], 0.0)
            out_ref[...] = h.astype(out_ref.dtype)
    return kernel


def _bn_relu(hpre, scale, shift, *, tile, feat, wlin_bf=None, blin=None):
    n_pad = hpre.shape[0]
    grid = (n_pad // tile,)
    res = lambda i: (0, 0)
    with_linear = wlin_bf is not None

    in_specs = [pl.BlockSpec((tile, feat), lambda i: (i, 0)),
                pl.BlockSpec((1, feat), res),
                pl.BlockSpec((1, feat), res)]
    args = [hpre, scale, shift]
    if with_linear:
        in_specs += [pl.BlockSpec((feat, feat), res), pl.BlockSpec((1, feat), res)]
        args += [wlin_bf, blin]
        out_dtype = jnp.float32          # final model output
    else:
        out_dtype = jnp.bfloat16         # intermediate activations feed the next layer

    return pl.pallas_call(
        _make_bn_relu_kernel(with_linear),
        grid=grid,
        in_specs=in_specs,
        out_specs=pl.BlockSpec((tile, feat), lambda i: (i, 0)),
        out_shape=jax.ShapeDtypeStruct((n_pad, feat), out_dtype),
        compiler_params=pltpu.CompilerParams(
            dimension_semantics=("parallel",),
            vmem_limit_bytes=VMEM_LIMIT),
    )(*args)


# --------------------------------------------------------------------------------------
# Wrapper
# --------------------------------------------------------------------------------------
def init_params(key, input_dim, hidden_dim, output_dim):
    """Deterministic synthetic parameters. Linear weights returned as [in, out]."""
    def linear(k, fan_in, fan_out):
        k1, k2 = jax.random.split(k)
        bound = 1.0 / jnp.sqrt(fan_in)
        w = jax.random.uniform(k1, (fan_in, fan_out), jnp.float32, -bound, bound)
        b = jax.random.uniform(k2, (1, fan_out), jnp.float32, -bound, bound)
        return w, b

    keys = jax.random.split(key, 8)
    params = {}
    dims_in = [input_dim, hidden_dim, hidden_dim]
    for layer in range(3):
        wa, ba = linear(keys[2 * layer], dims_in[layer], hidden_dim)
        wb, bb = linear(keys[2 * layer + 1], hidden_dim, hidden_dim)
        gamma = jnp.ones((1, hidden_dim), jnp.float32)
        beta = jnp.zeros((1, hidden_dim), jnp.float32)
        params[f"l{layer + 1}"] = (wa, ba, wb, bb, gamma, beta)
    params["lin"] = linear(keys[6], hidden_dim, output_dim)
    params["eps"] = jnp.zeros((3,), jnp.float32)   # train_eps=True -> eps init 0.0
    return params


def gin_forward(x, edge_index, params):
    n, input_dim = x.shape
    hidden_dim = params["l1"][0].shape[1]
    output_dim = params["lin"][0].shape[1]
    feat = _round_up(max(input_dim, hidden_dim, output_dim), LANE)

    tile = _pick_block_tile(n, feat, VMEM_LIMIT)
    n_pad = _round_up(n, tile)
    n_rt = n_pad // tile
    n_ct = n_pad // tile
    bn_tile = _pick_bn_tile(n_pad, feat, VMEM_LIMIT)   # decoupled, larger streaming tile

    A = dense_adjacency(edge_index, n_pad)
    nblocks, block_col = block_metadata(edge_index, tile, n_rt, n_ct)
    h = _pad2(x, n_pad, feat).astype(jnp.bfloat16)

    wlin, blin = params["lin"]
    wlin_bf = _pad2(wlin, feat, feat).astype(jnp.bfloat16)
    blin_p = _pad2(blin, 1, feat)
    eps = params["eps"]

    out_pad = None
    for li, name in enumerate(("l1", "l2", "l3")):
        wa, ba, wb, bb, gamma, beta = params[name]
        wa_bf = _pad2(wa, feat, feat).astype(jnp.bfloat16)
        wb_bf = _pad2(wb, feat, feat).astype(jnp.bfloat16)
        ba_p, bb_p = _pad2(ba, 1, feat), _pad2(bb, 1, feat)
        gamma_p, beta_p = _pad2(gamma, 1, feat), _pad2(beta, 1, feat)

        hpre, stats = _pre_bn(eps[li:li + 1], nblocks, block_col, A, h,
                              wa_bf, ba_p, wb_bf, bb_p,
                              tile=tile, n_true=n, feat=feat)

        # reduce per-tile BN partials + fold mean/var/gamma/beta into one FMA (tiny, plain JAX)
        ssum = jnp.sum(stats[:, 0, :], axis=0, keepdims=True)
        ssq = jnp.sum(stats[:, 1, :], axis=0, keepdims=True)
        mean = ssum / n
        var = jnp.maximum(ssq / n - mean * mean, 0.0)   # biased (training-mode) variance
        scale = gamma_p * lax.rsqrt(var + BN_EPS)
        shift = beta_p - mean * scale

        if name != "l3":
            h = _bn_relu(hpre, scale, shift, tile=bn_tile, feat=feat)
        else:
            out_pad = _bn_relu(hpre, scale, shift, tile=bn_tile, feat=feat,
                               wlin_bf=wlin_bf, blin=blin_p)
    # TODO(synk): fold BN+ReLU of layer L into layer L+1's pre kernel to drop two HBM
    # passes over h per layer (kept separate here for clarity/robustness).
    return out_pad[:n, :output_dim]


if __name__ == "__main__":
    N = 300            # nodes (not a multiple of the tile -> exercises padding + masking)
    E = 1200           # edges
    INPUT_DIM = 8
    HIDDEN_DIM = 32
    OUTPUT_DIM = 8

    key = jax.random.PRNGKey(0)
    kx, ke, kp = jax.random.split(key, 3)

    x = jax.random.normal(kx, (N, INPUT_DIM), jnp.float32)
    edge_index = jax.random.randint(ke, (2, E), 0, N, dtype=jnp.int32)
    params = init_params(kp, INPUT_DIM, HIDDEN_DIM, OUTPUT_DIM)

    fwd = jax.jit(gin_forward)
    out = jax.block_until_ready(fwd(x, edge_index, params))

    assert out.shape == (N, OUTPUT_DIM)
    assert bool(jnp.isfinite(out).all())
    print("KERNEL_OK")
</pallas_src>

<mosaic_0001>
module attributes {stable_mosaic.version = 11 : i64} {
  func.func private @main(%arg0: i32) attributes {dimension_semantics = [#tpu.dimension_semantics<core_parallel>], iteration_bounds = array<i64: 2>, tpu.core_type = #tpu.core_type<sc_scalar_subcore>, window_params = []} {
    return
  }
}

module attributes {stable_mosaic.version = 11 : i64} {
  func.func private @main(%arg0: i32) attributes {dimension_semantics = [#tpu.dimension_semantics<core_parallel>], iteration_bounds = array<i64: 2>, tpu.core_type = #tpu.core_type<sc_scalar_subcore>, window_params = []} {
    return
  }
}

module attributes {stable_mosaic.version = 11 : i64} {
  func.func @kernel(%arg0: i32, %arg1: i32, %arg2: memref<2xi32, #tpu.memory_space<smem>>, %arg3: memref<4xi32, #tpu.memory_space<smem>>, %arg4: memref<1xf32, #tpu.memory_space<smem>>, %arg5: memref<256x256xbf16, #tpu.memory_space<vmem>>, %arg6: memref<256x128xbf16, #tpu.memory_space<vmem>>, %arg7: memref<256x128xbf16, #tpu.memory_space<vmem>>, %arg8: memref<128x128xbf16, #tpu.memory_space<vmem>>, %arg9: memref<1x128xf32, #tpu.memory_space<vmem>>, %arg10: memref<128x128xbf16, #tpu.memory_space<vmem>>, %arg11: memref<1x128xf32, #tpu.memory_space<vmem>>, %arg12: memref<256x128xbf16, #tpu.memory_space<vmem>>, %arg13: memref<1x8x128xf32, #tpu.memory_space<vmem>>, %arg14: memref<256x128xf32, #tpu.memory_space<vmem>>) attributes {dimension_semantics = [#tpu.dimension_semantics<parallel>, #tpu.dimension_semantics<arbitrary>], iteration_bounds = array<i64: 2, 2>, scalar_prefetch = 2 : i64, scratch_operands = 1 : i64, tpu.core_type = #tpu.core_type<tc>, window_params = [{transform_indices = @transform_0, window_bounds = array<i64: 1>}, {transform_indices = @transform_1, window_bounds = array<i64: 256, 256>}, {transform_indices = @transform_2, window_bounds = array<i64: 256, 128>}, {transform_indices = @transform_3, window_bounds = array<i64: 256, 128>}, {pipeline_mode = #tpu.pipeline_mode<synchronous>, transform_indices = @transform_4, window_bounds = array<i64: 128, 128>}, {pipeline_mode = #tpu.pipeline_mode<synchronous>, transform_indices = @transform_5, window_bounds = array<i64: 1, 128>}, {pipeline_mode = #tpu.pipeline_mode<synchronous>, transform_indices = @transform_6, window_bounds = array<i64: 128, 128>}, {pipeline_mode = #tpu.pipeline_mode<synchronous>, transform_indices = @transform_7, window_bounds = array<i64: 1, 128>}, {transform_indices = @transform_8, window_bounds = array<i64: 256, 128>}, {transform_indices = @transform_9, window_bounds = array<i64: 1, 8, 128>}]} {
    %0 = arith.index_cast %arg0 : i32 to index
    %1 = memref.load %arg2[%0] : memref<2xi32, #tpu.memory_space<smem>>
    %c0_i32 = arith.constant 0 : i32
    %2 = arith.cmpi eq, %arg1, %c0_i32 : i32
    %3 = arith.extui %2 : i1 to i32
    %c0_i32_0 = arith.constant 0 : i32
    %4 = arith.cmpi ne, %3, %c0_i32_0 : i32
    scf.if %4 {
      %cst = arith.constant 0.000000e+00 : f32
      %11 = vector.broadcast %cst : f32 to vector<256x128xf32>
      %c0 = arith.constant 0 : index
      %c0_3 = arith.constant 0 : index
      %12 = vector.load %arg14[%c0, %c0_3] : memref<256x128xf32, #tpu.memory_space<vmem>>, vector<256x128xf32>
      tpu.vector_store %arg14[%c0, %c0_3], %11 {strides = array<i32>} : memref<256x128xf32, #tpu.memory_space<vmem>>, vector<256x128xf32>,
    } else {
    }
    %5 = arith.cmpi slt, %arg1, %1 : i32
    %6 = arith.extui %5 : i1 to i32
    %c0_i32_1 = arith.constant 0 : i32
    %7 = arith.cmpi ne, %6, %c0_i32_1 : i32
    scf.if %7 {
      %c0 = arith.constant 0 : index
      %c0_3 = arith.constant 0 : index
      %11 = vector.load %arg14[%c0, %c0_3] : memref<256x128xf32, #tpu.memory_space<vmem>>, vector<256x128xf32>
      %c0_4 = arith.constant 0 : index
      %c0_5 = arith.constant 0 : index
      %12 = vector.load %arg5[%c0_4, %c0_5] : memref<256x256xbf16, #tpu.memory_space<vmem>>, vector<256x256xbf16>
      %c0_6 = arith.constant 0 : index
      %c0_7 = arith.constant 0 : index
      %13 = vector.load %arg6[%c0_6, %c0_7] : memref<256x128xbf16, #tpu.memory_space<vmem>>, vector<256x128xbf16>
      %cst = arith.constant dense<0.000000e+00> : vector<256x128xf32>
      %14 = tpu.matmul %12, %13, %cst {dimension_numbers = #tpu.dot_dimension_numbers<[1], [0], [0], [1], [0, 0, 1, 1], [], []>} : vector<256x256xbf16>, vector<256x128xbf16>, vector<256x128xf32> -> vector<256x128xf32>
      %15 = arith.addf %11, %14 : vector<256x128xf32>
      %c0_8 = arith.constant 0 : index
      %c0_9 = arith.constant 0 : index
      %16 = vector.load %arg14[%c0_8, %c0_9] : memref<256x128xf32, #tpu.memory_space<vmem>>, vector<256x128xf32>
      tpu.vector_store %arg14[%c0_8, %c0_9], %15 {strides = array<i32>} : memref<256x128xf32, #tpu.memory_space<vmem>>, vector<256x128xf32>,
    } else {
    }
    %c1_i32 = arith.constant 1 : i32
    %8 = arith.cmpi eq, %arg1, %c1_i32 : i32
    %9 = arith.extui %8 : i1 to i32
    %c0_i32_2 = arith.constant 0 : i32
    %10 = arith.cmpi ne, %9, %c0_i32_2 : i32
    scf.if %10 {
      %c0 = arith.constant 0 : index
      %c0_3 = arith.constant 0 : index
      %11 = vector.load %arg14[%c0, %c0_3] : memref<256x128xf32, #tpu.memory_space<vmem>>, vector<256x128xf32>
      %c0_4 = arith.constant 0 : index
      %12 = memref.load %arg4[%c0_4] : memref<1xf32, #tpu.memory_space<smem>>
      %cst = arith.constant 1.000000e+00 : f32
      %13 = arith.addf %cst, %12 : f32
      %c0_5 = arith.constant 0 : index
      %c0_6 = arith.constant 0 : index
      %14 = vector.load %arg7[%c0_5, %c0_6] : memref<256x128xbf16, #tpu.memory_space<vmem>>, vector<256x128xbf16>
      %15 = arith.extf %14 : vector<256x128xbf16> to vector<256x128xf32>
      %16 = vector.broadcast %13 : f32 to vector<256x128xf32>
      %17 = arith.mulf %16, %15 : vector<256x128xf32>
      %18 = arith.addf %11, %17 : vector<256x128xf32>
      %19 = arith.truncf %18 : vector<256x128xf32> to vector<256x128xbf16>
      %c0_7 = arith.constant 0 : index
      %c0_8 = arith.constant 0 : index
      %20 = vector.load %arg8[%c0_7, %c0_8] : memref<128x128xbf16, #tpu.memory_space<vmem>>, vector<128x128xbf16>
      %cst_9 = arith.constant dense<0.000000e+00> : vector<256x128xf32>
      %21 = tpu.matmul %19, %20, %cst_9 {dimension_numbers = #tpu.dot_dimension_numbers<[1], [0], [0], [1], [0, 0, 1, 1], [], []>} : vector<256x128xbf16>, vector<128x128xbf16>, vector<256x128xf32> -> vector<256x128xf32>
      %c0_10 = arith.constant 0 : index
      %c0_11 = arith.constant 0 : index
      %22 = vector.load %arg9[%c0_10, %c0_11] : memref<1x128xf32, #tpu.memory_space<vmem>>, vector<1x128xf32>
      %23 = vector.broadcast %22 : vector<1x128xf32> to vector<256x128xf32>
      %24 = arith.addf %21, %23 : vector<256x128xf32>
      %cst_12 = arith.constant 0.000000e+00 : f32
      %25 = vector.broadcast %cst_12 : f32 to vector<256x128xf32>
      %26 = arith.maximumf %24, %25 : vector<256x128xf32>
      %27 = arith.truncf %26 : vector<256x128xf32> to vector<256x128xbf16>
      %c0_13 = arith.constant 0 : index
      %c0_14 = arith.constant 0 : index
      %28 = vector.load %arg10[%c0_13, %c0_14] : memref<128x128xbf16, #tpu.memory_space<vmem>>, vector<128x128xbf16>
      %cst_15 = arith.constant dense<0.000000e+00> : vector<256x128xf32>
      %29 = tpu.matmul %27, %28, %cst_15 {dimension_numbers = #tpu.dot_dimension_numbers<[1], [0], [0], [1], [0, 0, 1, 1], [], []>} : vector<256x128xbf16>, vector<128x128xbf16>, vector<256x128xf32> -> vector<256x128xf32>
      %c0_16 = arith.constant 0 : index
      %c0_17 = arith.constant 0 : index
      %30 = vector.load %arg11[%c0_16, %c0_17] : memref<1x128xf32, #tpu.memory_space<vmem>>, vector<1x128xf32>
      %31 = vector.broadcast %30 : vector<1x128xf32> to vector<256x128xf32>
      %32 = arith.addf %29, %31 : vector<256x128xf32>
      %cst_18 = arith.constant 0.000000e+00 : f32
      %33 = vector.broadcast %cst_18 : f32 to vector<256x128xf32>
      %34 = arith.maximumf %32, %33 : vector<256x128xf32>
      %35 = arith.truncf %34 : vector<256x128xf32> to vector<256x128xbf16>
      %c0_19 = arith.constant 0 : index
      %c0_20 = arith.constant 0 : index
      %36 = vector.load %arg12[%c0_19, %c0_20] : memref<256x128xbf16, #tpu.memory_space<vmem>>, vector<256x128xbf16>
      tpu.vector_store %arg12[%c0_19, %c0_20], %35 {strides = array<i32>} : memref<256x128xbf16, #tpu.memory_space<vmem>>, vector<256x128xbf16>,
      %37 = tpu.iota {dimensions = array<i32: 0>} : vector<256x1xi32>
      %c256_i32 = arith.constant 256 : i32
      %38 = arith.muli %arg0, %c256_i32 : i32
      %39 = vector.broadcast %38 : i32 to vector<256x1xi32>
      %40 = arith.addi %37, %39 : vector<256x1xi32>
      %c300_i32 = arith.constant 300 : i32
      %41 = vector.broadcast %c300_i32 : i32 to vector<256x1xi32>
      %42 = arith.cmpi slt, %40, %41 : vector<256x1xi32>
      %cst_21 = arith.constant 0.000000e+00 : f32
      %43 = vector.shape_cast %42 : vector<256x1xi1> to vector<256x1xi1>
      %44 = vector.broadcast %43 : vector<256x1xi1> to vector<256x128xi1>
      %45 = vector.broadcast %cst_21 : f32 to vector<256x128xf32>
      %46 = arith.select %44, %34, %45 : vector<256x128xi1>, vector<256x128xf32>
      %cst_22 = arith.constant dense<0.000000e+00> : vector<128xf32>
      %47 = vector.multi_reduction <add>, %46, %cst_22 [0] : vector<256x128xf32> to vector<128xf32>
      %48 = vector.shape_cast %47 : vector<128xf32> to vector<1x128xf32>
      %49 = arith.mulf %46, %46 : vector<256x128xf32>
      %cst_23 = arith.constant dense<0.000000e+00> : vector<128xf32>
      %50 = vector.multi_reduction <add>, %49, %cst_23 [0] : vector<256x128xf32> to vector<128xf32>
      %51 = vector.shape_cast %50 : vector<128xf32> to vector<1x128xf32>
      %52 = tpu.iota {dimensions = array<i32: 0>} : vector<8x128xi32>
      %c0_i32_24 = arith.constant 0 : i32
      %53 = vector.broadcast %c0_i32_24 : i32 to vector<8x128xi32>
      %54 = arith.cmpi eq, %52, %53 : vector<8x128xi32>
      %cst_25 = arith.constant 0.000000e+00 : f32
      %55 = vector.shape_cast %48 : vector<1x128xf32> to vector<1x128xf32>
      %56 = vector.broadcast %55 : vector<1x128xf32> to vector<8x128xf32>
      %57 = vector.broadcast %cst_25 : f32 to vector<8x128xf32>
      %58 = arith.select %54, %56, %57 : vector<8x128xi1>, vector<8x128xf32>
      %c1_i32_26 = arith.constant 1 : i32
      %59 = vector.broadcast %c1_i32_26 : i32 to vector<8x128xi32>
      %60 = arith.cmpi eq, %52, %59 : vector<8x128xi32>
      %cst_27 = arith.constant 0.000000e+00 : f32
      %61 = vector.shape_cast %51 : vector<1x128xf32> to vector<1x128xf32>
      %62 = vector.broadcast %61 : vector<1x128xf32> to vector<8x128xf32>
      %63 = vector.broadcast %cst_27 : f32 to vector<8x128xf32>
      %64 = arith.select %60, %62, %63 : vector<8x128xi1>, vector<8x128xf32>
      %65 = arith.addf %58, %64 : vector<8x128xf32>
      %66 = vector.shape_cast %65 : vector<8x128xf32> to vector<1x8x128xf32>
      %c0_28 = arith.constant 0 : index
      %c0_29 = arith.constant 0 : index
      %c0_30 = arith.constant 0 : index
      %67 = vector.load %arg13[%c0_28, %c0_29, %c0_30] : memref<1x8x128xf32, #tpu.memory_space<vmem>>, vector<1x8x128xf32>
      tpu.vector_store %arg13[%c0_28, %c0_29, %c0_30], %66 {strides = array<i32>} : memref<1x8x128xf32, #tpu.memory_space<vmem>>, vector<1x8x128xf32>,
    } else {
    }
    return
  }
  func.func @transform_0(%arg0: i32, %arg1: i32, %arg2: memref<2xi32, #tpu.memory_space<smem>>, %arg3: memref<4xi32, #tpu.memory_space<smem>>) -> i32 {
    %c0_i32 = arith.constant 0 : i32
    %c0_i32_0 = arith.constant 0 : i32
    return %c0_i32 : i32
  }
  func.func @transform_1(%arg0: i32, %arg1: i32, %arg2: memref<2xi32, #tpu.memory_space<smem>>, %arg3: memref<4xi32, #tpu.memory_space<smem>>) -> (i32, i32) {
    %c2_i32 = arith.constant 2 : i32
    %0 = arith.muli %arg0, %c2_i32 : i32
    %1 = arith.addi %0, %arg1 : i32
    %2 = arith.index_cast %1 : i32 to index
    %3 = memref.load %arg3[%2] : memref<4xi32, #tpu.memory_space<smem>>
    %c0_i32 = arith.constant 0 : i32
    return %arg0, %3 : i32, i32
  }
  func.func @transform_2(%arg0: i32, %arg1: i32, %arg2: memref<2xi32, #tpu.memory_space<smem>>, %arg3: memref<4xi32, #tpu.memory_space<smem>>) -> (i32, i32) {
    %c2_i32 = arith.constant 2 : i32
    %0 = arith.muli %arg0, %c2_i32 : i32
    %1 = arith.addi %0, %arg1 : i32
    %2 = arith.index_cast %1 : i32 to index
    %3 = memref.load %arg3[%2] : memref<4xi32, #tpu.memory_space<smem>>
    %c0_i32 = arith.constant 0 : i32
    %c0_i32_0 = arith.constant 0 : i32
    return %3, %c0_i32 : i32, i32
  }
  func.func @transform_3(%arg0: i32, %arg1: i32, %arg2: memref<2xi32, #tpu.memory_space<smem>>, %arg3: memref<4xi32, #tpu.memory_space<smem>>) -> (i32, i32) {
    %c0_i32 = arith.constant 0 : i32
    %c0_i32_0 = arith.constant 0 : i32
    return %arg0, %c0_i32 : i32, i32
  }
  func.func @transform_4(%arg0: i32, %arg1: i32, %arg2: memref<2xi32, #tpu.memory_space<smem>>, %arg3: memref<4xi32, #tpu.memory_space<smem>>) -> (i32, i32) {
    %c0_i32 = arith.constant 0 : i32
    %c0_i32_0 = arith.constant 0 : i32
    %c0_i32_1 = arith.constant 0 : i32
    return %c0_i32, %c0_i32_0 : i32, i32
  }
  func.func @transform_5(%arg0: i32, %arg1: i32, %arg2: memref<2xi32, #tpu.memory_space<smem>>, %arg3: memref<4xi32, #tpu.memory_space<smem>>) -> (i32, i32) {
    %c0_i32 = arith.constant 0 : i32
    %c0_i32_0 = arith.constant 0 : i32
    %c0_i32_1 = arith.constant 0 : i32
    return %c0_i32, %c0_i32_0 : i32, i32
  }
  func.func @transform_6(%arg0: i32, %arg1: i32, %arg2: memref<2xi32, #tpu.memory_space<smem>>, %arg3: memref<4xi32, #tpu.memory_space<smem>>) -> (i32, i32) {
    %c0_i32 = arith.constant 0 : i32
    %c0_i32_0 = arith.constant 0 : i32
    %c0_i32_1 = arith.constant 0 : i32
    return %c0_i32, %c0_i32_0 : i32, i32
  }
  func.func @transform_7(%arg0: i32, %arg1: i32, %arg2: memref<2xi32, #tpu.memory_space<smem>>, %arg3: memref<4xi32, #tpu.memory_space<smem>>) -> (i32, i32) {
    %c0_i32 = arith.constant 0 : i32
    %c0_i32_0 = arith.constant 0 : i32
    %c0_i32_1 = arith.constant 0 : i32
    return %c0_i32, %c0_i32_0 : i32, i32
  }
  func.func @transform_8(%arg0: i32, %arg1: i32, %arg2: memref<2xi32, #tpu.memory_space<smem>>, %arg3: memref<4xi32, #tpu.memory_space<smem>>) -> (i32, i32) {
    %c0_i32 = arith.constant 0 : i32
    %c0_i32_0 = arith.constant 0 : i32
    return %arg0, %c0_i32 : i32, i32
  }
  func.func @transform_9(%arg0: i32, %arg1: i32, %arg2: memref<2xi32, #tpu.memory_space<smem>>, %arg3: memref<4xi32, #tpu.memory_space<smem>>) -> (i32, i32, i32) {
    %c0_i32 = arith.constant 0 : i32
    %c0_i32_0 = arith.constant 0 : i32
    %c0_i32_1 = arith.constant 0 : i32
    return %arg0, %c0_i32, %c0_i32_0 : i32, i32, i32
  }
}

module attributes {stable_mosaic.version = 11 : i64} {
  func.func @kernel(%arg0: i32, %arg1: memref<512x128xbf16, #tpu.memory_space<vmem>>, %arg2: memref<1x128xf32, #tpu.memory_space<vmem>>, %arg3: memref<1x128xf32, #tpu.memory_space<vmem>>, %arg4: memref<512x128xbf16, #tpu.memory_space<vmem>>) attributes {dimension_semantics = [#tpu.dimension_semantics<parallel>], iteration_bounds = array<i64: 1>, scalar_prefetch = 0 : i64, scratch_operands = 0 : i64, tpu.core_type = #tpu.core_type<tc>, window_params = [{transform_indices = @transform_0, window_bounds = array<i64: 512, 128>}, {pipeline_mode = #tpu.pipeline_mode<synchronous>, transform_indices = @transform_1, window_bounds = array<i64: 1, 128>}, {pipeline_mode = #tpu.pipeline_mode<synchronous>, transform_indices = @transform_2, window_bounds = array<i64: 1, 128>}, {transform_indices = @transform_3, window_bounds = array<i64: 512, 128>}]} {
    %c0 = arith.constant 0 : index
    %c0_0 = arith.constant 0 : index
    %0 = vector.load %arg1[%c0, %c0_0] : memref<512x128xbf16, #tpu.memory_space<vmem>>, vector<512x128xbf16>
    %1 = arith.extf %0 : vector<512x128xbf16> to vector<512x128xf32>
    %c0_1 = arith.constant 0 : index
    %c0_2 = arith.constant 0 : index
    %2 = vector.load %arg2[%c0_1, %c0_2] : memref<1x128xf32, #tpu.memory_space<vmem>>, vector<1x128xf32>
    %3 = vector.broadcast %2 : vector<1x128xf32> to vector<512x128xf32>
    %4 = arith.mulf %1, %3 : vector<512x128xf32>
    %c0_3 = arith.constant 0 : index
    %c0_4 = arith.constant 0 : index
    %5 = vector.load %arg3[%c0_3, %c0_4] : memref<1x128xf32, #tpu.memory_space<vmem>>, vector<1x128xf32>
    %6 = vector.broadcast %5 : vector<1x128xf32> to vector<512x128xf32>
    %7 = arith.addf %4, %6 : vector<512x128xf32>
    %cst = arith.constant 0.000000e+00 : f32
    %8 = vector.broadcast %cst : f32 to vector<512x128xf32>
    %9 = arith.maximumf %7, %8 : vector<512x128xf32>
    %10 = arith.truncf %9 : vector<512x128xf32> to vector<512x128xbf16>
    %c0_5 = arith.constant 0 : index
    %c0_6 = arith.constant 0 : index
    %11 = vector.load %arg4[%c0_5, %c0_6] : memref<512x128xbf16, #tpu.memory_space<vmem>>, vector<512x128xbf16>
    tpu.vector_store %arg4[%c0_5, %c0_6], %10 {strides = array<i32>} : memref<512x128xbf16, #tpu.memory_space<vmem>>, vector<512x128xbf16>,
    return
  }
  func.func @transform_0(%arg0: i32) -> (i32, i32) {
    %c0_i32 = arith.constant 0 : i32
    %c0_i32_0 = arith.constant 0 : i32
    return %arg0, %c0_i32 : i32, i32
  }
  func.func @transform_1(%arg0: i32) -> (i32, i32) {
    %c0_i32 = arith.constant 0 : i32
    %c0_i32_0 = arith.constant 0 : i32
    %c0_i32_1 = arith.constant 0 : i32
    return %c0_i32, %c0_i32_0 : i32, i32
  }
  func.func @transform_2(%arg0: i32) -> (i32, i32) {
    %c0_i32 = arith.constant 0 : i32
    %c0_i32_0 = arith.constant 0 : i32
    %c0_i32_1 = arith.constant 0 : i32
    return %c0_i32, %c0_i32_0 : i32, i32
  }
  func.func @transform_3(%arg0: i32) -> (i32, i32) {
    %c0_i32 = arith.constant 0 : i32
    %c0_i32_0 = arith.constant 0 : i32
    return %arg0, %c0_i32 : i32, i32
  }
}

module attributes {stable_mosaic.version = 11 : i64} {
  func.func @kernel(%arg0: i32, %arg1: memref<512x128xbf16, #tpu.memory_space<vmem>>, %arg2: memref<1x128xf32, #tpu.memory_space<vmem>>, %arg3: memref<1x128xf32, #tpu.memory_space<vmem>>, %arg4: memref<128x128xbf16, #tpu.memory_space<vmem>>, %arg5: memref<1x128xf32, #tpu.memory_space<vmem>>, %arg6: memref<512x128xf32, #tpu.memory_space<vmem>>) attributes {dimension_semantics = [#tpu.dimension_semantics<parallel>], iteration_bounds = array<i64: 1>, scalar_prefetch = 0 : i64, scratch_operands = 0 : i64, tpu.core_type = #tpu.core_type<tc>, window_params = [{transform_indices = @transform_0, window_bounds = array<i64: 512, 128>}, {pipeline_mode = #tpu.pipeline_mode<synchronous>, transform_indices = @transform_1, window_bounds = array<i64: 1, 128>}, {pipeline_mode = #tpu.pipeline_mode<synchronous>, transform_indices = @transform_2, window_bounds = array<i64: 1, 128>}, {pipeline_mode = #tpu.pipeline_mode<synchronous>, transform_indices = @transform_3, window_bounds = array<i64: 128, 128>}, {pipeline_mode = #tpu.pipeline_mode<synchronous>, transform_indices = @transform_4, window_bounds = array<i64: 1, 128>}, {transform_indices = @transform_5, window_bounds = array<i64: 512, 128>}]} {
    %c0 = arith.constant 0 : index
    %c0_0 = arith.constant 0 : index
    %0 = vector.load %arg1[%c0, %c0_0] : memref<512x128xbf16, #tpu.memory_space<vmem>>, vector<512x128xbf16>
    %1 = arith.extf %0 : vector<512x128xbf16> to vector<512x128xf32>
    %c0_1 = arith.constant 0 : index
    %c0_2 = arith.constant 0 : index
    %2 = vector.load %arg2[%c0_1, %c0_2] : memref<1x128xf32, #tpu.memory_space<vmem>>, vector<1x128xf32>
    %3 = vector.broadcast %2 : vector<1x128xf32> to vector<512x128xf32>
    %4 = arith.mulf %1, %3 : vector<512x128xf32>
    %c0_3 = arith.constant 0 : index
    %c0_4 = arith.constant 0 : index
    %5 = vector.load %arg3[%c0_3, %c0_4] : memref<1x128xf32, #tpu.memory_space<vmem>>, vector<1x128xf32>
    %6 = vector.broadcast %5 : vector<1x128xf32> to vector<512x128xf32>
    %7 = arith.addf %4, %6 : vector<512x128xf32>
    %cst = arith.constant 0.000000e+00 : f32
    %8 = vector.broadcast %cst : f32 to vector<512x128xf32>
    %9 = arith.maximumf %7, %8 : vector<512x128xf32>
    %10 = arith.truncf %9 : vector<512x128xf32> to vector<512x128xbf16>
    %c0_5 = arith.constant 0 : index
    %c0_6 = arith.constant 0 : index
    %11 = vector.load %arg4[%c0_5, %c0_6] : memref<128x128xbf16, #tpu.memory_space<vmem>>, vector<128x128xbf16>
    %cst_7 = arith.constant dense<0.000000e+00> : vector<512x128xf32>
    %12 = tpu.matmul %10, %11, %cst_7 {dimension_numbers = #tpu.dot_dimension_numbers<[1], [0], [0], [1], [0, 0, 1, 1], [], []>} : vector<512x128xbf16>, vector<128x128xbf16>, vector<512x128xf32> -> vector<512x128xf32>
    %c0_8 = arith.constant 0 : index
    %c0_9 = arith.constant 0 : index
    %13 = vector.load %arg5[%c0_8, %c0_9] : memref<1x128xf32, #tpu.memory_space<vmem>>, vector<1x128xf32>
    %14 = vector.broadcast %13 : vector<1x128xf32> to vector<512x128xf32>
    %15 = arith.addf %12, %14 : vector<512x128xf32>
    %c0_10 = arith.constant 0 : index
    %c0_11 = arith.constant 0 : index
    %16 = vector.load %arg6[%c0_10, %c0_11] : memref<512x128xf32, #tpu.memory_space<vmem>>, vector<512x128xf32>
    tpu.vector_store %arg6[%c0_10, %c0_11], %15 {strides = array<i32>} : memref<512x128xf32, #tpu.memory_space<vmem>>, vector<512x128xf32>,
    return
  }
  func.func @transform_0(%arg0: i32) -> (i32, i32) {
    %c0_i32 = arith.constant 0 : i32
    %c0_i32_0 = arith.constant 0 : i32
    return %arg0, %c0_i32 : i32, i32
  }
  func.func @transform_1(%arg0: i32) -> (i32, i32) {
    %c0_i32 = arith.constant 0 : i32
    %c0_i32_0 = arith.constant 0 : i32
    %c0_i32_1 = arith.constant 0 : i32
    return %c0_i32, %c0_i32_0 : i32, i32
  }
  func.func @transform_2(%arg0: i32) -> (i32, i32) {
    %c0_i32 = arith.constant 0 : i32
    %c0_i32_0 = arith.constant 0 : i32
    %c0_i32_1 = arith.constant 0 : i32
    return %c0_i32, %c0_i32_0 : i32, i32
  }
  func.func @transform_3(%arg0: i32) -> (i32, i32) {
    %c0_i32 = arith.constant 0 : i32
    %c0_i32_0 = arith.constant 0 : i32
    %c0_i32_1 = arith.constant 0 : i32
    return %c0_i32, %c0_i32_0 : i32, i32
  }
  func.func @transform_4(%arg0: i32) -> (i32, i32) {
    %c0_i32 = arith.constant 0 : i32
    %c0_i32_0 = arith.constant 0 : i32
    %c0_i32_1 = arith.constant 0 : i32
    return %c0_i32, %c0_i32_0 : i32, i32
  }
  func.func @transform_5(%arg0: i32) -> (i32, i32) {
    %c0_i32 = arith.constant 0 : i32
    %c0_i32_0 = arith.constant 0 : i32
    return %arg0, %c0_i32 : i32, i32
  }
}

</mosaic_0001>

<llo_original>
// kernel: gin_forward.6
$region0: #{gin_forward.6}
  #allocation0 [shape = 'u32[]', space=smem, size = 0x4, offset = 0x4, fixed_abs, tag = 'smem constant byte address 0x4 - core index']
  #allocation1 [shape = 'u32[144,128]{1,0:T(1,128)}', space=vmem, size = 0x12000, scoped, tag = 'internal scratch']
  #allocation2 [shape = 'f32[256,128]{1,0:T(8,128)}', space=vmem, size = 0x20000, scoped, tag = 'scratch operand']
  #allocation3 [shape = 's32[1]{0}', space=sflag, size = 0x4, scoped, tag = 'scoped memory for gin_forward.6']
  #allocation4 [shape = 'u8[512]{0}', space=smem, size = 0x200, scoped, tag = 'prefetched SMEM operand 0']
  #allocation5 [shape = 'u8[512]{0}', space=smem, size = 0x200, scoped, tag = 'prefetched SMEM operand 1']
  #allocation6 [shape = 'f32[1]{0:T(128)S(6)}', space=smem, size = 0x200, scoped, tag = 'scoped memory for gin_forward.6']
  %s0 = inlined_call_operand.vmem [shape: s32[2], index: 0, kind: input, shape index: {}]
  %s1 = inlined_call_operand.vmem [shape: s32[4], index: 1, kind: input, shape index: {}]
  %s2 = inlined_call_operand.<no memory space> [shape: f32[1], index: 2, kind: input, shape index: {}]
  %s3 = inlined_call_operand.vmem [shape: bf16[512,512], index: 3, kind: input, shape index: {}]
  %s4 = inlined_call_operand.vmem [shape: bf16[512,128], index: 4, kind: input, shape index: {}, may-alias: {4,5}]
  %s5 = inlined_call_operand.vmem [shape: bf16[512,128], index: 5, kind: input, shape index: {}, may-alias: {4,5}]
  %s6 = inlined_call_operand.vmem [shape: bf16[128,128], index: 6, kind: input, shape index: {}]
  %s7 = inlined_call_operand.vmem [shape: f32[1,128], index: 7, kind: input, shape index: {}]
  %s8 = inlined_call_operand.vmem [shape: bf16[128,128], index: 8, kind: input, shape index: {}]
  %s9 = inlined_call_operand.vmem [shape: f32[1,128], index: 9, kind: input, shape index: {}]
  %s10 = inlined_call_operand.vmem [shape: bf16[512,128], index: 10, kind: output, shape index: {0}]
  %s11 = inlined_call_operand.vmem [shape: f32[2,8,128], index: 11, kind: output, shape index: {1}]
  %12 = xla_tuple %s10, %s11
  %s13 = sld [smem:[#allocation0]]
  $region123: #{gin_forward.6} parent=0
    _
  %s15 = ssub.s32 1, %s13
  %s16 = scalar_select 0, %s15, %s13
  %s17 = sshll.u32 %s0, 4
  %s18 = int_to_ptr.vmem [resolvable:$true] %s17
  %20 = dma.vmem_to_smem %s18, 16, [#allocation4], [#allocation3]
  %s21 = sshll.u32 %s1, 4
  %s22 = int_to_ptr.vmem [resolvable:$true] %s21
  %24 = dma.vmem_to_smem %s22, 16, [#allocation5], [#allocation3]
  %25 = sst [smem:[#allocation6]] %s2
  %26 = dma.done [#allocation3], 32
  %27 = sfence
  $region1: #{gin_forward.6} parent=0
    #allocation7 [shape = 'u8[262144]{0}', space=vmem, size = 0x40000, scoped, tag = 'input window, operand 3']
    loop: start=0, step=1, limit=6
    $region2: #{gin_forward.6} parent=1 // loop_pre_header
      _
    $region3: #{gin_forward.6} parent=1 // loop_header
      %s29 = sphi 0, %s33
      %p30 = scmp.ge.s32.totalorder %s29, 6
      %s36 = sphi 0, %s48
      %s37 = sphi 0, %s44
      %s38 = sphi 0, %s36
      %s39 = sphi 0, %s37
      %s40 = sphi 0, %s38
      %s41 = sphi 0, %s39
      %s49 = sphi 0, %s49
      %s51 = sphi 0, %s49
      %s52 = sphi 0, %s51
      %s66 = sphi 0, %s52
      %s80 = sphi 0, %s82
      %s83 = sphi 0, %s80
      %s84 = sphi 0, %s83
      %s100 = sphi 0, %s84
      %s112 = sphi 0, %s114
      %s115 = sphi 0, %s112
      %s116 = sphi 0, %s115
      %s132 = sphi 0, %s116
      %s138 = sphi 0, %s140
      %s141 = sphi 0, %s138
      %s142 = sphi 0, %s141
      %s158 = sphi 0, %s142
      %s162 = sphi 0, %s162
      %s164 = sphi 0, %s162
      %s165 = sphi 0, %s164
      %s179 = sphi 0, %s165
      %s183 = sphi 0, %s183
      %s185 = sphi 0, %s183
      %s186 = sphi 0, %s185
      %s200 = sphi 0, %s186
      %s204 = sphi 0, %s204
      %s206 = sphi 0, %s204
      %s207 = sphi 0, %s206
      %s221 = sphi 0, %s207
      %s225 = sphi 0, %s225
      %s227 = sphi 0, %s225
      %s228 = sphi 0, %s227
      %s242 = sphi 0, %s228
      %s248 = sphi 0, %s250
      %s251 = sphi 0, %s248
      %s252 = sphi 0, %s251
      %s268 = sphi 0, %s252
      %s274 = sphi 0, %s276
      %s277 = sphi 0, %s274
      %s278 = sphi 0, %s277
      %s294 = sphi 0, %s278
    $region4: #{gin_forward.6} parent=1 // loop_header_branch
      %32 = sbr.rel (%p30) target = $region8
    $region5: #{gin_forward.6} parent=1 // loop_body
      %s34 = ssub.s32 %s29, 1
      %s35 = ssub.s32 %s29, 2
      %s42 = sadd.s32 1, %s37
      %p43 = scmp.ge.s32.totalorder %s42, 2
      %s44 = scalar_select %p43, 0, %s42
      %s45 = sadd.s32 1, %s36
      %s46 = scalar_select %p43, %s45, %s36
      %p47 = scmp.ge.s32.totalorder %s46, 2
      %s48 = scalar_select %p47, 0, %s46
      %s50 = sadd.s32 %s49, 1
      %p53 = scmp.eq.s32.totalorder %s29, 3
      %p54 = scmp.ne.s32.totalorder %s49, %s51
      %p55 = scmp.eq.s32.totalorder %s29, 0
      %p56 = por %p54, %p55
      %p57 = scmp.ne.s32.totalorder %s49, %s51
      %p58 = scmp.eq.s32.totalorder %s34, 3
      %p59 = por %p57, %p58
      %p60 = scmp.ne.s32.totalorder %s51, %s52
      %p61 = scmp.eq.s32.totalorder %s34, 0
      %p62 = por %p60, %p61
      %p63 = scmp.ne.s32.totalorder %s51, %s52
      %p64 = scmp.eq.s32.totalorder %s35, 3
      %p65 = por %p63, %p64
      %p67 = scmp.ne.s32.totalorder %s52, %s66
      %p68 = scmp.eq.s32.totalorder %s35, 0
      %p69 = por %p67, %p68
      %s70 = smul.u32 %s36, 2
      %s71 = sadd.s32 %s70, %s37
      %s72 = sld [smem:[#allocation5 + %s71]]
      %s73 = smul.u32 %s48, 2
      %s74 = sadd.s32 %s73, %s44
      %s75 = sld [smem:[#allocation5 + %s74]]
      %s76 = ssub.s32 %s36, %s48
      %s77 = ssub.s32 %s72, %s75
      %s78 = sor.u32 %s76, %s77
      %p79 = scmp.eq.s32.totalorder %s78, 0
      %s81 = sadd.s32 %s80, 1
      %s82 = scalar_select %p79, %s80, %s81
      %p85 = pneg %p79
      %p86 = scmp.eq.s32.totalorder %s29, 3
      %p87 = por %p85, %p86
      %p88 = scmp.ne.s32.totalorder %s80, %s83
      %p89 = scmp.eq.s32.totalorder %s29, 0
      %p90 = por %p88, %p89
      %p91 = scmp.ne.s32.totalorder %s80, %s83
      %p92 = scmp.eq.s32.totalorder %s34, 3
      %p93 = por %p91, %p92
      %p94 = scmp.ne.s32.totalorder %s83, %s84
      %p95 = scmp.eq.s32.totalorder %s34, 0
      %p96 = por %p94, %p95
      %p97 = scmp.ne.s32.totalorder %s83, %s84
      %p98 = scmp.eq.s32.totalorder %s35, 3
      %p99 = por %p97, %p98
      %p101 = scmp.ne.s32.totalorder %s84, %s100
      %p102 = scmp.eq.s32.totalorder %s35, 0
      %p103 = por %p101, %p102
      %s104 = smul.u32 %s36, 2
      %s105 = sadd.s32 %s104, %s37
      %s106 = sld [smem:[#allocation5 + %s105]]
      %s107 = smul.u32 %s48, 2
      %s108 = sadd.s32 %s107, %s44
      %s109 = sld [smem:[#allocation5 + %s108]]
      %s110 = ssub.s32 %s106, %s109
      %p111 = scmp.eq.s32.totalorder %s110, 0
      %s113 = sadd.s32 %s112, 1
      %s114 = scalar_select %p111, %s112, %s113
      %p117 = pneg %p111
      %p118 = scmp.eq.s32.totalorder %s29, 3
      %p119 = por %p117, %p118
      %p120 = scmp.ne.s32.totalorder %s112, %s115
      %p121 = scmp.eq.s32.totalorder %s29, 0
      %p122 = por %p120, %p121
      %p123 = scmp.ne.s32.totalorder %s112, %s115
      %p124 = scmp.eq.s32.totalorder %s34, 3
      %p125 = por %p123, %p124
      %p126 = scmp.ne.s32.totalorder %s115, %s116
      %p127 = scmp.eq.s32.totalorder %s34, 0
      %p128 = por %p126, %p127
      %p129 = scmp.ne.s32.totalorder %s115, %s116
      %p130 = scmp.eq.s32.totalorder %s35, 3
      %p131 = por %p129, %p130
      %p133 = scmp.ne.s32.totalorder %s116, %s132
      %p134 = scmp.eq.s32.totalorder %s35, 0
      %p135 = por %p133, %p134
      %s136 = ssub.s32 %s36, %s48
      %p137 = scmp.eq.s32.totalorder %s136, 0
      %s139 = sadd.s32 %s138, 1
      %s140 = scalar_select %p137, %s138, %s139
      %p143 = pneg %p137
      %p144 = scmp.eq.s32.totalorder %s29, 3
      %p145 = por %p143, %p144
      %p146 = scmp.ne.s32.totalorder %s138, %s141
      %p147 = scmp.eq.s32.totalorder %s29, 0
      %p148 = por %p146, %p147
      %p149 = scmp.ne.s32.totalorder %s138, %s141
      %p150 = scmp.eq.s32.totalorder %s34, 3
      %p151 = por %p149, %p150
      %p152 = scmp.ne.s32.totalorder %s141, %s142
      %p153 = scmp.eq.s32.totalorder %s34, 0
      %p154 = por %p152, %p153
      %p155 = scmp.ne.s32.totalorder %s141, %s142
      %p156 = scmp.eq.s32.totalorder %s35, 3
      %p157 = por %p155, %p156
      %p159 = scmp.ne.s32.totalorder %s142, %s158
      %p160 = scmp.eq.s32.totalorder %s35, 0
      %p161 = por %p159, %p160
      %s163 = sadd.s32 %s162, 1
      %p166 = scmp.eq.s32.totalorder %s29, 3
      %p167 = scmp.ne.s32.totalorder %s162, %s164
      %p168 = scmp.eq.s32.totalorder %s29, 0
      %p169 = por %p167, %p168
      %p170 = scmp.ne.s32.totalorder %s162, %s164
      %p171 = scmp.eq.s32.totalorder %s34, 3
      %p172 = por %p170, %p171
      %p173 = scmp.ne.s32.totalorder %s164, %s165
      %p174 = scmp.eq.s32.totalorder %s34, 0
      %p175 = por %p173, %p174
      %p176 = scmp.ne.s32.totalorder %s164, %s165
      %p177 = scmp.eq.s32.totalorder %s35, 3
      %p178 = por %p176, %p177
      %p180 = scmp.ne.s32.totalorder %s165, %s179
      %p181 = scmp.eq.s32.totalorder %s35, 0
      %p182 = por %p180, %p181
      %s184 = sadd.s32 %s183, 1
      %p187 = scmp.eq.s32.totalorder %s29, 3
      %p188 = scmp.ne.s32.totalorder %s183, %s185
      %p189 = scmp.eq.s32.totalorder %s29, 0
      %p190 = por %p188, %p189
      %p191 = scmp.ne.s32.totalorder %s183, %s185
      %p192 = scmp.eq.s32.totalorder %s34, 3
      %p193 = por %p191, %p192
      %p194 = scmp.ne.s32.totalorder %s185, %s186
      %p195 = scmp.eq.s32.totalorder %s34, 0
      %p196 = por %p194, %p195
      %p197 = scmp.ne.s32.totalorder %s185, %s186
      %p198 = scmp.eq.s32.totalorder %s35, 3
      %p199 = por %p197, %p198
      %p201 = scmp.ne.s32.totalorder %s186, %s200
      %p202 = scmp.eq.s32.totalorder %s35, 0
      %p203 = por %p201, %p202
      %s205 = sadd.s32 %s204, 1
      %p208 = scmp.eq.s32.totalorder %s29, 3
      %p209 = scmp.ne.s32.totalorder %s204, %s206
      %p210 = scmp.eq.s32.totalorder %s29, 0
      %p211 = por %p209, %p210
      %p212 = scmp.ne.s32.totalorder %s204, %s206
      %p213 = scmp.eq.s32.totalorder %s34, 3
      %p214 = por %p212, %p213
      %p215 = scmp.ne.s32.totalorder %s206, %s207
      %p216 = scmp.eq.s32.totalorder %s34, 0
      %p217 = por %p215, %p216
      %p218 = scmp.ne.s32.totalorder %s206, %s207
      %p219 = scmp.eq.s32.totalorder %s35, 3
      %p220 = por %p218, %p219
      %p222 = scmp.ne.s32.totalorder %s207, %s221
      %p223 = scmp.eq.s32.totalorder %s35, 0
      %p224 = por %p222, %p223
      %s226 = sadd.s32 %s225, 1
      %p229 = scmp.eq.s32.totalorder %s29, 3
      %p230 = scmp.ne.s32.totalorder %s225, %s227
      %p231 = scmp.eq.s32.totalorder %s29, 0
      %p232 = por %p230, %p231
      %p233 = scmp.ne.s32.totalorder %s225, %s227
      %p234 = scmp.eq.s32.totalorder %s34, 3
      %p235 = por %p233, %p234
      %p236 = scmp.ne.s32.totalorder %s227, %s228
      %p237 = scmp.eq.s32.totalorder %s34, 0
      %p238 = por %p236, %p237
      %p239 = scmp.ne.s32.totalorder %s227, %s228
      %p240 = scmp.eq.s32.totalorder %s35, 3
      %p241 = por %p239, %p240
      %p243 = scmp.ne.s32.totalorder %s228, %s242
      %p244 = scmp.eq.s32.totalorder %s35, 0
      %p245 = por %p243, %p244
      %s246 = ssub.s32 %s36, %s48
      %p247 = scmp.eq.s32.totalorder %s246, 0
      %s249 = sadd.s32 %s248, 1
      %s250 = scalar_select %p247, %s248, %s249
      %p253 = pneg %p247
      %p254 = scmp.eq.s32.totalorder %s29, 3
      %p255 = por %p253, %p254
      %p256 = scmp.ne.s32.totalorder %s248, %s251
      %p257 = scmp.eq.s32.totalorder %s29, 0
      %p258 = por %p256, %p257
      %p259 = scmp.ne.s32.totalorder %s248, %s251
      %p260 = scmp.eq.s32.totalorder %s34, 3
      %p261 = por %p259, %p260
      %p262 = scmp.ne.s32.totalorder %s251, %s252
      %p263 = scmp.eq.s32.totalorder %s34, 0
      %p264 = por %p262, %p263
      %p265 = scmp.ne.s32.totalorder %s251, %s252
      %p266 = scmp.eq.s32.totalorder %s35, 3
      %p267 = por %p265, %p266
      %p269 = scmp.ne.s32.totalorder %s252, %s268
      %p270 = scmp.eq.s32.totalorder %s35, 0
      %p271 = por %p269, %p270
      %s272 = ssub.s32 %s36, %s48
      %p273 = scmp.eq.s32.totalorder %s272, 0
      %s275 = sadd.s32 %s274, 1
      %s276 = scalar_select %p273, %s274, %s275
      %p279 = pneg %p273
      %p280 = scmp.eq.s32.totalorder %s29, 3
      %p281 = por %p279, %p280
      %p282 = scmp.ne.s32.totalorder %s274, %s277
      %p283 = scmp.eq.s32.totalorder %s29, 0
      %p284 = por %p282, %p283
      %p285 = scmp.ne.s32.totalorder %s274, %s277
      %p286 = scmp.eq.s32.totalorder %s34, 3
      %p287 = por %p285, %p286
      %p288 = scmp.ne.s32.totalorder %s277, %s278
      %p289 = scmp.eq.s32.totalorder %s34, 0
      %p290 = por %p288, %p289
      %p291 = scmp.ne.s32.totalorder %s277, %s278
      %p292 = scmp.eq.s32.totalorder %s35, 3
      %p293 = por %p291, %p292
      %p295 = scmp.ne.s32.totalorder %s278, %s294
      %p296 = scmp.eq.s32.totalorder %s35, 0
      %p297 = por %p295, %p296
      %p298 = scmp.le.s32.totalorder 1, %s29
      %p299 = scmp.lt.s32.totalorder %s29, 5
      %p300 = pnand %p298, %p299
      %p301 = pneg %p300
      // Predicated region
      $region9: #{gin_forward.6} parent=5 // pred_check
        _
      $region10: #{gin_forward.6} parent=5 // pred_check_branch
        %303 = sbr.rel (%p300) target = $region12
      $region11: #{gin_forward.6} parent=5 // pred_region
        %s304 = ssub.s32 %s29, 1
        // Predicated region
        $region13: #{gin_forward.6} parent=11 // pred_check
          %p305 = pneg %p62
        $region14: #{gin_forward.6} parent=11 // pred_check_branch
          %307 = sbr.rel (%p305) target = $region16
        $region15: #{gin_forward.6} parent=11 // pred_region
          _
        $region16: #{gin_forward.6} parent=11 // pred_fallthru
          _
        // Predicated region
        $region17: #{gin_forward.6} parent=11 // pred_check
          %p308 = pneg %p175
        $region18: #{gin_forward.6} parent=11 // pred_check_branch
          %310 = sbr.rel (%p308) target = $region20
        $region19: #{gin_forward.6} parent=11 // pred_region
          _
        $region20: #{gin_forward.6} parent=11 // pred_fallthru
          _
        // Predicated region
        $region21: #{gin_forward.6} parent=11 // pred_check
          %p311 = pneg %p196
        $region22: #{gin_forward.6} parent=11 // pred_check_branch
          %313 = sbr.rel (%p311) target = $region24
        $region23: #{gin_forward.6} parent=11 // pred_region
          _
        $region24: #{gin_forward.6} parent=11 // pred_fallthru
          _
        // Predicated region
        $region25: #{gin_forward.6} parent=11 // pred_check
          %p314 = pneg %p217
        $region26: #{gin_forward.6} parent=11 // pred_check_branch
          %316 = sbr.rel (%p314) target = $region28
        $region27: #{gin_forward.6} parent=11 // pred_region
          _
        $region28: #{gin_forward.6} parent=11 // pred_fallthru
          _
        // Predicated region
        $region29: #{gin_forward.6} parent=11 // pred_check
          %p317 = pneg %p238
        $region30: #{gin_forward.6} parent=11 // pred_check_branch
          %319 = sbr.rel (%p317) target = $region32
        $region31: #{gin_forward.6} parent=11 // pred_region
          _
        $region32: #{gin_forward.6} parent=11 // pred_fallthru
          _
      $region12: #{gin_forward.6} parent=5 // pred_fallthru
        _
      %p320 = scmp.lt.s32.totalorder %s29, 4
      // Predicated region
      $region33: #{gin_forward.6} parent=5 // pred_check
        %p321 = pneg %p320
      $region34: #{gin_forward.6} parent=5 // pred_check_branch
        %323 = sbr.rel (%p321) target = $region36
      $region35: #{gin_forward.6} parent=5 // pred_region
        // Predicated region
        $region37: #{gin_forward.6} parent=35 // pred_check
          %p324 = pneg %p90
        $region38: #{gin_forward.6} parent=35 // pred_check_branch
          %326 = sbr.rel (%p324) target = $region40
        $region39: #{gin_forward.6} parent=35 // pred_region
          %s327 = sand.u32 %s80, 1
          %s328 = sand.u32 %s80, 1
          %s329 = smul.addr %s328, 256
          %s330 = scalar_lea.vmem [#allocation7], %s329
          %s331 = smul.u32 %s36, 2
          %s332 = sadd.s32 %s331, %s37
          %s333 = sld [smem:[#allocation5 + %s332]]
          %s334 = smul.u32 32, %s36
          %s335 = smul.u32 2, %s333
          %s336 = smul.addr %s334, 4
          %s337 = sadd.s32 %s335, %s336
          %s338 = smul.addr %s337, 4
          %s339 = scalar_lea.vmem %s3, %s338
          // Predicated region
          $region41: #{gin_forward.6} parent=39 // pred_check
            _
          $region42: #{gin_forward.6} parent=39 // pred_check_branch
            %341 = sbr.rel (0) target = $region44
          $region43: #{gin_forward.6} parent=39 // pred_region
            // Predicated region
            $region45: #{gin_forward.6} parent=43 // pred_check
              _
            $region46: #{gin_forward.6} parent=43 // pred_check_branch
              %343 = sbr.rel (0) target = $region48
            $region47: #{gin_forward.6} parent=43 // pred_region
              // Predicated region
              $region60: #{gin_forward.6} parent=47 // pred_check
                _
              $region61: #{gin_forward.6} parent=47 // pred_check_branch
                %420 = sbr.rel (0) target = $region63
              $region62: #{gin_forward.6} parent=47 // pred_region
                loop: start=0, step=1, limit=1
                $region64: #{gin_forward.6} parent=62 // loop_pre_header
                  _
                $region65: #{gin_forward.6} parent=62 // loop_header
                  %s422 = sphi 0, %s426
                  %p423 = scmp.ge.s32.totalorder %s422, 1
                  %s427 = sphi %s339, %s339
                  %s428 = sphi %s330, %s330
                $region66: #{gin_forward.6} parent=62 // loop_header_branch
                  %425 = sbr.rel (%p423) target = $region70
                $region67: #{gin_forward.6} parent=62 // loop_body
                  %v429 = vld [vmem:[%s427] sm:$0xff]
                  %430 = vst [vmem:[%s428] sm:$0xff] %v429
                  %v431 = vld [vmem:[%s427 + $0x10] sm:$0xff]
                  %432 = vst [vmem:[%s428 + $0x8] sm:$0xff] %v431
                  %v433 = vld [vmem:[%s427 + $0x20] sm:$0xff]
                  %434 = vst [vmem:[%s428 + $0x10] sm:$0xff] %v433
                  %v435 = vld [vmem:[%s427 + $0x30] sm:$0xff]
                  %436 = vst [vmem:[%s428 + $0x18] sm:$0xff] %v435
                  %v437 = vld [vmem:[%s427 + $0x40] sm:$0xff]
                  %438 = vst [vmem:[%s428 + $0x20] sm:$0xff] %v437
                  %v439 = vld [vmem:[%s427 + $0x50] sm:$0xff]
                  %440 = vst [vmem:[%s428 + $0x28] sm:$0xff] %v439
                  %v441 = vld [vmem:[%s427 + $0x60] sm:$0xff]
                  %442 = vst [vmem:[%s428 + $0x30] sm:$0xff] %v441
                  %v443 = vld [vmem:[%s427 + $0x70] sm:$0xff]
                  %444 = vst [vmem:[%s428 + $0x38] sm:$0xff] %v443
                  %v445 = vld [vmem:[%s427 + $0x80] sm:$0xff]
                  %446 = vst [vmem:[%s428 + $0x40] sm:$0xff] %v445
                  %v447 = vld [vmem:[%s427 + $0x90] sm:$0xff]
                  %448 = vst [vmem:[%s428 + $0x48] sm:$0xff] %v447
                  %v449 = vld [vmem:[%s427 + $0xa0] sm:$0xff]
                  %450 = vst [vmem:[%s428 + $0x50] sm:$0xff] %v449
                  %v451 = vld [vmem:[%s427 + $0xb0] sm:$0xff]
                  %452 = vst [vmem:[%s428 + $0x58] sm:$0xff] %v451
                  %v453 = vld [vmem:[%s427 + $0xc0] sm:$0xff]
                  %454 = vst [vmem:[%s428 + $0x60] sm:$0xff] %v453
                  %v455 = vld [vmem:[%s427 + $0xd0] sm:$0xff]
                  %456 = vst [vmem:[%s428 + $0x68] sm:$0xff] %v455
                  %v457 = vld [vmem:[%s427 + $0xe0] sm:$0xff]
                  %458 = vst [vmem:[%s428 + $0x70] sm:$0xff] %v457
                  %v459 = vld [vmem:[%s427 + $0xf0] sm:$0xff]
                  %460 = vst [vmem:[%s428 + $0x78] sm:$0xff] %v459
                  %v461 = vld [vmem:[%s427 + $0x100] sm:$0xff]
                  %462 = vst [vmem:[%s428 + $0x80] sm:$0xff] %v461
                  %v463 = vld [vmem:[%s427 + $0x110] sm:$0xff]
                  %464 = vst [vmem:[%s428 + $0x88] sm:$0xff] %v463
                  %v465 = vld [vmem:[%s427 + $0x120] sm:$0xff]
                  %466 = vst [vmem:[%s428 + $0x90] sm:$0xff] %v465
                  %v467 = vld [vmem:[%s427 + $0x130] sm:$0xff]
                  %468 = vst [vmem:[%s428 + $0x98] sm:$0xff] %v467
                  %v469 = vld [vmem:[%s427 + $0x140] sm:$0xff]
                  %470 = vst [vmem:[%s428 + $0xa0] sm:$0xff] %v469
                  %v471 = vld [vmem:[%s427 + $0x150] sm:$0xff]
                  %472 = vst [vmem:[%s428 + $0xa8] sm:$0xff] %v471
                  %v473 = vld [vmem:[%s427 + $0x160] sm:$0xff]
                  %474 = vst [vmem:[%s428 + $0xb0] sm:$0xff] %v473
                  %v475 = vld [vmem:[%s427 + $0x170] sm:$0xff]
                  %476 = vst [vmem:[%s428 + $0xb8] sm:$0xff] %v475
                  %v477 = vld [vmem:[%s427 + $0x180] sm:$0xff]
                  %478 = vst [vmem:[%s428 + $0xc0] sm:$0xff] %v477
                  %v479 = vld [vmem:[%s427 + $0x190] sm:$0xff]
                  %480 = vst [vmem:[%s428 + $0xc8] sm:$0xff] %v479
                  %v481 = vld [vmem:[%s427 + $0x1a0] sm:$0xff]
                  %482 = vst [vmem:[%s428 + $0xd0] sm:$0xff] %v481
                  %v483 = vld [vmem:[%s427 + $0x1b0] sm:$0xff]
                  %484 = vst [vmem:[%s428 + $0xd8] sm:$0xff] %v483
                  %v485 = vld [vmem:[%s427 + $0x1c0] sm:$0xff]
                  %486 = vst [vmem:[%s428 + $0xe0] sm:$0xff] %v485
                  %v487 = vld [vmem:[%s427 + $0x1d0] sm:$0xff]
                  %488 = vst [vmem:[%s428 + $0xe8] sm:$0xff] %v487
                  %v489 = vld [vmem:[%s427 + $0x1e0] sm:$0xff]
                  %490 = vst [vmem:[%s428 + $0xf0] sm:$0xff] %v489
                  %v491 = vld [vmem:[%s427 + $0x1f0] sm:$0xff]
                  %492 = vst [vmem:[%s428 + $0xf8] sm:$0xff] %v491
                $region68: #{gin_forward.6} parent=62 // loop_footer
                  %s426 = sadd.s32 1, %s422
                $region69: #{gin_forward.6} parent=62 // loop_footer_branch
                  %421 = sbr.rel target = $region65
                $region70: #{gin_forward.6} parent=62 // loop_exit
                  _
              $region63: #{gin_forward.6} parent=47 // pred_fallthru
                _
              // Predicated region
              $region71: #{gin_forward.6} parent=47 // pred_check
                _
              $region72: #{gin_forward.6} parent=47 // pred_check_branch
                %494 = sbr.rel target = $region74
              $region73: #{gin_forward.6} parent=47 // pred_region
                _
              $region74: #{gin_forward.6} parent=47 // pred_fallthru
                _
            $region48: #{gin_forward.6} parent=43 // pred_fallthru
              _
            // Predicated region
            $region49: #{gin_forward.6} parent=43 // pred_check
              _
            $region50: #{gin_forward.6} parent=43 // pred_check_branch
              %345 = sbr.rel target = $region52
            $region51: #{gin_forward.6} parent=43 // pred_region
              loop: start=0, step=1, limit=1
              $region53: #{gin_forward.6} parent=51 // loop_pre_header
                _
              $region54: #{gin_forward.6} parent=51 // loop_header
                %s348 = sphi 0, %s352
                %p349 = scmp.ge.s32.totalorder %s348, 1
                %s353 = sphi %s339, %s339
                %s354 = sphi %s330, %s330
              $region55: #{gin_forward.6} parent=51 // loop_header_branch
                %351 = sbr.rel (%p349) target = $region59
              $region56: #{gin_forward.6} parent=51 // loop_body
                %v355 = vld [vmem:[%s353] sm:$0xff]
                %356 = vst [vmem:[%s354] sm:$0xff] %v355
                %v357 = vld [vmem:[%s353 + $0x10] sm:$0xff]
                %358 = vst [vmem:[%s354 + $0x8] sm:$0xff] %v357
                %v359 = vld [vmem:[%s353 + $0x20] sm:$0xff]
                %360 = vst [vmem:[%s354 + $0x10] sm:$0xff] %v359
                %v361 = vld [vmem:[%s353 + $0x30] sm:$0xff]
                %362 = vst [vmem:[%s354 + $0x18] sm:$0xff] %v361
                %v363 = vld [vmem:[%s353 + $0x40] sm:$0xff]
                %364 = vst [vmem:[%s354 + $0x20] sm:$0xff] %v363
                %v365 = vld [vmem:[%s353 + $0x50] sm:$0xff]
                %366 = vst [vmem:[%s354 + $0x28] sm:$0xff] %v365
                %v367 = vld [vmem:[%s353 + $0x60] sm:$0xff]
                %368 = vst [vmem:[%s354 + $0x30] sm:$0xff] %v367
                %v369 = vld [vmem:[%s353 + $0x70] sm:$0xff]
                %370 = vst [vmem:[%s354 + $0x38] sm:$0xff] %v369
                %v371 = vld [vmem:[%s353 + $0x80] sm:$0xff]
                %372 = vst [vmem:[%s354 + $0x40] sm:$0xff] %v371
                %v373 = vld [vmem:[%s353 + $0x90] sm:$0xff]
                %374 = vst [vmem:[%s354 + $0x48] sm:$0xff] %v373
                %v375 = vld [vmem:[%s353 + $0xa0] sm:$0xff]
                %376 = vst [vmem:[%s354 + $0x50] sm:$0xff] %v375
                %v377 = vld [vmem:[%s353 + $0xb0] sm:$0xff]
                %378 = vst [vmem:[%s354 + $0x58] sm:$0xff] %v377
                %v379 = vld [vmem:[%s353 + $0xc0] sm:$0xff]
                %380 = vst [vmem:[%s354 + $0x60] sm:$0xff] %v379
                %v381 = vld [vmem:[%s353 + $0xd0] sm:$0xff]
                %382 = vst [vmem:[%s354 + $0x68] sm:$0xff] %v381
                %v383 = vld [vmem:[%s353 + $0xe0] sm:$0xff]
                %384 = vst [vmem:[%s354 + $0x70] sm:$0xff] %v383
                %v385 = vld [vmem:[%s353 + $0xf0] sm:$0xff]
                %386 = vst [vmem:[%s354 + $0x78] sm:$0xff] %v385
                %v387 = vld [vmem:[%s353 + $0x100] sm:$0xff]
                %388 = vst [vmem:[%s354 + $0x80] sm:$0xff] %v387
                %v389 = vld [vmem:[%s353 + $0x110] sm:$0xff]
                %390 = vst [vmem:[%s354 + $0x88] sm:$0xff] %v389
                %v391 = vld [vmem:[%s353 + $0x120] sm:$0xff]
                %392 = vst [vmem:[%s354 + $0x90] sm:$0xff] %v391
                %v393 = vld [vmem:[%s353 + $0x130] sm:$0xff]
                %394 = vst [vmem:[%s354 + $0x98] sm:$0xff] %v393
                %v395 = vld [vmem:[%s353 + $0x140] sm:$0xff]
                %396 = vst [vmem:[%s354 + $0xa0] sm:$0xff] %v395
                %v397 = vld [vmem:[%s353 + $0x150] sm:$0xff]
                %398 = vst [vmem:[%s354 + $0xa8] sm:$0xff] %v397
                %v399 = vld [vmem:[%s353 + $0x160] sm:$0xff]
                %400 = vst [vmem:[%s354 + $0xb0] sm:$0xff] %v399
                %v401 = vld [vmem:[%s353 + $0x170] sm:$0xff]
                %402 = vst [vmem:[%s354 + $0xb8] sm:$0xff] %v401
                %v403 = vld [vmem:[%s353 + $0x180] sm:$0xff]
                %404 = vst [vmem:[%s354 + $0xc0] sm:$0xff] %v403
                %v405 = vld [vmem:[%s353 + $0x190] sm:$0xff]
                %406 = vst [vmem:[%s354 + $0xc8] sm:$0xff] %v405
                %v407 = vld [vmem:[%s353 + $0x1a0] sm:$0xff]
                %408 = vst [vmem:[%s354 + $0xd0] sm:$0xff] %v407
                %v409 = vld [vmem:[%s353 + $0x1b0] sm:$0xff]
                %410 = vst [vmem:[%s354 + $0xd8] sm:$0xff] %v409
                %v411 = vld [vmem:[%s353 + $0x1c0] sm:$0xff]
                %412 = vst [vmem:[%s354 + $0xe0] sm:$0xff] %v411
                %v413 = vld [vmem:[%s353 + $0x1d0] sm:$0xff]
                %414 = vst [vmem:[%s354 + $0xe8] sm:$0xff] %v413
                %v415 = vld [vmem:[%s353 + $0x1e0] sm:$0xff]
                %416 = vst [vmem:[%s354 + $0xf0] sm:$0xff] %v415
                %v417 = vld [vmem:[%s353 + $0x1f0] sm:$0xff]
                %418 = vst [vmem:[%s354 + $0xf8] sm:$0xff] %v417
              $region57: #{gin_forward.6} parent=51 // loop_footer
                %s352 = sadd.s32 1, %s348
              $region58: #{gin_forward.6} parent=51 // loop_footer_branch
                %347 = sbr.rel target = $region54
              $region59: #{gin_forward.6} parent=51 // loop_exit
                _
            $region52: #{gin_forward.6} parent=43 // pred_fallthru
              _
          $region44: #{gin_forward.6} parent=39 // pred_fallthru
            _
          %495 = vnop
        $region40: #{gin_forward.6} parent=35 // pred_fallthru
          _
        // Predicated region
        $region75: #{gin_forward.6} parent=35 // pred_check
          %p496 = pneg %p122
        $region76: #{gin_forward.6} parent=35 // pred_check_branch
          %498 = sbr.rel (%p496) target = $region78
        $region77: #{gin_forward.6} parent=35 // pred_region
          %s499 = smul.u32 %s36, 2
          %s500 = sadd.s32 %s499, %s37
          %s501 = sld [smem:[#allocation5 + %s500]]
          %s502 = smul.u32 32, %s501
          %p503 = scmp.lt.s32.totalorder %s502, 63
          %s504 = scalar_select %p503, %s502, 63
          %s505 = smul.addr %s504, 4
          %s506 = scalar_lea.vmem %s4, %s505
          %s507 = smul.u32 %s36, 2
          %s508 = sadd.s32 %s507, %s37
          %s509 = sld [smem:[#allocation5 + %s508]]
          %s510 = smul.u32 32, %s509
        $region78: #{gin_forward.6} parent=35 // pred_fallthru
          _
        // Predicated region
        $region79: #{gin_forward.6} parent=35 // pred_check
          %p511 = pneg %p148
        $region80: #{gin_forward.6} parent=35 // pred_check_branch
          %513 = sbr.rel (%p511) target = $region82
        $region81: #{gin_forward.6} parent=35 // pred_region
          %s514 = smul.u32 32, %s36
          %p515 = scmp.lt.s32.totalorder %s514, 63
          %s516 = scalar_select %p515, %s514, 63
          %s517 = smul.addr %s516, 4
          %s518 = scalar_lea.vmem %s5, %s517
          %s519 = smul.u32 32, %s36
        $region82: #{gin_forward.6} parent=35 // pred_fallthru
          _
      $region36: #{gin_forward.6} parent=5 // pred_fallthru
        _
      %p520 = scmp.le.s32.totalorder 1, %s29
      %p521 = scmp.lt.s32.totalorder %s29, 5
      %p522 = pnand %p520, %p521
      %p523 = pneg %p522
      // Predicated region
      $region83: #{gin_forward.6} parent=5 // pred_check
        _
      $region84: #{gin_forward.6} parent=5 // pred_check_branch
        %525 = sbr.rel (%p522) target = $region86
      $region85: #{gin_forward.6} parent=5 // pred_region
        %s526 = ssub.s32 %s29, 1
        %s527 = sand.u32 %s83, 1
        %s528 = sand.u32 %s83, 1
        %s529 = smul.addr %s528, 256
        %s530 = scalar_lea.vmem [#allocation7], %s529
        // Predicated region
        $region87: #{gin_forward.6} parent=85 // pred_check
          %p531 = pneg %p96
        $region88: #{gin_forward.6} parent=85 // pred_check_branch
          %533 = sbr.rel (%p531) target = $region90
        $region89: #{gin_forward.6} parent=85 // pred_region
          _
        $region90: #{gin_forward.6} parent=85 // pred_fallthru
          _
        %p534 = pneg %p62
        %p535 = pneg %p59
        %s536 = sand.u32 %s83, 1
        %s537 = sand.u32 %s83, 1
        %s538 = smul.addr %s537, 256
        %s539 = scalar_lea.vmem [#allocation7], %s538
        %p540 = pneg %p96
        %p541 = pneg %p93
        %s542 = smul.u32 %s38, 2
        %s543 = sadd.s32 %s542, %s39
        %s544 = sld [smem:[#allocation5 + %s543]]
        %s545 = smul.u32 32, %s544
        %p546 = scmp.lt.s32.totalorder %s545, 63
        %s547 = scalar_select %p546, %s545, 63
        %s548 = smul.addr %s547, 4
        %s549 = scalar_lea.vmem %s4, %s548
        %p550 = pneg %p128
        %p551 = pneg %p125
        %s552 = smul.u32 32, %s38
        %p553 = scmp.lt.s32.totalorder %s552, 63
        %s554 = scalar_select %p553, %s552, 63
        %s555 = smul.addr %s554, 4
        %s556 = scalar_lea.vmem %s5, %s555
        %p557 = pneg %p154
        %p558 = pneg %p151
        %p559 = pneg %p175
        %p560 = pneg %p172
        %p561 = pneg %p196
        %p562 = pneg %p193
        %p563 = pneg %p217
        %p564 = pneg %p214
        %p565 = pneg %p238
        %p566 = pneg %p235
        %p567 = pneg %p264
        %p568 = pneg %p261
        %s569 = smul.u32 32, %s38
        %p570 = scmp.lt.s32.totalorder %s569, 63
        %s571 = scalar_select %p570, %s569, 63
        %s572 = smul.addr %s571, 4
        %s573 = scalar_lea.vmem %s10, %s572
        %p574 = pneg %p290
        %p575 = pneg %p287
        %p576 = scmp.lt.s32.totalorder %s38, 1
        %s577 = scalar_select %p576, %s38, 1
        %s578 = smul.addr %s577, 8
        %s579 = scalar_lea.vmem %s11, %s578
        %s580 = smul.u32 %s38, 2
        %s581 = sadd.s32 %s580, %s39
        %s582 = sld [smem:[#allocation5 + %s581]]
        %s583 = smul.u32 32, %s38
        %s584 = smul.u32 2, %s582
        %s585 = smul.u32 %s38, 2
        %s586 = sadd.s32 %s585, %s39
        %s587 = sld [smem:[#allocation5 + %s586]]
        %s588 = smul.u32 32, %s587
        %p589 = scmp.lt.s32.totalorder %s588, 63
        %s590 = scalar_select %p589, %s588, 63
        %s591 = smul.addr %s590, 4
        %s592 = scalar_lea.vmem %s4, %s591
        %s593 = smul.u32 %s38, 2
        %s594 = sadd.s32 %s593, %s39
        %s595 = sld [smem:[#allocation5 + %s594]]
        %s596 = smul.u32 32, %s595
        %s597 = smul.u32 32, %s38
        %p598 = scmp.lt.s32.totalorder %s597, 63
        %s599 = scalar_select %p598, %s597, 63
        %s600 = smul.addr %s599, 4
        %s601 = scalar_lea.vmem %s5, %s600
        %s602 = smul.u32 32, %s38
        %s603 = smul.u32 32, %s38
        %p604 = scmp.lt.s32.totalorder %s603, 63
        %s605 = scalar_select %p604, %s603, 63
        %s606 = smul.addr %s605, 4
        %s607 = scalar_lea.vmem %s10, %s606
        %s608 = smul.u32 32, %s38
        %p609 = scmp.lt.s32.totalorder %s38, 1
        %s610 = scalar_select %p609, %s38, 1
        %s611 = smul.addr %s610, 8
        %s612 = scalar_lea.vmem %s11, %s611
        %s614 = sld [smem:[#allocation4 + %s38]]
        %p615 = scmp.eq.s32.totalorder %s39, 0
        // Predicated region
        $region91: #{gin_forward.6} parent=85 // pred_check
          %p616 = pneg %p615
        $region92: #{gin_forward.6} parent=85 // pred_check_branch
          %618 = sbr.rel (%p616) target = $region94
        $region93: #{gin_forward.6} parent=85 // pred_region
          %619 = vst [vmem:[#allocation2] sm:$0xff] 0.0
          %620 = vst [vmem:[#allocation2 + $0x8] sm:$0xff] 0.0
          %621 = vst [vmem:[#allocation2 + $0x10] sm:$0xff] 0.0
          %622 = vst [vmem:[#allocation2 + $0x18] sm:$0xff] 0.0
          %623 = vst [vmem:[#allocation2 + $0x20] sm:$0xff] 0.0
          %624 = vst [vmem:[#allocation2 + $0x28] sm:$0xff] 0.0
          %625 = vst [vmem:[#allocation2 + $0x30] sm:$0xff] 0.0
          %626 = vst [vmem:[#allocation2 + $0x38] sm:$0xff] 0.0
          %627 = vst [vmem:[#allocation2 + $0x40] sm:$0xff] 0.0
          %628 = vst [vmem:[#allocation2 + $0x48] sm:$0xff] 0.0
          %629 = vst [vmem:[#allocation2 + $0x50] sm:$0xff] 0.0
          %630 = vst [vmem:[#allocation2 + $0x58] sm:$0xff] 0.0
          %631 = vst [vmem:[#allocation2 + $0x60] sm:$0xff] 0.0
          %632 = vst [vmem:[#allocation2 + $0x68] sm:$0xff] 0.0
          %633 = vst [vmem:[#allocation2 + $0x70] sm:$0xff] 0.0
          %634 = vst [vmem:[#allocation2 + $0x78] sm:$0xff] 0.0
          %635 = vst [vmem:[#allocation2 + $0x80] sm:$0xff] 0.0
          %636 = vst [vmem:[#allocation2 + $0x88] sm:$0xff] 0.0
          %637 = vst [vmem:[#allocation2 + $0x90] sm:$0xff] 0.0
          %638 = vst [vmem:[#allocation2 + $0x98] sm:$0xff] 0.0
          %639 = vst [vmem:[#allocation2 + $0xa0] sm:$0xff] 0.0
          %640 = vst [vmem:[#allocation2 + $0xa8] sm:$0xff] 0.0
          %641 = vst [vmem:[#allocation2 + $0xb0] sm:$0xff] 0.0
          %642 = vst [vmem:[#allocation2 + $0xb8] sm:$0xff] 0.0
          %643 = vst [vmem:[#allocation2 + $0xc0] sm:$0xff] 0.0
          %644 = vst [vmem:[#allocation2 + $0xc8] sm:$0xff] 0.0
          %645 = vst [vmem:[#allocation2 + $0xd0] sm:$0xff] 0.0
          %646 = vst [vmem:[#allocation2 + $0xd8] sm:$0xff] 0.0
          %647 = vst [vmem:[#allocation2 + $0xe0] sm:$0xff] 0.0
          %648 = vst [vmem:[#allocation2 + $0xe8] sm:$0xff] 0.0
          %649 = vst [vmem:[#allocation2 + $0xf0] sm:$0xff] 0.0
          %650 = vst [vmem:[#allocation2 + $0xf8] sm:$0xff] 0.0
        $region94: #{gin_forward.6} parent=85 // pred_fallthru
          _
        %p651 = scmp.lt.s32.totalorder %s39, %s614
        // Predicated region
        $region95: #{gin_forward.6} parent=85 // pred_check
          %p652 = pneg %p651
        $region96: #{gin_forward.6} parent=85 // pred_check_branch
          %654 = sbr.rel (%p652) target = $region98
        $region97: #{gin_forward.6} parent=85 // pred_region
          %v655 = vld [vmem:[#allocation2] sm:$0xff]
          %v656 = vld [vmem:[#allocation2 + $0x8] sm:$0xff]
          %v657 = vld [vmem:[#allocation2 + $0x10] sm:$0xff]
          %v658 = vld [vmem:[#allocation2 + $0x18] sm:$0xff]
          %v659 = vld [vmem:[#allocation2 + $0x20] sm:$0xff]
          %v660 = vld [vmem:[#allocation2 + $0x28] sm:$0xff]
          %v661 = vld [vmem:[#allocation2 + $0x30] sm:$0xff]
          %v662 = vld [vmem:[#allocation2 + $0x38] sm:$0xff]
          %v663 = vld [vmem:[#allocation2 + $0x40] sm:$0xff]
          %v664 = vld [vmem:[#allocation2 + $0x48] sm:$0xff]
          %v665 = vld [vmem:[#allocation2 + $0x50] sm:$0xff]
          %v666 = vld [vmem:[#allocation2 + $0x58] sm:$0xff]
          %v667 = vld [vmem:[#allocation2 + $0x60] sm:$0xff]
          %v668 = vld [vmem:[#allocation2 + $0x68] sm:$0xff]
          %v669 = vld [vmem:[#allocation2 + $0x70] sm:$0xff]
          %v670 = vld [vmem:[#allocation2 + $0x78] sm:$0xff]
          %v671 = vld [vmem:[#allocation2 + $0x80] sm:$0xff]
          %v672 = vld [vmem:[#allocation2 + $0x88] sm:$0xff]
          %v673 = vld [vmem:[#allocation2 + $0x90] sm:$0xff]
          %v674 = vld [vmem:[#allocation2 + $0x98] sm:$0xff]
          %v675 = vld [vmem:[#allocation2 + $0xa0] sm:$0xff]
          %v676 = vld [vmem:[#allocation2 + $0xa8] sm:$0xff]
          %v677 = vld [vmem:[#allocation2 + $0xb0] sm:$0xff]
          %v678 = vld [vmem:[#allocation2 + $0xb8] sm:$0xff]
          %v679 = vld [vmem:[#allocation2 + $0xc0] sm:$0xff]
          %v680 = vld [vmem:[#allocation2 + $0xc8] sm:$0xff]
          %v681 = vld [vmem:[#allocation2 + $0xd0] sm:$0xff]
          %v682 = vld [vmem:[#allocation2 + $0xd8] sm:$0xff]
          %v683 = vld [vmem:[#allocation2 + $0xe0] sm:$0xff]
          %v684 = vld [vmem:[#allocation2 + $0xe8] sm:$0xff]
          %v685 = vld [vmem:[#allocation2 + $0xf0] sm:$0xff]
          %v686 = vld [vmem:[#allocation2 + $0xf8] sm:$0xff]
          %v687 = vld [vmem:[%s530] sm:$0xff]
          %v688 = vld [vmem:[%s530 + $0x8] sm:$0xff]
          %v689 = vld [vmem:[%s530 + $0x10] sm:$0xff]
          %v690 = vld [vmem:[%s530 + $0x18] sm:$0xff]
          %v691 = vld [vmem:[%s530 + $0x20] sm:$0xff]
          %v692 = vld [vmem:[%s530 + $0x28] sm:$0xff]
          %v693 = vld [vmem:[%s530 + $0x30] sm:$0xff]
          %v694 = vld [vmem:[%s530 + $0x38] sm:$0xff]
          %v695 = vld [vmem:[%s530 + $0x40] sm:$0xff]
          %v696 = vld [vmem:[%s530 + $0x48] sm:$0xff]
          %v697 = vld [vmem:[%s530 + $0x50] sm:$0xff]
          %v698 = vld [vmem:[%s530 + $0x58] sm:$0xff]
          %v699 = vld [vmem:[%s530 + $0x60] sm:$0xff]
          %v700 = vld [vmem:[%s530 + $0x68] sm:$0xff]
          %v701 = vld [vmem:[%s530 + $0x70] sm:$0xff]
          %v702 = vld [vmem:[%s530 + $0x78] sm:$0xff]
          %v703 = vld [vmem:[%s530 + $0x80] sm:$0xff]
          %v704 = vld [vmem:[%s530 + $0x88] sm:$0xff]
          %v705 = vld [vmem:[%s530 + $0x90] sm:$0xff]
          %v706 = vld [vmem:[%s530 + $0x98] sm:$0xff]
          %v707 = vld [vmem:[%s530 + $0xa0] sm:$0xff]
          %v708 = vld [vmem:[%s530 + $0xa8] sm:$0xff]
          %v709 = vld [vmem:[%s530 + $0xb0] sm:$0xff]
          %v710 = vld [vmem:[%s530 + $0xb8] sm:$0xff]
          %v711 = vld [vmem:[%s530 + $0xc0] sm:$0xff]
          %v712 = vld [vmem:[%s530 + $0xc8] sm:$0xff]
          %v713 = vld [vmem:[%s530 + $0xd0] sm:$0xff]
          %v714 = vld [vmem:[%s530 + $0xd8] sm:$0xff]
          %v715 = vld [vmem:[%s530 + $0xe0] sm:$0xff]
          %v716 = vld [vmem:[%s530 + $0xe8] sm:$0xff]
          %v717 = vld [vmem:[%s530 + $0xf0] sm:$0xff]
          %v718 = vld [vmem:[%s530 + $0xf8] sm:$0xff]
          %v719 = vld [vmem:[%s592] sm:$0xf]
          %v720 = vld [vmem:[%s592 + $0x4] sm:$0xf]
          %v721 = vld [vmem:[%s592 + $0x8] sm:$0xf]
          %v722 = vld [vmem:[%s592 + $0xc] sm:$0xf]
          %v723 = vld [vmem:[%s592 + $0x10] sm:$0xf]
          %v724 = vld [vmem:[%s592 + $0x14] sm:$0xf]
          %v725 = vld [vmem:[%s592 + $0x18] sm:$0xf]
          %v726 = vld [vmem:[%s592 + $0x1c] sm:$0xf]
          %v727 = vld [vmem:[%s592 + $0x20] sm:$0xf]
          %v728 = vld [vmem:[%s592 + $0x24] sm:$0xf]
          %v729 = vld [vmem:[%s592 + $0x28] sm:$0xf]
          %v730 = vld [vmem:[%s592 + $0x2c] sm:$0xf]
          %v731 = vld [vmem:[%s592 + $0x30] sm:$0xf]
          %v732 = vld [vmem:[%s592 + $0x34] sm:$0xf]
          %v733 = vld [vmem:[%s592 + $0x38] sm:$0xf]
          %v734 = vld [vmem:[%s592 + $0x3c] sm:$0xf]
          %v735 = vld [vmem:[%s592 + $0x40] sm:$0xf]
          %v736 = vld [vmem:[%s592 + $0x44] sm:$0xf]
          %v737 = vld [vmem:[%s592 + $0x48] sm:$0xf]
          %v738 = vld [vmem:[%s592 + $0x4c] sm:$0xf]
          %v739 = vld [vmem:[%s592 + $0x50] sm:$0xf]
          %v740 = vld [vmem:[%s592 + $0x54] sm:$0xf]
          %v741 = vld [vmem:[%s592 + $0x58] sm:$0xf]
          %v742 = vld [vmem:[%s592 + $0x5c] sm:$0xf]
          %v743 = vld [vmem:[%s592 + $0x60] sm:$0xf]
          %v744 = vld [vmem:[%s592 + $0x64] sm:$0xf]
          %v745 = vld [vmem:[%s592 + $0x68] sm:$0xf]
          %v746 = vld [vmem:[%s592 + $0x6c] sm:$0xf]
          %v747 = vld [vmem:[%s592 + $0x70] sm:$0xf]
          %v748 = vld [vmem:[%s592 + $0x74] sm:$0xf]
          %v749 = vld [vmem:[%s592 + $0x78] sm:$0xf]
          %v750 = vld [vmem:[%s592 + $0x7c] sm:$0xf]
          %v783 = vunpack.c.l.b16 %v687
          %v784 = vunpack.c.h.b16 %v687
          %v785 = vunpack.c.l.b16 %v688
          %v786 = vunpack.c.h.b16 %v688
          %v787 = vunpack.c.l.b16 %v689
          %v788 = vunpack.c.h.b16 %v689
          %v789 = vunpack.c.l.b16 %v690
          %v790 = vunpack.c.h.b16 %v690
          %v791 = vunpack.c.l.b16 %v691
          %v792 = vunpack.c.h.b16 %v691
          %v793 = vunpack.c.l.b16 %v692
          %v794 = vunpack.c.h.b16 %v692
          %v795 = vunpack.c.l.b16 %v693
          %v796 = vunpack.c.h.b16 %v693
          %v797 = vunpack.c.l.b16 %v694
          %v798 = vunpack.c.h.b16 %v694
          %v799 = vunpack.c.l.b16 %v695
          %v800 = vunpack.c.h.b16 %v695
          %v801 = vunpack.c.l.b16 %v696
          %v802 = vunpack.c.h.b16 %v696
          %v803 = vunpack.c.l.b16 %v697
          %v804 = vunpack.c.h.b16 %v697
          %v805 = vunpack.c.l.b16 %v698
          %v806 = vunpack.c.h.b16 %v698
          %v807 = vunpack.c.l.b16 %v699
          %v808 = vunpack.c.h.b16 %v699
          %v809 = vunpack.c.l.b16 %v700
          %v810 = vunpack.c.h.b16 %v700
          %v811 = vunpack.c.l.b16 %v701
          %v812 = vunpack.c.h.b16 %v701
          %v813 = vunpack.c.l.b16 %v702
          %v814 = vunpack.c.h.b16 %v702
          %v815 = vunpack.c.l.b16 %v703
          %v816 = vunpack.c.h.b16 %v703
          %v817 = vunpack.c.l.b16 %v704
          %v818 = vunpack.c.h.b16 %v704
          %v819 = vunpack.c.l.b16 %v705
          %v820 = vunpack.c.h.b16 %v705
          %v821 = vunpack.c.l.b16 %v706
          %v822 = vunpack.c.h.b16 %v706
          %v823 = vunpack.c.l.b16 %v707
          %v824 = vunpack.c.h.b16 %v707
          %v825 = vunpack.c.l.b16 %v708
          %v826 = vunpack.c.h.b16 %v708
          %v827 = vunpack.c.l.b16 %v709
          %v828 = vunpack.c.h.b16 %v709
          %v829 = vunpack.c.l.b16 %v710
          %v830 = vunpack.c.h.b16 %v710
          %v831 = vunpack.c.l.b16 %v711
          %v832 = vunpack.c.h.b16 %v711
          %v833 = vunpack.c.l.b16 %v712
          %v834 = vunpack.c.h.b16 %v712
          %v835 = vunpack.c.l.b16 %v713
          %v836 = vunpack.c.h.b16 %v713
          %v837 = vunpack.c.l.b16 %v714
          %v838 = vunpack.c.h.b16 %v714
          %v839 = vunpack.c.l.b16 %v715
          %v840 = vunpack.c.h.b16 %v715
          %v841 = vunpack.c.l.b16 %v716
          %v842 = vunpack.c.h.b16 %v716
          %v843 = vunpack.c.l.b16 %v717
          %v844 = vunpack.c.h.b16 %v717
          %v845 = vunpack.c.l.b16 %v718
          %v846 = vunpack.c.h.b16 %v718
          %v847 = vpack.c.b16 %v785, %v783
          %v848 = vpack.c.b16 %v786, %v784
          %v849 = vpack.c.b16 %v789, %v787
          %v850 = vpack.c.b16 %v790, %v788
          %v851 = vpack.c.b16 %v793, %v791
          %v852 = vpack.c.b16 %v794, %v792
          %v853 = vpack.c.b16 %v797, %v795
          %v854 = vpack.c.b16 %v798, %v796
          %v855 = vpack.c.b16 %v801, %v799
          %v856 = vpack.c.b16 %v802, %v800
          %v857 = vpack.c.b16 %v805, %v803
          %v858 = vpack.c.b16 %v806, %v804
          %v859 = vpack.c.b16 %v809, %v807
          %v860 = vpack.c.b16 %v810, %v808
          %v861 = vpack.c.b16 %v813, %v811
          %v862 = vpack.c.b16 %v814, %v812
          %v863 = vpack.c.b16 %v817, %v815
          %v864 = vpack.c.b16 %v818, %v816
          %v865 = vpack.c.b16 %v821, %v819
          %v866 = vpack.c.b16 %v822, %v820
          %v867 = vpack.c.b16 %v825, %v823
          %v868 = vpack.c.b16 %v826, %v824
          %v869 = vpack.c.b16 %v829, %v827
          %v870 = vpack.c.b16 %v830, %v828
          %v871 = vpack.c.b16 %v833, %v831
          %v872 = vpack.c.b16 %v834, %v832
          %v873 = vpack.c.b16 %v837, %v835
          %v874 = vpack.c.b16 %v838, %v836
          %v875 = vpack.c.b16 %v841, %v839
          %v876 = vpack.c.b16 %v842, %v840
          %v877 = vpack.c.b16 %v845, %v843
          %v878 = vpack.c.b16 %v846, %v844
          %v943 = vunpack.c.l.b16 %v719
          %v944 = vunpack.c.l.b16 %v720
          %v945 = vunpack.c.l.b16 %v721
          %v946 = vunpack.c.l.b16 %v722
          %v947 = vunpack.c.l.b16 %v723
          %v948 = vunpack.c.l.b16 %v724
          %v949 = vunpack.c.l.b16 %v725
          %v950 = vunpack.c.l.b16 %v726
          %v951 = vunpack.c.l.b16 %v727
          %v952 = vunpack.c.l.b16 %v728
          %v953 = vunpack.c.l.b16 %v729
          %v954 = vunpack.c.l.b16 %v730
          %v955 = vunpack.c.l.b16 %v731
          %v956 = vunpack.c.l.b16 %v732
          %v957 = vunpack.c.l.b16 %v733
          %v958 = vunpack.c.l.b16 %v734
          %v959 = vunpack.c.l.b16 %v735
          %v960 = vunpack.c.l.b16 %v736
          %v961 = vunpack.c.l.b16 %v737
          %v962 = vunpack.c.l.b16 %v738
          %v963 = vunpack.c.l.b16 %v739
          %v964 = vunpack.c.l.b16 %v740
          %v965 = vunpack.c.l.b16 %v741
          %v966 = vunpack.c.l.b16 %v742
          %v967 = vunpack.c.l.b16 %v743
          %v968 = vunpack.c.l.b16 %v744
          %v969 = vunpack.c.l.b16 %v745
          %v970 = vunpack.c.l.b16 %v746
          %v971 = vunpack.c.l.b16 %v747
          %v972 = vunpack.c.l.b16 %v748
          %v973 = vunpack.c.l.b16 %v749
          %v974 = vunpack.c.l.b16 %v750
          %v975 = vpack.c.b16 %v944, %v943
          %v976 = vpack.c.b16 %v946, %v945
          %v977 = vpack.c.b16 %v948, %v947
          %v978 = vpack.c.b16 %v950, %v949
          %v979 = vpack.c.b16 %v952, %v951
          %v980 = vpack.c.b16 %v954, %v953
          %v981 = vpack.c.b16 %v956, %v955
          %v982 = vpack.c.b16 %v958, %v957
          %v983 = vpack.c.b16 %v960, %v959
          %v984 = vpack.c.b16 %v962, %v961
          %v985 = vpack.c.b16 %v964, %v963
          %v986 = vpack.c.b16 %v966, %v965
          %v987 = vpack.c.b16 %v968, %v967
          %v988 = vpack.c.b16 %v970, %v969
          %v989 = vpack.c.b16 %v972, %v971
          %v990 = vpack.c.b16 %v974, %v973
          %1007 = vmatprep.subr.bf16.mxu0 0
          %1008 = vmatpush1.bf16.msra.mxu0 %v975
          %1009 = vmatprep.subr.bf16.mxu0 0
          %1010 = vmatpush1.bf16.msra.mxu0 %v976
          %1011 = vmatprep.subr.bf16.mxu0 0
          %1012 = vmatpush1.bf16.msra.mxu0 %v977
          %1013 = vmatprep.subr.bf16.mxu0 0
          %1014 = vmatpush1.bf16.msra.mxu0 %v978
          %1015 = vmatprep.subr.bf16.mxu0 0
          %1016 = vmatpush1.bf16.msra.mxu0 %v979
          %1017 = vmatprep.subr.bf16.mxu0 0
          %1018 = vmatpush1.bf16.msra.mxu0 %v980
          %1019 = vmatprep.subr.bf16.mxu0 0
          %1020 = vmatpush1.bf16.msra.mxu0 %v981
          %1021 = vmatprep.subr.bf16.mxu0 0
          %1022 = vmatpush1.bf16.msra.mxu0 %v982
          %1023 = vmatprep.subr.bf16.mxu0 0
          %1024 = vmatpush1.bf16.msra.mxu0 %v983
          %1025 = vmatprep.subr.bf16.mxu0 0
          %1026 = vmatpush1.bf16.msra.mxu0 %v984
          %1027 = vmatprep.subr.bf16.mxu0 0
          %1028 = vmatpush1.bf16.msra.mxu0 %v985
          %1029 = vmatprep.subr.bf16.mxu0 0
          %1030 = vmatpush1.bf16.msra.mxu0 %v986
          %1031 = vmatprep.subr.bf16.mxu0 0
          %1032 = vmatpush1.bf16.msra.mxu0 %v987
          %1033 = vmatprep.subr.bf16.mxu0 0
          %1034 = vmatpush1.bf16.msra.mxu0 %v988
          %1035 = vmatprep.subr.bf16.mxu0 0
          %1036 = vmatpush1.bf16.msra.mxu0 %v989
          %1037 = vmatprep.subr.bf16.mxu0 0
          %1038 = vmatpush1.bf16.msra.mxu0 %v990
          %1039 = vmatprep.mubr.bf16.mxu0 %v848
          %1040 = vmatmul.mubr.bf16.gmra.mrb[0].mxu0 %v847
          %v1041 = vpop.f32.mrb[0].mxu0
          %v1042 = vadd.f32 0.0, %v1041
          %v1043 = vpop.f32.mrb[0].mxu0
          %v1044 = vpop.f32.mrb[0].mxu0
          %v1045 = vadd.f32 0.0, %v1044
          %v1046 = vpop.f32.mrb[0].mxu0
          %1047 = vmatprep.mubr.bf16.mxu0 %v850
          %1048 = vmatmul.mubr.bf16.gmra.mrb[0].mxu0 %v849
          %v1049 = vpop.f32.mrb[0].mxu0
          %v1050 = vadd.f32 0.0, %v1049
          %v1051 = vpop.f32.mrb[0].mxu0
          %v1052 = vpop.f32.mrb[0].mxu0
          %v1053 = vadd.f32 0.0, %v1052
          %v1054 = vpop.f32.mrb[0].mxu0
          %1055 = vmatprep.mubr.bf16.mxu0 %v852
          %1056 = vmatmul.mubr.bf16.gmra.mrb[0].mxu0 %v851
          %v1057 = vpop.f32.mrb[0].mxu0
          %v1058 = vadd.f32 0.0, %v1057
          %v1059 = vpop.f32.mrb[0].mxu0
          %v1060 = vpop.f32.mrb[0].mxu0
          %v1061 = vadd.f32 0.0, %v1060
          %v1062 = vpop.f32.mrb[0].mxu0
          %1063 = vmatprep.mubr.bf16.mxu0 %v854
          %1064 = vmatmul.mubr.bf16.gmra.mrb[0].mxu0 %v853
          %v1065 = vpop.f32.mrb[0].mxu0
          %v1066 = vadd.f32 0.0, %v1065
          %v1067 = vpop.f32.mrb[0].mxu0
          %v1068 = vpop.f32.mrb[0].mxu0
          %v1069 = vadd.f32 0.0, %v1068
          %v1070 = vpop.f32.mrb[0].mxu0
          %1071 = vmatprep.mubr.bf16.mxu0 %v856
          %1072 = vmatmul.mubr.bf16.gmra.mrb[0].mxu0 %v855
          %v1073 = vpop.f32.mrb[0].mxu0
          %v1074 = vadd.f32 0.0, %v1073
          %v1075 = vpop.f32.mrb[0].mxu0
          %v1076 = vpop.f32.mrb[0].mxu0
          %v1077 = vadd.f32 0.0, %v1076
          %v1078 = vpop.f32.mrb[0].mxu0
          %1079 = vmatprep.mubr.bf16.mxu0 %v858
          %1080 = vmatmul.mubr.bf16.gmra.mrb[0].mxu0 %v857
          %v1081 = vpop.f32.mrb[0].mxu0
          %v1082 = vadd.f32 0.0, %v1081
          %v1083 = vpop.f32.mrb[0].mxu0
          %v1084 = vpop.f32.mrb[0].mxu0
          %v1085 = vadd.f32 0.0, %v1084
          %v1086 = vpop.f32.mrb[0].mxu0
          %1087 = vmatprep.mubr.bf16.mxu0 %v860
          %1088 = vmatmul.mubr.bf16.gmra.mrb[0].mxu0 %v859
          %v1089 = vpop.f32.mrb[0].mxu0
          %v1090 = vadd.f32 0.0, %v1089
          %v1091 = vpop.f32.mrb[0].mxu0
          %v1092 = vpop.f32.mrb[0].mxu0
          %v1093 = vadd.f32 0.0, %v1092
          %v1094 = vpop.f32.mrb[0].mxu0
          %1095 = vmatprep.mubr.bf16.mxu0 %v862
          %1096 = vmatmul.mubr.bf16.gmra.mrb[0].mxu0 %v861
          %v1097 = vpop.f32.mrb[0].mxu0
          %v1098 = vadd.f32 0.0, %v1097
          %v1099 = vpop.f32.mrb[0].mxu0
          %v1100 = vpop.f32.mrb[0].mxu0
          %v1101 = vadd.f32 0.0, %v1100
          %v1102 = vpop.f32.mrb[0].mxu0
          %1103 = vmatprep.mubr.bf16.mxu0 %v864
          %1104 = vmatmul.mubr.bf16.gmra.mrb[0].mxu0 %v863
          %v1105 = vpop.f32.mrb[0].mxu0
          %v1106 = vadd.f32 0.0, %v1105
          %v1107 = vpop.f32.mrb[0].mxu0
          %v1108 = vpop.f32.mrb[0].mxu0
          %v1109 = vadd.f32 0.0, %v1108
          %v1110 = vpop.f32.mrb[0].mxu0
          %1111 = vmatprep.mubr.bf16.mxu0 %v866
          %1112 = vmatmul.mubr.bf16.gmra.mrb[0].mxu0 %v865
          %v1113 = vpop.f32.mrb[0].mxu0
          %v1114 = vadd.f32 0.0, %v1113
          %v1115 = vpop.f32.mrb[0].mxu0
          %v1116 = vpop.f32.mrb[0].mxu0
          %v1117 = vadd.f32 0.0, %v1116
          %v1118 = vpop.f32.mrb[0].mxu0
          %1119 = vmatprep.mubr.bf16.mxu0 %v868
          %1120 = vmatmul.mubr.bf16.gmra.mrb[0].mxu0 %v867
          %v1121 = vpop.f32.mrb[0].mxu0
          %v1122 = vadd.f32 0.0, %v1121
          %v1123 = vpop.f32.mrb[0].mxu0
          %v1124 = vpop.f32.mrb[0].mxu0
          %v1125 = vadd.f32 0.0, %v1124
          %v1126 = vpop.f32.mrb[0].mxu0
          %1127 = vmatprep.mubr.bf16.mxu0 %v870
          %1128 = vmatmul.mubr.bf16.gmra.mrb[0].mxu0 %v869
          %v1129 = vpop.f32.mrb[0].mxu0
          %v1130 = vadd.f32 0.0, %v1129
          %v1131 = vpop.f32.mrb[0].mxu0
          %v1132 = vpop.f32.mrb[0].mxu0
          %v1133 = vadd.f32 0.0, %v1132
          %v1134 = vpop.f32.mrb[0].mxu0
          %1135 = vmatprep.mubr.bf16.mxu0 %v872
          %1136 = vmatmul.mubr.bf16.gmra.mrb[0].mxu0 %v871
          %v1137 = vpop.f32.mrb[0].mxu0
          %v1138 = vadd.f32 0.0, %v1137
          %v1139 = vpop.f32.mrb[0].mxu0
          %v1140 = vpop.f32.mrb[0].mxu0
          %v1141 = vadd.f32 0.0, %v1140
          %v1142 = vpop.f32.mrb[0].mxu0
          %1143 = vmatprep.mubr.bf16.mxu0 %v874
          %1144 = vmatmul.mubr.bf16.gmra.mrb[0].mxu0 %v873
          %v1145 = vpop.f32.mrb[0].mxu0
          %v1146 = vadd.f32 0.0, %v1145
          %v1147 = vpop.f32.mrb[0].mxu0
          %v1148 = vpop.f32.mrb[0].mxu0
          %v1149 = vadd.f32 0.0, %v1148
          %v1150 = vpop.f32.mrb[0].mxu0
          %1151 = vmatprep.mubr.bf16.mxu0 %v876
          %1152 = vmatmul.mubr.bf16.gmra.mrb[0].mxu0 %v875
          %v1153 = vpop.f32.mrb[0].mxu0
          %v1154 = vadd.f32 0.0, %v1153
          %v1155 = vpop.f32.mrb[0].mxu0
          %v1156 = vpop.f32.mrb[0].mxu0
          %v1157 = vadd.f32 0.0, %v1156
          %v1158 = vpop.f32.mrb[0].mxu0
          %1159 = vmatprep.mubr.bf16.mxu0 %v878
          %1160 = vmatmul.mubr.bf16.gmra.mrb[0].mxu0 %v877
          %v1161 = vpop.f32.mrb[0].mxu0
          %v1162 = vadd.f32 0.0, %v1161
          %v1163 = vpop.f32.mrb[0].mxu0
          %v1164 = vpop.f32.mrb[0].mxu0
          %v1165 = vadd.f32 0.0, %v1164
          %v1166 = vpop.f32.mrb[0].mxu0
          %1167 = vdwg.mxu0
          %v1168 = vadd.f32 %v655, %v1042
          %v1169 = vadd.f32 %v656, %v1045
          %v1170 = vadd.f32 %v657, %v1050
          %v1171 = vadd.f32 %v658, %v1053
          %v1172 = vadd.f32 %v659, %v1058
          %v1173 = vadd.f32 %v660, %v1061
          %v1174 = vadd.f32 %v661, %v1066
          %v1175 = vadd.f32 %v662, %v1069
          %v1176 = vadd.f32 %v663, %v1074
          %v1177 = vadd.f32 %v664, %v1077
          %v1178 = vadd.f32 %v665, %v1082
          %v1179 = vadd.f32 %v666, %v1085
          %v1180 = vadd.f32 %v667, %v1090
          %v1181 = vadd.f32 %v668, %v1093
          %v1182 = vadd.f32 %v669, %v1098
          %v1183 = vadd.f32 %v670, %v1101
          %v1184 = vadd.f32 %v671, %v1106
          %v1185 = vadd.f32 %v672, %v1109
          %v1186 = vadd.f32 %v673, %v1114
          %v1187 = vadd.f32 %v674, %v1117
          %v1188 = vadd.f32 %v675, %v1122
          %v1189 = vadd.f32 %v676, %v1125
          %v1190 = vadd.f32 %v677, %v1130
          %v1191 = vadd.f32 %v678, %v1133
          %v1192 = vadd.f32 %v679, %v1138
          %v1193 = vadd.f32 %v680, %v1141
          %v1194 = vadd.f32 %v681, %v1146
          %v1195 = vadd.f32 %v682, %v1149
          %v1196 = vadd.f32 %v683, %v1154
          %v1197 = vadd.f32 %v684, %v1157
          %v1198 = vadd.f32 %v685, %v1162
          %v1199 = vadd.f32 %v686, %v1165
          %1200 = vst [vmem:[#allocation2] sm:$0xff] %v1168
          %1201 = vst [vmem:[#allocation2 + $0x8] sm:$0xff] %v1169
          %1202 = vst [vmem:[#allocation2 + $0x10] sm:$0xff] %v1170
          %1203 = vst [vmem:[#allocation2 + $0x18] sm:$0xff] %v1171
          %1204 = vst [vmem:[#allocation2 + $0x20] sm:$0xff] %v1172
          %1205 = vst [vmem:[#allocation2 + $0x28] sm:$0xff] %v1173
          %1206 = vst [vmem:[#allocation2 + $0x30] sm:$0xff] %v1174
          %1207 = vst [vmem:[#allocation2 + $0x38] sm:$0xff] %v1175
          %1208 = vst [vmem:[#allocation2 + $0x40] sm:$0xff] %v1176
          %1209 = vst [vmem:[#allocation2 + $0x48] sm:$0xff] %v1177
          %1210 = vst [vmem:[#allocation2 + $0x50] sm:$0xff] %v1178
          %1211 = vst [vmem:[#allocation2 + $0x58] sm:$0xff] %v1179
          %1212 = vst [vmem:[#allocation2 + $0x60] sm:$0xff] %v1180
          %1213 = vst [vmem:[#allocation2 + $0x68] sm:$0xff] %v1181
          %1214 = vst [vmem:[#allocation2 + $0x70] sm:$0xff] %v1182
          %1215 = vst [vmem:[#allocation2 + $0x78] sm:$0xff] %v1183
          %1216 = vst [vmem:[#allocation2 + $0x80] sm:$0xff] %v1184
          %1217 = vst [vmem:[#allocation2 + $0x88] sm:$0xff] %v1185
          %1218 = vst [vmem:[#allocation2 + $0x90] sm:$0xff] %v1186
          %1219 = vst [vmem:[#allocation2 + $0x98] sm:$0xff] %v1187
          %1220 = vst [vmem:[#allocation2 + $0xa0] sm:$0xff] %v1188
          %1221 = vst [vmem:[#allocation2 + $0xa8] sm:$0xff] %v1189
          %1222 = vst [vmem:[#allocation2 + $0xb0] sm:$0xff] %v1190
          %1223 = vst [vmem:[#allocation2 + $0xb8] sm:$0xff] %v1191
          %1224 = vst [vmem:[#allocation2 + $0xc0] sm:$0xff] %v1192
          %1225 = vst [vmem:[#allocation2 + $0xc8] sm:$0xff] %v1193
          %1226 = vst [vmem:[#allocation2 + $0xd0] sm:$0xff] %v1194
          %1227 = vst [vmem:[#allocation2 + $0xd8] sm:$0xff] %v1195
          %1228 = vst [vmem:[#allocation2 + $0xe0] sm:$0xff] %v1196
          %1229 = vst [vmem:[#allocation2 + $0xe8] sm:$0xff] %v1197
          %1230 = vst [vmem:[#allocation2 + $0xf0] sm:$0xff] %v1198
          %1231 = vst [vmem:[#allocation2 + $0xf8] sm:$0xff] %v1199
        $region98: #{gin_forward.6} parent=85 // pred_fallthru
          _
        %p1232 = scmp.eq.s32.totalorder %s39, 1
        // Predicated region
        $region99: #{gin_forward.6} parent=85 // pred_check
          %p1233 = pneg %p1232
        $region100: #{gin_forward.6} parent=85 // pred_check_branch
          %1235 = sbr.rel (%p1233) target = $region102
        $region101: #{gin_forward.6} parent=85 // pred_region
          %v1236 = vld [vmem:[#allocation2] sm:$0xff]
          %v1237 = vld [vmem:[#allocation2 + $0x8] sm:$0xff]
          %v1238 = vld [vmem:[#allocation2 + $0x10] sm:$0xff]
          %v1239 = vld [vmem:[#allocation2 + $0x18] sm:$0xff]
          %v1240 = vld [vmem:[#allocation2 + $0x20] sm:$0xff]
          %v1241 = vld [vmem:[#allocation2 + $0x28] sm:$0xff]
          %v1242 = vld [vmem:[#allocation2 + $0x30] sm:$0xff]
          %v1243 = vld [vmem:[#allocation2 + $0x38] sm:$0xff]
          %v1244 = vld [vmem:[#allocation2 + $0x40] sm:$0xff]
          %v1245 = vld [vmem:[#allocation2 + $0x48] sm:$0xff]
          %v1246 = vld [vmem:[#allocation2 + $0x50] sm:$0xff]
          %v1247 = vld [vmem:[#allocation2 + $0x58] sm:$0xff]
          %v1248 = vld [vmem:[#allocation2 + $0x60] sm:$0xff]
          %v1249 = vld [vmem:[#allocation2 + $0x68] sm:$0xff]
          %v1250 = vld [vmem:[#allocation2 + $0x70] sm:$0xff]
          %v1251 = vld [vmem:[#allocation2 + $0x78] sm:$0xff]
          %v1252 = vld [vmem:[#allocation2 + $0x80] sm:$0xff]
          %v1253 = vld [vmem:[#allocation2 + $0x88] sm:$0xff]
          %v1254 = vld [vmem:[#allocation2 + $0x90] sm:$0xff]
          %v1255 = vld [vmem:[#allocation2 + $0x98] sm:$0xff]
          %v1256 = vld [vmem:[#allocation2 + $0xa0] sm:$0xff]
          %v1257 = vld [vmem:[#allocation2 + $0xa8] sm:$0xff]
          %v1258 = vld [vmem:[#allocation2 + $0xb0] sm:$0xff]
          %v1259 = vld [vmem:[#allocation2 + $0xb8] sm:$0xff]
          %v1260 = vld [vmem:[#allocation2 + $0xc0] sm:$0xff]
          %v1261 = vld [vmem:[#allocation2 + $0xc8] sm:$0xff]
          %v1262 = vld [vmem:[#allocation2 + $0xd0] sm:$0xff]
          %v1263 = vld [vmem:[#allocation2 + $0xd8] sm:$0xff]
          %v1264 = vld [vmem:[#allocation2 + $0xe0] sm:$0xff]
          %v1265 = vld [vmem:[#allocation2 + $0xe8] sm:$0xff]
          %v1266 = vld [vmem:[#allocation2 + $0xf0] sm:$0xff]
          %v1267 = vld [vmem:[#allocation2 + $0xf8] sm:$0xff]
          %s1268 = sld [smem:[#allocation6]]
          %s1269 = sadd.f32 %s1268, 1.0
          %v1270 = vld [vmem:[%s601] sm:$0xf]
          %v1271 = vld [vmem:[%s601 + $0x4] sm:$0xf]
          %v1272 = vld [vmem:[%s601 + $0x8] sm:$0xf]
          %v1273 = vld [vmem:[%s601 + $0xc] sm:$0xf]
          %v1274 = vld [vmem:[%s601 + $0x10] sm:$0xf]
          %v1275 = vld [vmem:[%s601 + $0x14] sm:$0xf]
          %v1276 = vld [vmem:[%s601 + $0x18] sm:$0xf]
          %v1277 = vld [vmem:[%s601 + $0x1c] sm:$0xf]
          %v1278 = vld [vmem:[%s601 + $0x20] sm:$0xf]
          %v1279 = vld [vmem:[%s601 + $0x24] sm:$0xf]
          %v1280 = vld [vmem:[%s601 + $0x28] sm:$0xf]
          %v1281 = vld [vmem:[%s601 + $0x2c] sm:$0xf]
          %v1282 = vld [vmem:[%s601 + $0x30] sm:$0xf]
          %v1283 = vld [vmem:[%s601 + $0x34] sm:$0xf]
          %v1284 = vld [vmem:[%s601 + $0x38] sm:$0xf]
          %v1285 = vld [vmem:[%s601 + $0x3c] sm:$0xf]
          %v1286 = vld [vmem:[%s601 + $0x40] sm:$0xf]
          %v1287 = vld [vmem:[%s601 + $0x44] sm:$0xf]
          %v1288 = vld [vmem:[%s601 + $0x48] sm:$0xf]
          %v1289 = vld [vmem:[%s601 + $0x4c] sm:$0xf]
          %v1290 = vld [vmem:[%s601 + $0x50] sm:$0xf]
          %v1291 = vld [vmem:[%s601 + $0x54] sm:$0xf]
          %v1292 = vld [vmem:[%s601 + $0x58] sm:$0xf]
          %v1293 = vld [vmem:[%s601 + $0x5c] sm:$0xf]
          %v1294 = vld [vmem:[%s601 + $0x60] sm:$0xf]
          %v1295 = vld [vmem:[%s601 + $0x64] sm:$0xf]
          %v1296 = vld [vmem:[%s601 + $0x68] sm:$0xf]
          %v1297 = vld [vmem:[%s601 + $0x6c] sm:$0xf]
          %v1298 = vld [vmem:[%s601 + $0x70] sm:$0xf]
          %v1299 = vld [vmem:[%s601 + $0x74] sm:$0xf]
          %v1300 = vld [vmem:[%s601 + $0x78] sm:$0xf]
          %v1301 = vld [vmem:[%s601 + $0x7c] sm:$0xf]
          %v1302 = vunpack.c.l.bf16 %v1270
          %v1303 = vunpack.c.l.bf16 %v1271
          %v1304 = vunpack.c.l.bf16 %v1272
          %v1305 = vunpack.c.l.bf16 %v1273
          %v1306 = vunpack.c.l.bf16 %v1274
          %v1307 = vunpack.c.l.bf16 %v1275
          %v1308 = vunpack.c.l.bf16 %v1276
          %v1309 = vunpack.c.l.bf16 %v1277
          %v1310 = vunpack.c.l.bf16 %v1278
          %v1311 = vunpack.c.l.bf16 %v1279
          %v1312 = vunpack.c.l.bf16 %v1280
          %v1313 = vunpack.c.l.bf16 %v1281
          %v1314 = vunpack.c.l.bf16 %v1282
          %v1315 = vunpack.c.l.bf16 %v1283
          %v1316 = vunpack.c.l.bf16 %v1284
          %v1317 = vunpack.c.l.bf16 %v1285
          %v1318 = vunpack.c.l.bf16 %v1286
          %v1319 = vunpack.c.l.bf16 %v1287
          %v1320 = vunpack.c.l.bf16 %v1288
          %v1321 = vunpack.c.l.bf16 %v1289
          %v1322 = vunpack.c.l.bf16 %v1290
          %v1323 = vunpack.c.l.bf16 %v1291
          %v1324 = vunpack.c.l.bf16 %v1292
          %v1325 = vunpack.c.l.bf16 %v1293
          %v1326 = vunpack.c.l.bf16 %v1294
          %v1327 = vunpack.c.l.bf16 %v1295
          %v1328 = vunpack.c.l.bf16 %v1296
          %v1329 = vunpack.c.l.bf16 %v1297
          %v1330 = vunpack.c.l.bf16 %v1298
          %v1331 = vunpack.c.l.bf16 %v1299
          %v1332 = vunpack.c.l.bf16 %v1300
          %v1333 = vunpack.c.l.bf16 %v1301
          %v1334 = vstv %s1269
          %v1335 = vmul.f32 %v1334, %v1302
          %v1336 = vmul.f32 %v1334, %v1303
          %v1337 = vmul.f32 %v1334, %v1304
          %v1338 = vmul.f32 %v1334, %v1305
          %v1339 = vmul.f32 %v1334, %v1306
          %v1340 = vmul.f32 %v1334, %v1307
          %v1341 = vmul.f32 %v1334, %v1308
          %v1342 = vmul.f32 %v1334, %v1309
          %v1343 = vmul.f32 %v1334, %v1310
          %v1344 = vmul.f32 %v1334, %v1311
          %v1345 = vmul.f32 %v1334, %v1312
          %v1346 = vmul.f32 %v1334, %v1313
          %v1347 = vmul.f32 %v1334, %v1314
          %v1348 = vmul.f32 %v1334, %v1315
          %v1349 = vmul.f32 %v1334, %v1316
          %v1350 = vmul.f32 %v1334, %v1317
          %v1351 = vmul.f32 %v1334, %v1318
          %v1352 = vmul.f32 %v1334, %v1319
          %v1353 = vmul.f32 %v1334, %v1320
          %v1354 = vmul.f32 %v1334, %v1321
          %v1355 = vmul.f32 %v1334, %v1322
          %v1356 = vmul.f32 %v1334, %v1323
          %v1357 = vmul.f32 %v1334, %v1324
          %v1358 = vmul.f32 %v1334, %v1325
          %v1359 = vmul.f32 %v1334, %v1326
          %v1360 = vmul.f32 %v1334, %v1327
          %v1361 = vmul.f32 %v1334, %v1328
          %v1362 = vmul.f32 %v1334, %v1329
          %v1363 = vmul.f32 %v1334, %v1330
          %v1364 = vmul.f32 %v1334, %v1331
          %v1365 = vmul.f32 %v1334, %v1332
          %v1366 = vmul.f32 %v1334, %v1333
          %v1367 = vadd.f32 %v1236, %v1335
          %v1368 = vadd.f32 %v1237, %v1336
          %v1369 = vadd.f32 %v1238, %v1337
          %v1370 = vadd.f32 %v1239, %v1338
          %v1371 = vadd.f32 %v1240, %v1339
          %v1372 = vadd.f32 %v1241, %v1340
          %v1373 = vadd.f32 %v1242, %v1341
          %v1374 = vadd.f32 %v1243, %v1342
          %v1375 = vadd.f32 %v1244, %v1343
          %v1376 = vadd.f32 %v1245, %v1344
          %v1377 = vadd.f32 %v1246, %v1345
          %v1378 = vadd.f32 %v1247, %v1346
          %v1379 = vadd.f32 %v1248, %v1347
          %v1380 = vadd.f32 %v1249, %v1348
          %v1381 = vadd.f32 %v1250, %v1349
          %v1382 = vadd.f32 %v1251, %v1350
          %v1383 = vadd.f32 %v1252, %v1351
          %v1384 = vadd.f32 %v1253, %v1352
          %v1385 = vadd.f32 %v1254, %v1353
          %v1386 = vadd.f32 %v1255, %v1354
          %v1387 = vadd.f32 %v1256, %v1355
          %v1388 = vadd.f32 %v1257, %v1356
          %v1389 = vadd.f32 %v1258, %v1357
          %v1390 = vadd.f32 %v1259, %v1358
          %v1391 = vadd.f32 %v1260, %v1359
          %v1392 = vadd.f32 %v1261, %v1360
          %v1393 = vadd.f32 %v1262, %v1361
          %v1394 = vadd.f32 %v1263, %v1362
          %v1395 = vadd.f32 %v1264, %v1363
          %v1396 = vadd.f32 %v1265, %v1364
          %v1397 = vadd.f32 %v1266, %v1365
          %v1398 = vadd.f32 %v1267, %v1366
          %v1399 = vpack.c.bf16 %v1368, %v1367
          %v1400 = vpack.c.bf16 %v1370, %v1369
          %v1401 = vpack.c.bf16 %v1372, %v1371
          %v1402 = vpack.c.bf16 %v1374, %v1373
          %v1403 = vpack.c.bf16 %v1376, %v1375
          %v1404 = vpack.c.bf16 %v1378, %v1377
          %v1405 = vpack.c.bf16 %v1380, %v1379
          %v1406 = vpack.c.bf16 %v1382, %v1381
          %v1407 = vpack.c.bf16 %v1384, %v1383
          %v1408 = vpack.c.bf16 %v1386, %v1385
          %v1409 = vpack.c.bf16 %v1388, %v1387
          %v1410 = vpack.c.bf16 %v1390, %v1389
          %v1411 = vpack.c.bf16 %v1392, %v1391
          %v1412 = vpack.c.bf16 %v1394, %v1393
          %v1413 = vpack.c.bf16 %v1396, %v1395
          %v1414 = vpack.c.bf16 %v1398, %v1397
          %v1415 = vld [vmem:[%s6] sm:$0xf]
          %v1416 = vld [vmem:[%s6 + $0x4] sm:$0xf]
          %v1417 = vld [vmem:[%s6 + $0x8] sm:$0xf]
          %v1418 = vld [vmem:[%s6 + $0xc] sm:$0xf]
          %v1419 = vld [vmem:[%s6 + $0x10] sm:$0xf]
          %v1420 = vld [vmem:[%s6 + $0x14] sm:$0xf]
          %v1421 = vld [vmem:[%s6 + $0x18] sm:$0xf]
          %v1422 = vld [vmem:[%s6 + $0x1c] sm:$0xf]
          %v1423 = vld [vmem:[%s6 + $0x20] sm:$0xf]
          %v1424 = vld [vmem:[%s6 + $0x24] sm:$0xf]
          %v1425 = vld [vmem:[%s6 + $0x28] sm:$0xf]
          %v1426 = vld [vmem:[%s6 + $0x2c] sm:$0xf]
          %v1427 = vld [vmem:[%s6 + $0x30] sm:$0xf]
          %v1428 = vld [vmem:[%s6 + $0x34] sm:$0xf]
          %v1429 = vld [vmem:[%s6 + $0x38] sm:$0xf]
          %v1430 = vld [vmem:[%s6 + $0x3c] sm:$0xf]
          %v1431 = vld [vmem:[%s7] sm:$0x1]
          %v1433 = vlaneseq
          %v1434 = vshrl.u32 %v1433, 7
          %v1435 = vsub.s32 0, %v1434
          %v1436 = vrot.slane %v1431, %v1435
          %v1454 = vunpack.c.l.b16 %v1415
          %v1455 = vunpack.c.l.b16 %v1416
          %v1456 = vunpack.c.l.b16 %v1417
          %v1457 = vunpack.c.l.b16 %v1418
          %v1458 = vunpack.c.l.b16 %v1419
          %v1459 = vunpack.c.l.b16 %v1420
          %v1460 = vunpack.c.l.b16 %v1421
          %v1461 = vunpack.c.l.b16 %v1422
          %v1462 = vunpack.c.l.b16 %v1423
          %v1463 = vunpack.c.l.b16 %v1424
          %v1464 = vunpack.c.l.b16 %v1425
          %v1465 = vunpack.c.l.b16 %v1426
          %v1466 = vunpack.c.l.b16 %v1427
          %v1467 = vunpack.c.l.b16 %v1428
          %v1468 = vunpack.c.l.b16 %v1429
          %v1469 = vunpack.c.l.b16 %v1430
          %v1470 = vpack.c.b16 %v1455, %v1454
          %v1471 = vpack.c.b16 %v1457, %v1456
          %v1472 = vpack.c.b16 %v1459, %v1458
          %v1473 = vpack.c.b16 %v1461, %v1460
          %v1474 = vpack.c.b16 %v1463, %v1462
          %v1475 = vpack.c.b16 %v1465, %v1464
          %v1476 = vpack.c.b16 %v1467, %v1466
          %v1477 = vpack.c.b16 %v1469, %v1468
          %1486 = vmatprep.subr.bf16.mxu0 0
          %1487 = vmatpush1.bf16.msra.mxu0 %v1470
          %1488 = vmatprep.subr.bf16.mxu0 0
          %1489 = vmatpush1.bf16.msra.mxu0 %v1471
          %1490 = vmatprep.subr.bf16.mxu0 0
          %1491 = vmatpush1.bf16.msra.mxu0 %v1472
          %1492 = vmatprep.subr.bf16.mxu0 0
          %1493 = vmatpush1.bf16.msra.mxu0 %v1473
          %1494 = vmatprep.subr.bf16.mxu0 0
          %1495 = vmatpush1.bf16.msra.mxu0 %v1474
          %1496 = vmatprep.subr.bf16.mxu0 0
          %1497 = vmatpush1.bf16.msra.mxu0 %v1475
          %1498 = vmatprep.subr.bf16.mxu0 0
          %1499 = vmatpush1.bf16.msra.mxu0 %v1476
          %1500 = vmatprep.subr.bf16.mxu0 0
          %1501 = vmatpush1.bf16.msra.mxu0 %v1477
          %1502 = vmatprep.subr.bf16.mxu0 0
          %1503 = vmatpush1.bf16.msra.mxu0 0
          %1504 = vmatprep.subr.bf16.mxu0 0
          %1505 = vmatpush1.bf16.msra.mxu0 0
          %1506 = vmatprep.subr.bf16.mxu0 0
          %1507 = vmatpush1.bf16.msra.mxu0 0
          %1508 = vmatprep.subr.bf16.mxu0 0
          %1509 = vmatpush1.bf16.msra.mxu0 0
          %1510 = vmatprep.subr.bf16.mxu0 0
          %1511 = vmatpush1.bf16.msra.mxu0 0
          %1512 = vmatprep.subr.bf16.mxu0 0
          %1513 = vmatpush1.bf16.msra.mxu0 0
          %1514 = vmatprep.subr.bf16.mxu0 0
          %1515 = vmatpush1.bf16.msra.mxu0 0
          %1516 = vmatprep.subr.bf16.mxu0 0
          %1517 = vmatpush1.bf16.msra.mxu0 0
          %1518 = vmatprep.mubr.bf16.mxu0 0
          %1519 = vmatmul.mubr.bf16.gmra.mrb[0].mxu0 %v1399
          %v1520 = vpop.f32.mrb[0].mxu0
          %v1521 = vadd.f32 %v1436, %v1520
          %v1522 = vpop.f32.mrb[0].mxu0
          %v1523 = vpop.f32.mrb[0].mxu0
          %v1524 = vadd.f32 %v1436, %v1523
          %v1525 = vpop.f32.mrb[0].mxu0
          %1526 = vmatprep.mubr.bf16.mxu0 0
          %1527 = vmatmul.mubr.bf16.gmra.mrb[0].mxu0 %v1400
          %v1528 = vpop.f32.mrb[0].mxu0
          %v1529 = vadd.f32 %v1436, %v1528
          %v1530 = vpop.f32.mrb[0].mxu0
          %v1531 = vpop.f32.mrb[0].mxu0
          %v1532 = vadd.f32 %v1436, %v1531
          %v1533 = vpop.f32.mrb[0].mxu0
          %1534 = vmatprep.mubr.bf16.mxu0 0
          %1535 = vmatmul.mubr.bf16.gmra.mrb[0].mxu0 %v1401
          %v1536 = vpop.f32.mrb[0].mxu0
          %v1537 = vadd.f32 %v1436, %v1536
          %v1538 = vpop.f32.mrb[0].mxu0
          %v1539 = vpop.f32.mrb[0].mxu0
          %v1540 = vadd.f32 %v1436, %v1539
          %v1541 = vpop.f32.mrb[0].mxu0
          %1542 = vmatprep.mubr.bf16.mxu0 0
          %1543 = vmatmul.mubr.bf16.gmra.mrb[0].mxu0 %v1402
          %v1544 = vpop.f32.mrb[0].mxu0
          %v1545 = vadd.f32 %v1436, %v1544
          %v1546 = vpop.f32.mrb[0].mxu0
          %v1547 = vpop.f32.mrb[0].mxu0
          %v1548 = vadd.f32 %v1436, %v1547
          %v1549 = vpop.f32.mrb[0].mxu0
          %1550 = vmatprep.mubr.bf16.mxu0 0
          %1551 = vmatmul.mubr.bf16.gmra.mrb[0].mxu0 %v1403
          %v1552 = vpop.f32.mrb[0].mxu0
          %v1553 = vadd.f32 %v1436, %v1552
          %v1554 = vpop.f32.mrb[0].mxu0
          %v1555 = vpop.f32.mrb[0].mxu0
          %v1556 = vadd.f32 %v1436, %v1555
          %v1557 = vpop.f32.mrb[0].mxu0
          %1558 = vmatprep.mubr.bf16.mxu0 0
          %1559 = vmatmul.mubr.bf16.gmra.mrb[0].mxu0 %v1404
          %v1560 = vpop.f32.mrb[0].mxu0
          %v1561 = vadd.f32 %v1436, %v1560
          %v1562 = vpop.f32.mrb[0].mxu0
          %v1563 = vpop.f32.mrb[0].mxu0
          %v1564 = vadd.f32 %v1436, %v1563
          %v1565 = vpop.f32.mrb[0].mxu0
          %1566 = vmatprep.mubr.bf16.mxu0 0
          %1567 = vmatmul.mubr.bf16.gmra.mrb[0].mxu0 %v1405
          %v1568 = vpop.f32.mrb[0].mxu0
          %v1569 = vadd.f32 %v1436, %v1568
          %v1570 = vpop.f32.mrb[0].mxu0
          %v1571 = vpop.f32.mrb[0].mxu0
          %v1572 = vadd.f32 %v1436, %v1571
          %v1573 = vpop.f32.mrb[0].mxu0
          %1574 = vmatprep.mubr.bf16.mxu0 0
          %1575 = vmatmul.mubr.bf16.gmra.mrb[0].mxu0 %v1406
          %v1576 = vpop.f32.mrb[0].mxu0
          %v1577 = vadd.f32 %v1436, %v1576
          %v1578 = vpop.f32.mrb[0].mxu0
          %v1579 = vpop.f32.mrb[0].mxu0
          %v1580 = vadd.f32 %v1436, %v1579
          %v1581 = vpop.f32.mrb[0].mxu0
          %1582 = vmatprep.mubr.bf16.mxu0 0
          %1583 = vmatmul.mubr.bf16.gmra.mrb[0].mxu0 %v1407
          %v1584 = vpop.f32.mrb[0].mxu0
          %v1585 = vadd.f32 %v1436, %v1584
          %v1586 = vpop.f32.mrb[0].mxu0
          %v1587 = vpop.f32.mrb[0].mxu0
          %v1588 = vadd.f32 %v1436, %v1587
          %v1589 = vpop.f32.mrb[0].mxu0
          %1590 = vmatprep.mubr.bf16.mxu0 0
          %1591 = vmatmul.mubr.bf16.gmra.mrb[0].mxu0 %v1408
          %v1592 = vpop.f32.mrb[0].mxu0
          %v1593 = vadd.f32 %v1436, %v1592
          %v1594 = vpop.f32.mrb[0].mxu0
          %v1595 = vpop.f32.mrb[0].mxu0
          %v1596 = vadd.f32 %v1436, %v1595
          %v1597 = vpop.f32.mrb[0].mxu0
          %1598 = vmatprep.mubr.bf16.mxu0 0
          %1599 = vmatmul.mubr.bf16.gmra.mrb[0].mxu0 %v1409
          %v1600 = vpop.f32.mrb[0].mxu0
          %v1601 = vadd.f32 %v1436, %v1600
          %v1602 = vpop.f32.mrb[0].mxu0
          %v1603 = vpop.f32.mrb[0].mxu0
          %v1604 = vadd.f32 %v1436, %v1603
          %v1605 = vpop.f32.mrb[0].mxu0
          %1606 = vmatprep.mubr.bf16.mxu0 0
          %1607 = vmatmul.mubr.bf16.gmra.mrb[0].mxu0 %v1410
          %v1608 = vpop.f32.mrb[0].mxu0
          %v1609 = vadd.f32 %v1436, %v1608
          %v1610 = vpop.f32.mrb[0].mxu0
          %v1611 = vpop.f32.mrb[0].mxu0
          %v1612 = vadd.f32 %v1436, %v1611
          %v1613 = vpop.f32.mrb[0].mxu0
          %1614 = vmatprep.mubr.bf16.mxu0 0
          %1615 = vmatmul.mubr.bf16.gmra.mrb[0].mxu0 %v1411
          %v1616 = vpop.f32.mrb[0].mxu0
          %v1617 = vadd.f32 %v1436, %v1616
          %v1618 = vpop.f32.mrb[0].mxu0
          %v1619 = vpop.f32.mrb[0].mxu0
          %v1620 = vadd.f32 %v1436, %v1619
          %v1621 = vpop.f32.mrb[0].mxu0
          %1622 = vmatprep.mubr.bf16.mxu0 0
          %1623 = vmatmul.mubr.bf16.gmra.mrb[0].mxu0 %v1412
          %v1624 = vpop.f32.mrb[0].mxu0
          %v1625 = vadd.f32 %v1436, %v1624
          %v1626 = vpop.f32.mrb[0].mxu0
          %v1627 = vpop.f32.mrb[0].mxu0
          %v1628 = vadd.f32 %v1436, %v1627
          %v1629 = vpop.f32.mrb[0].mxu0
          %1630 = vmatprep.mubr.bf16.mxu0 0
          %1631 = vmatmul.mubr.bf16.gmra.mrb[0].mxu0 %v1413
          %v1632 = vpop.f32.mrb[0].mxu0
          %v1633 = vadd.f32 %v1436, %v1632
          %v1634 = vpop.f32.mrb[0].mxu0
          %v1635 = vpop.f32.mrb[0].mxu0
          %v1636 = vadd.f32 %v1436, %v1635
          %v1637 = vpop.f32.mrb[0].mxu0
          %1638 = vmatprep.mubr.bf16.mxu0 0
          %1639 = vmatmul.mubr.bf16.gmra.mrb[0].mxu0 %v1414
          %v1640 = vpop.f32.mrb[0].mxu0
          %v1641 = vadd.f32 %v1436, %v1640
          %v1642 = vpop.f32.mrb[0].mxu0
          %v1643 = vpop.f32.mrb[0].mxu0
          %v1644 = vadd.f32 %v1436, %v1643
          %v1645 = vpop.f32.mrb[0].mxu0
          %1646 = vdwg.mxu0
          %v1647 = vmax.f32 %v1521, 0.0
          %v1648 = vmax.f32 %v1524, 0.0
          %v1649 = vmax.f32 %v1529, 0.0
          %v1650 = vmax.f32 %v1532, 0.0
          %v1651 = vmax.f32 %v1537, 0.0
          %v1652 = vmax.f32 %v1540, 0.0
          %v1653 = vmax.f32 %v1545, 0.0
          %v1654 = vmax.f32 %v1548, 0.0
          %v1655 = vmax.f32 %v1553, 0.0
          %v1656 = vmax.f32 %v1556, 0.0
          %v1657 = vmax.f32 %v1561, 0.0
          %v1658 = vmax.f32 %v1564, 0.0
          %v1659 = vmax.f32 %v1569, 0.0
          %v1660 = vmax.f32 %v1572, 0.0
          %v1661 = vmax.f32 %v1577, 0.0
          %v1662 = vmax.f32 %v1580, 0.0
          %v1663 = vmax.f32 %v1585, 0.0
          %v1664 = vmax.f32 %v1588, 0.0
          %v1665 = vmax.f32 %v1593, 0.0
          %v1666 = vmax.f32 %v1596, 0.0
          %v1667 = vmax.f32 %v1601, 0.0
          %v1668 = vmax.f32 %v1604, 0.0
          %v1669 = vmax.f32 %v1609, 0.0
          %v1670 = vmax.f32 %v1612, 0.0
          %v1671 = vmax.f32 %v1617, 0.0
          %v1672 = vmax.f32 %v1620, 0.0
          %v1673 = vmax.f32 %v1625, 0.0
          %v1674 = vmax.f32 %v1628, 0.0
          %v1675 = vmax.f32 %v1633, 0.0
          %v1676 = vmax.f32 %v1636, 0.0
          %v1677 = vmax.f32 %v1641, 0.0
          %v1678 = vmax.f32 %v1644, 0.0
          %v1679 = vpack.c.bf16 %v1648, %v1647
          %v1680 = vpack.c.bf16 %v1650, %v1649
          %v1681 = vpack.c.bf16 %v1652, %v1651
          %v1682 = vpack.c.bf16 %v1654, %v1653
          %v1683 = vpack.c.bf16 %v1656, %v1655
          %v1684 = vpack.c.bf16 %v1658, %v1657
          %v1685 = vpack.c.bf16 %v1660, %v1659
          %v1686 = vpack.c.bf16 %v1662, %v1661
          %v1687 = vpack.c.bf16 %v1664, %v1663
          %v1688 = vpack.c.bf16 %v1666, %v1665
          %v1689 = vpack.c.bf16 %v1668, %v1667
          %v1690 = vpack.c.bf16 %v1670, %v1669
          %v1691 = vpack.c.bf16 %v1672, %v1671
          %v1692 = vpack.c.bf16 %v1674, %v1673
          %v1693 = vpack.c.bf16 %v1676, %v1675
          %v1694 = vpack.c.bf16 %v1678, %v1677
          %v1695 = vld [vmem:[%s8] sm:$0xf]
          %v1696 = vld [vmem:[%s8 + $0x4] sm:$0xf]
          %v1697 = vld [vmem:[%s8 + $0x8] sm:$0xf]
          %v1698 = vld [vmem:[%s8 + $0xc] sm:$0xf]
          %v1699 = vld [vmem:[%s8 + $0x10] sm:$0xf]
          %v1700 = vld [vmem:[%s8 + $0x14] sm:$0xf]
          %v1701 = vld [vmem:[%s8 + $0x18] sm:$0xf]
          %v1702 = vld [vmem:[%s8 + $0x1c] sm:$0xf]
          %v1703 = vld [vmem:[%s8 + $0x20] sm:$0xf]
          %v1704 = vld [vmem:[%s8 + $0x24] sm:$0xf]
          %v1705 = vld [vmem:[%s8 + $0x28] sm:$0xf]
          %v1706 = vld [vmem:[%s8 + $0x2c] sm:$0xf]
          %v1707 = vld [vmem:[%s8 + $0x30] sm:$0xf]
          %v1708 = vld [vmem:[%s8 + $0x34] sm:$0xf]
          %v1709 = vld [vmem:[%s8 + $0x38] sm:$0xf]
          %v1710 = vld [vmem:[%s8 + $0x3c] sm:$0xf]
          %v1711 = vld [vmem:[%s9] sm:$0x1]
          %v1713 = vlaneseq
          %v1714 = vshrl.u32 %v1713, 7
          %v1715 = vsub.s32 0, %v1714
          %v1716 = vrot.slane %v1711, %v1715
          %v1734 = vunpack.c.l.b16 %v1695
          %v1735 = vunpack.c.l.b16 %v1696
          %v1736 = vunpack.c.l.b16 %v1697
          %v1737 = vunpack.c.l.b16 %v1698
          %v1738 = vunpack.c.l.b16 %v1699
          %v1739 = vunpack.c.l.b16 %v1700
          %v1740 = vunpack.c.l.b16 %v1701
          %v1741 = vunpack.c.l.b16 %v1702
          %v1742 = vunpack.c.l.b16 %v1703
          %v1743 = vunpack.c.l.b16 %v1704
          %v1744 = vunpack.c.l.b16 %v1705
          %v1745 = vunpack.c.l.b16 %v1706
          %v1746 = vunpack.c.l.b16 %v1707
          %v1747 = vunpack.c.l.b16 %v1708
          %v1748 = vunpack.c.l.b16 %v1709
          %v1749 = vunpack.c.l.b16 %v1710
          %v1750 = vpack.c.b16 %v1735, %v1734
          %v1751 = vpack.c.b16 %v1737, %v1736
          %v1752 = vpack.c.b16 %v1739, %v1738
          %v1753 = vpack.c.b16 %v1741, %v1740
          %v1754 = vpack.c.b16 %v1743, %v1742
          %v1755 = vpack.c.b16 %v1745, %v1744
          %v1756 = vpack.c.b16 %v1747, %v1746
          %v1757 = vpack.c.b16 %v1749, %v1748
          %1766 = vmatprep.subr.bf16.mxu0 0
          %1767 = vmatpush1.bf16.msra.mxu0 %v1750
          %1768 = vmatprep.subr.bf16.mxu0 0
          %1769 = vmatpush1.bf16.msra.mxu0 %v1751
          %1770 = vmatprep.subr.bf16.mxu0 0
          %1771 = vmatpush1.bf16.msra.mxu0 %v1752
          %1772 = vmatprep.subr.bf16.mxu0 0
          %1773 = vmatpush1.bf16.msra.mxu0 %v1753
          %1774 = vmatprep.subr.bf16.mxu0 0
          %1775 = vmatpush1.bf16.msra.mxu0 %v1754
          %1776 = vmatprep.subr.bf16.mxu0 0
          %1777 = vmatpush1.bf16.msra.mxu0 %v1755
          %1778 = vmatprep.subr.bf16.mxu0 0
          %1779 = vmatpush1.bf16.msra.mxu0 %v1756
          %1780 = vmatprep.subr.bf16.mxu0 0
          %1781 = vmatpush1.bf16.msra.mxu0 %v1757
          %1782 = vmatprep.subr.bf16.mxu0 0
          %1783 = vmatpush1.bf16.msra.mxu0 0
          %1784 = vmatprep.subr.bf16.mxu0 0
          %1785 = vmatpush1.bf16.msra.mxu0 0
          %1786 = vmatprep.subr.bf16.mxu0 0
          %1787 = vmatpush1.bf16.msra.mxu0 0
          %1788 = vmatprep.subr.bf16.mxu0 0
          %1789 = vmatpush1.bf16.msra.mxu0 0
          %1790 = vmatprep.subr.bf16.mxu0 0
          %1791 = vmatpush1.bf16.msra.mxu0 0
          %1792 = vmatprep.subr.bf16.mxu0 0
          %1793 = vmatpush1.bf16.msra.mxu0 0
          %1794 = vmatprep.subr.bf16.mxu0 0
          %1795 = vmatpush1.bf16.msra.mxu0 0
          %1796 = vmatprep.subr.bf16.mxu0 0
          %1797 = vmatpush1.bf16.msra.mxu0 0
          %1798 = vmatprep.mubr.bf16.mxu0 0
          %1799 = vmatmul.mubr.bf16.gmra.mrb[0].mxu0 %v1679
          %v1800 = vpop.f32.mrb[0].mxu0
          %v1801 = vadd.f32 %v1716, %v1800
          %v1802 = vpop.f32.mrb[0].mxu0
          %v1803 = vpop.f32.mrb[0].mxu0
          %v1804 = vadd.f32 %v1716, %v1803
          %v1805 = vpop.f32.mrb[0].mxu0
          %1806 = vmatprep.mubr.bf16.mxu0 0
          %1807 = vmatmul.mubr.bf16.gmra.mrb[0].mxu0 %v1680
          %v1808 = vpop.f32.mrb[0].mxu0
          %v1809 = vadd.f32 %v1716, %v1808
          %v1810 = vpop.f32.mrb[0].mxu0
          %v1811 = vpop.f32.mrb[0].mxu0
          %v1812 = vadd.f32 %v1716, %v1811
          %v1813 = vpop.f32.mrb[0].mxu0
          %1814 = vmatprep.mubr.bf16.mxu0 0
          %1815 = vmatmul.mubr.bf16.gmra.mrb[0].mxu0 %v1681
          %v1816 = vpop.f32.mrb[0].mxu0
          %v1817 = vadd.f32 %v1716, %v1816
          %v1818 = vpop.f32.mrb[0].mxu0
          %v1819 = vpop.f32.mrb[0].mxu0
          %v1820 = vadd.f32 %v1716, %v1819
          %v1821 = vpop.f32.mrb[0].mxu0
          %1822 = vmatprep.mubr.bf16.mxu0 0
          %1823 = vmatmul.mubr.bf16.gmra.mrb[0].mxu0 %v1682
          %v1824 = vpop.f32.mrb[0].mxu0
          %v1825 = vadd.f32 %v1716, %v1824
          %v1826 = vpop.f32.mrb[0].mxu0
          %v1827 = vpop.f32.mrb[0].mxu0
          %v1828 = vadd.f32 %v1716, %v1827
          %v1829 = vpop.f32.mrb[0].mxu0
          %1830 = vmatprep.mubr.bf16.mxu0 0
          %1831 = vmatmul.mubr.bf16.gmra.mrb[0].mxu0 %v1683
          %v1832 = vpop.f32.mrb[0].mxu0
          %v1833 = vadd.f32 %v1716, %v1832
          %v1834 = vpop.f32.mrb[0].mxu0
          %v1835 = vpop.f32.mrb[0].mxu0
          %v1836 = vadd.f32 %v1716, %v1835
          %v1837 = vpop.f32.mrb[0].mxu0
          %1838 = vmatprep.mubr.bf16.mxu0 0
          %1839 = vmatmul.mubr.bf16.gmra.mrb[0].mxu0 %v1684
          %v1840 = vpop.f32.mrb[0].mxu0
          %v1841 = vadd.f32 %v1716, %v1840
          %v1842 = vpop.f32.mrb[0].mxu0
          %v1843 = vpop.f32.mrb[0].mxu0
          %v1844 = vadd.f32 %v1716, %v1843
          %v1845 = vpop.f32.mrb[0].mxu0
          %1846 = vmatprep.mubr.bf16.mxu0 0
          %1847 = vmatmul.mubr.bf16.gmra.mrb[0].mxu0 %v1685
          %v1848 = vpop.f32.mrb[0].mxu0
          %v1849 = vadd.f32 %v1716, %v1848
          %v1850 = vpop.f32.mrb[0].mxu0
          %v1851 = vpop.f32.mrb[0].mxu0
          %v1852 = vadd.f32 %v1716, %v1851
          %v1853 = vpop.f32.mrb[0].mxu0
          %1854 = vmatprep.mubr.bf16.mxu0 0
          %1855 = vmatmul.mubr.bf16.gmra.mrb[0].mxu0 %v1686
          %v1856 = vpop.f32.mrb[0].mxu0
          %v1857 = vadd.f32 %v1716, %v1856
          %v1858 = vpop.f32.mrb[0].mxu0
          %v1859 = vpop.f32.mrb[0].mxu0
          %v1860 = vadd.f32 %v1716, %v1859
          %v1861 = vpop.f32.mrb[0].mxu0
          %1862 = vmatprep.mubr.bf16.mxu0 0
          %1863 = vmatmul.mubr.bf16.gmra.mrb[0].mxu0 %v1687
          %v1864 = vpop.f32.mrb[0].mxu0
          %v1865 = vadd.f32 %v1716, %v1864
          %v1866 = vpop.f32.mrb[0].mxu0
          %v1867 = vpop.f32.mrb[0].mxu0
          %v1868 = vadd.f32 %v1716, %v1867
          %v1869 = vpop.f32.mrb[0].mxu0
          %1870 = vmatprep.mubr.bf16.mxu0 0
          %1871 = vmatmul.mubr.bf16.gmra.mrb[0].mxu0 %v1688
          %v1872 = vpop.f32.mrb[0].mxu0
          %v1873 = vadd.f32 %v1716, %v1872
          %v1874 = vpop.f32.mrb[0].mxu0
          %v1875 = vpop.f32.mrb[0].mxu0
          %v1876 = vadd.f32 %v1716, %v1875
          %v1877 = vpop.f32.mrb[0].mxu0
          %1878 = vmatprep.mubr.bf16.mxu0 0
          %1879 = vmatmul.mubr.bf16.gmra.mrb[0].mxu0 %v1689
          %v1880 = vpop.f32.mrb[0].mxu0
          %v1881 = vadd.f32 %v1716, %v1880
          %v1882 = vpop.f32.mrb[0].mxu0
          %v1883 = vpop.f32.mrb[0].mxu0
          %v1884 = vadd.f32 %v1716, %v1883
          %v1885 = vpop.f32.mrb[0].mxu0
          %1886 = vmatprep.mubr.bf16.mxu0 0
          %1887 = vmatmul.mubr.bf16.gmra.mrb[0].mxu0 %v1690
          %v1888 = vpop.f32.mrb[0].mxu0
          %v1889 = vadd.f32 %v1716, %v1888
          %v1890 = vpop.f32.mrb[0].mxu0
          %v1891 = vpop.f32.mrb[0].mxu0
          %v1892 = vadd.f32 %v1716, %v1891
          %v1893 = vpop.f32.mrb[0].mxu0
          %1894 = vmatprep.mubr.bf16.mxu0 0
          %1895 = vmatmul.mubr.bf16.gmra.mrb[0].mxu0 %v1691
          %v1896 = vpop.f32.mrb[0].mxu0
          %v1897 = vadd.f32 %v1716, %v1896
          %v1898 = vpop.f32.mrb[0].mxu0
          %v1899 = vpop.f32.mrb[0].mxu0
          %v1900 = vadd.f32 %v1716, %v1899
          %v1901 = vpop.f32.mrb[0].mxu0
          %1902 = vmatprep.mubr.bf16.mxu0 0
          %1903 = vmatmul.mubr.bf16.gmra.mrb[0].mxu0 %v1692
          %v1904 = vpop.f32.mrb[0].mxu0
          %v1905 = vadd.f32 %v1716, %v1904
          %v1906 = vpop.f32.mrb[0].mxu0
          %v1907 = vpop.f32.mrb[0].mxu0
          %v1908 = vadd.f32 %v1716, %v1907
          %v1909 = vpop.f32.mrb[0].mxu0
          %1910 = vmatprep.mubr.bf16.mxu0 0
          %1911 = vmatmul.mubr.bf16.gmra.mrb[0].mxu0 %v1693
          %v1912 = vpop.f32.mrb[0].mxu0
          %v1913 = vadd.f32 %v1716, %v1912
          %v1914 = vpop.f32.mrb[0].mxu0
          %v1915 = vpop.f32.mrb[0].mxu0
          %v1916 = vadd.f32 %v1716, %v1915
          %v1917 = vpop.f32.mrb[0].mxu0
          %1918 = vmatprep.mubr.bf16.mxu0 0
          %1919 = vmatmul.mubr.bf16.gmra.mrb[0].mxu0 %v1694
          %v1920 = vpop.f32.mrb[0].mxu0
          %v1921 = vadd.f32 %v1716, %v1920
          %v1922 = vpop.f32.mrb[0].mxu0
          %v1923 = vpop.f32.mrb[0].mxu0
          %v1924 = vadd.f32 %v1716, %v1923
          %v1925 = vpop.f32.mrb[0].mxu0
          %1926 = vdwg.mxu0
          %v1927 = vmax.f32 %v1801, 0.0
          %v1928 = vmax.f32 %v1804, 0.0
          %v1929 = vmax.f32 %v1809, 0.0
          %v1930 = vmax.f32 %v1812, 0.0
          %v1931 = vmax.f32 %v1817, 0.0
          %v1932 = vmax.f32 %v1820, 0.0
          %v1933 = vmax.f32 %v1825, 0.0
          %v1934 = vmax.f32 %v1828, 0.0
          %v1935 = vmax.f32 %v1833, 0.0
          %v1936 = vmax.f32 %v1836, 0.0
          %v1937 = vmax.f32 %v1841, 0.0
          %v1938 = vmax.f32 %v1844, 0.0
          %v1939 = vmax.f32 %v1849, 0.0
          %v1940 = vmax.f32 %v1852, 0.0
          %v1941 = vmax.f32 %v1857, 0.0
          %v1942 = vmax.f32 %v1860, 0.0
          %v1943 = vmax.f32 %v1865, 0.0
          %v1944 = vmax.f32 %v1868, 0.0
          %v1945 = vmax.f32 %v1873, 0.0
          %v1946 = vmax.f32 %v1876, 0.0
          %v1947 = vmax.f32 %v1881, 0.0
          %v1948 = vmax.f32 %v1884, 0.0
          %v1949 = vmax.f32 %v1889, 0.0
          %v1950 = vmax.f32 %v1892, 0.0
          %v1951 = vmax.f32 %v1897, 0.0
          %v1952 = vmax.f32 %v1900, 0.0
          %v1953 = vmax.f32 %v1905, 0.0
          %v1954 = vmax.f32 %v1908, 0.0
          %v1955 = vmax.f32 %v1913, 0.0
          %v1956 = vmax.f32 %v1916, 0.0
          %v1957 = vmax.f32 %v1921, 0.0
          %v1958 = vmax.f32 %v1924, 0.0
          %v1959 = vpack.c.bf16 %v1928, %v1927
          %v1960 = vpack.c.bf16 %v1930, %v1929
          %v1961 = vpack.c.bf16 %v1932, %v1931
          %v1962 = vpack.c.bf16 %v1934, %v1933
          %v1963 = vpack.c.bf16 %v1936, %v1935
          %v1964 = vpack.c.bf16 %v1938, %v1937
          %v1965 = vpack.c.bf16 %v1940, %v1939
          %v1966 = vpack.c.bf16 %v1942, %v1941
          %v1967 = vpack.c.bf16 %v1944, %v1943
          %v1968 = vpack.c.bf16 %v1946, %v1945
          %v1969 = vpack.c.bf16 %v1948, %v1947
          %v1970 = vpack.c.bf16 %v1950, %v1949
          %v1971 = vpack.c.bf16 %v1952, %v1951
          %v1972 = vpack.c.bf16 %v1954, %v1953
          %v1973 = vpack.c.bf16 %v1956, %v1955
          %v1974 = vpack.c.bf16 %v1958, %v1957
          %v1991 = vunpack.c.l.b16 %v1959
          %v1992 = vunpack.c.h.b16 %v1959
          %v1993 = vunpack.c.l.b16 %v1960
          %v1994 = vunpack.c.h.b16 %v1960
          %v1995 = vunpack.c.l.b16 %v1961
          %v1996 = vunpack.c.h.b16 %v1961
          %v1997 = vunpack.c.l.b16 %v1962
          %v1998 = vunpack.c.h.b16 %v1962
          %v1999 = vunpack.c.l.b16 %v1963
          %v2000 = vunpack.c.h.b16 %v1963
          %v2001 = vunpack.c.l.b16 %v1964
          %v2002 = vunpack.c.h.b16 %v1964
          %v2003 = vunpack.c.l.b16 %v1965
          %v2004 = vunpack.c.h.b16 %v1965
          %v2005 = vunpack.c.l.b16 %v1966
          %v2006 = vunpack.c.h.b16 %v1966
          %v2007 = vunpack.c.l.b16 %v1967
          %v2008 = vunpack.c.h.b16 %v1967
          %v2009 = vunpack.c.l.b16 %v1968
          %v2010 = vunpack.c.h.b16 %v1968
          %v2011 = vunpack.c.l.b16 %v1969
          %v2012 = vunpack.c.h.b16 %v1969
          %v2013 = vunpack.c.l.b16 %v1970
          %v2014 = vunpack.c.h.b16 %v1970
          %v2015 = vunpack.c.l.b16 %v1971
          %v2016 = vunpack.c.h.b16 %v1971
          %v2017 = vunpack.c.l.b16 %v1972
          %v2018 = vunpack.c.h.b16 %v1972
          %v2019 = vunpack.c.l.b16 %v1973
          %v2020 = vunpack.c.h.b16 %v1973
          %v2021 = vunpack.c.l.b16 %v1974
          %v2022 = vunpack.c.h.b16 %v1974
          %v2023 = vpack.c.b16 %v1991, %v1991
          %v2024 = vpack.c.b16 %v1992, %v1992
          %v2025 = vpack.c.b16 %v1993, %v1993
          %v2026 = vpack.c.b16 %v1994, %v1994
          %v2027 = vpack.c.b16 %v1995, %v1995
          %v2028 = vpack.c.b16 %v1996, %v1996
          %v2029 = vpack.c.b16 %v1997, %v1997
          %v2030 = vpack.c.b16 %v1998, %v1998
          %v2031 = vpack.c.b16 %v1999, %v1999
          %v2032 = vpack.c.b16 %v2000, %v2000
          %v2033 = vpack.c.b16 %v2001, %v2001
          %v2034 = vpack.c.b16 %v2002, %v2002
          %v2035 = vpack.c.b16 %v2003, %v2003
          %v2036 = vpack.c.b16 %v2004, %v2004
          %v2037 = vpack.c.b16 %v2005, %v2005
          %v2038 = vpack.c.b16 %v2006, %v2006
          %v2039 = vpack.c.b16 %v2007, %v2007
          %v2040 = vpack.c.b16 %v2008, %v2008
          %v2041 = vpack.c.b16 %v2009, %v2009
          %v2042 = vpack.c.b16 %v2010, %v2010
          %v2043 = vpack.c.b16 %v2011, %v2011
          %v2044 = vpack.c.b16 %v2012, %v2012
          %v2045 = vpack.c.b16 %v2013, %v2013
          %v2046 = vpack.c.b16 %v2014, %v2014
          %v2047 = vpack.c.b16 %v2015, %v2015
          %v2048 = vpack.c.b16 %v2016, %v2016
          %v2049 = vpack.c.b16 %v2017, %v2017
          %v2050 = vpack.c.b16 %v2018, %v2018
          %v2051 = vpack.c.b16 %v2019, %v2019
          %v2052 = vpack.c.b16 %v2020, %v2020
          %v2053 = vpack.c.b16 %v2021, %v2021
          %v2054 = vpack.c.b16 %v2022, %v2022
          %2087 = vst [vmem:[%s607] sm:$0xf] %v2023
          %2088 = vst [vmem:[%s607 + $0x4] sm:$0xf] %v2024
          %2089 = vst [vmem:[%s607 + $0x8] sm:$0xf] %v2025
          %2090 = vst [vmem:[%s607 + $0xc] sm:$0xf] %v2026
          %2091 = vst [vmem:[%s607 + $0x10] sm:$0xf] %v2027
          %2092 = vst [vmem:[%s607 + $0x14] sm:$0xf] %v2028
          %2093 = vst [vmem:[%s607 + $0x18] sm:$0xf] %v2029
          %2094 = vst [vmem:[%s607 + $0x1c] sm:$0xf] %v2030
          %2095 = vst [vmem:[%s607 + $0x20] sm:$0xf] %v2031
          %2096 = vst [vmem:[%s607 + $0x24] sm:$0xf] %v2032
          %2097 = vst [vmem:[%s607 + $0x28] sm:$0xf] %v2033
          %2098 = vst [vmem:[%s607 + $0x2c] sm:$0xf] %v2034
          %2099 = vst [vmem:[%s607 + $0x30] sm:$0xf] %v2035
          %2100 = vst [vmem:[%s607 + $0x34] sm:$0xf] %v2036
          %2101 = vst [vmem:[%s607 + $0x38] sm:$0xf] %v2037
          %2102 = vst [vmem:[%s607 + $0x3c] sm:$0xf] %v2038
          %2103 = vst [vmem:[%s607 + $0x40] sm:$0xf] %v2039
          %2104 = vst [vmem:[%s607 + $0x44] sm:$0xf] %v2040
          %2105 = vst [vmem:[%s607 + $0x48] sm:$0xf] %v2041
          %2106 = vst [vmem:[%s607 + $0x4c] sm:$0xf] %v2042
          %2107 = vst [vmem:[%s607 + $0x50] sm:$0xf] %v2043
          %2108 = vst [vmem:[%s607 + $0x54] sm:$0xf] %v2044
          %2109 = vst [vmem:[%s607 + $0x58] sm:$0xf] %v2045
          %2110 = vst [vmem:[%s607 + $0x5c] sm:$0xf] %v2046
          %2111 = vst [vmem:[%s607 + $0x60] sm:$0xf] %v2047
          %2112 = vst [vmem:[%s607 + $0x64] sm:$0xf] %v2048
          %2113 = vst [vmem:[%s607 + $0x68] sm:$0xf] %v2049
          %2114 = vst [vmem:[%s607 + $0x6c] sm:$0xf] %v2050
          %2115 = vst [vmem:[%s607 + $0x70] sm:$0xf] %v2051
          %2116 = vst [vmem:[%s607 + $0x74] sm:$0xf] %v2052
          %2117 = vst [vmem:[%s607 + $0x78] sm:$0xf] %v2053
          %2118 = vst [vmem:[%s607 + $0x7c] sm:$0xf] %v2054
          %v2119 = vlaneseq
          %v2120 = vshrl.u32 %v2119, 7
          %v2121 = vadd.s32 %v2120, 8
          %v2122 = vadd.s32 %v2120, 16
          %v2123 = vadd.s32 %v2120, 24
          %v2124 = vadd.s32 %v2120, 32
          %v2125 = vadd.s32 %v2120, 40
          %v2126 = vadd.s32 %v2120, 48
          %v2127 = vadd.s32 %v2120, 56
          %v2128 = vadd.s32 %v2120, 64
          %v2129 = vadd.s32 %v2120, 72
          %v2130 = vadd.s32 %v2120, 80
          %v2131 = vadd.s32 %v2120, 88
          %v2132 = vadd.s32 %v2120, 96
          %v2133 = vadd.s32 %v2120, 104
          %v2134 = vadd.s32 %v2120, 112
          %v2135 = vadd.s32 %v2120, 120
          %v2136 = vadd.s32 %v2120, 128
          %v2137 = vadd.s32 %v2120, 136
          %v2138 = vadd.s32 %v2120, 144
          %v2139 = vadd.s32 %v2120, 152
          %v2140 = vadd.s32 %v2120, 160
          %v2141 = vadd.s32 %v2120, 168
          %v2142 = vadd.s32 %v2120, 176
          %v2143 = vadd.s32 %v2120, 184
          %v2144 = vadd.s32 %v2120, 192
          %v2145 = vadd.s32 %v2120, 200
          %v2146 = vadd.s32 %v2120, 208
          %v2147 = vadd.s32 %v2120, 216
          %v2148 = vadd.s32 %v2120, 224
          %v2149 = vadd.s32 %v2120, 232
          %v2150 = vadd.s32 %v2120, 240
          %v2151 = vadd.s32 %v2120, 248
          %s2152 = smul.u32 %s38, 256
          %v2153 = vstv %s2152
          %v2154 = vadd.s32 %v2120, %v2153
          %v2155 = vadd.s32 %v2121, %v2153
          %v2156 = vadd.s32 %v2122, %v2153
          %v2157 = vadd.s32 %v2123, %v2153
          %v2158 = vadd.s32 %v2124, %v2153
          %v2159 = vadd.s32 %v2125, %v2153
          %v2160 = vadd.s32 %v2126, %v2153
          %v2161 = vadd.s32 %v2127, %v2153
          %v2162 = vadd.s32 %v2128, %v2153
          %v2163 = vadd.s32 %v2129, %v2153
          %v2164 = vadd.s32 %v2130, %v2153
          %v2165 = vadd.s32 %v2131, %v2153
          %v2166 = vadd.s32 %v2132, %v2153
          %v2167 = vadd.s32 %v2133, %v2153
          %v2168 = vadd.s32 %v2134, %v2153
          %v2169 = vadd.s32 %v2135, %v2153
          %v2170 = vadd.s32 %v2136, %v2153
          %v2171 = vadd.s32 %v2137, %v2153
          %v2172 = vadd.s32 %v2138, %v2153
          %v2173 = vadd.s32 %v2139, %v2153
          %v2174 = vadd.s32 %v2140, %v2153
          %v2175 = vadd.s32 %v2141, %v2153
          %v2176 = vadd.s32 %v2142, %v2153
          %v2177 = vadd.s32 %v2143, %v2153
          %v2178 = vadd.s32 %v2144, %v2153
          %v2179 = vadd.s32 %v2145, %v2153
          %v2180 = vadd.s32 %v2146, %v2153
          %v2181 = vadd.s32 %v2147, %v2153
          %v2182 = vadd.s32 %v2148, %v2153
          %v2183 = vadd.s32 %v2149, %v2153
          %v2184 = vadd.s32 %v2150, %v2153
          %v2185 = vadd.s32 %v2151, %v2153
          %vm2186 = vcmp.lt.s32.totalorder %v2154, 300
          %vm2187 = vcmp.lt.s32.totalorder %v2155, 300
          %vm2188 = vcmp.lt.s32.totalorder %v2156, 300
          %vm2189 = vcmp.lt.s32.totalorder %v2157, 300
          %vm2190 = vcmp.lt.s32.totalorder %v2158, 300
          %vm2191 = vcmp.lt.s32.totalorder %v2159, 300
          %vm2192 = vcmp.lt.s32.totalorder %v2160, 300
          %vm2193 = vcmp.lt.s32.totalorder %v2161, 300
          %vm2194 = vcmp.lt.s32.totalorder %v2162, 300
          %vm2195 = vcmp.lt.s32.totalorder %v2163, 300
          %vm2196 = vcmp.lt.s32.totalorder %v2164, 300
          %vm2197 = vcmp.lt.s32.totalorder %v2165, 300
          %vm2198 = vcmp.lt.s32.totalorder %v2166, 300
          %vm2199 = vcmp.lt.s32.totalorder %v2167, 300
          %vm2200 = vcmp.lt.s32.totalorder %v2168, 300
          %vm2201 = vcmp.lt.s32.totalorder %v2169, 300
          %vm2202 = vcmp.lt.s32.totalorder %v2170, 300
          %vm2203 = vcmp.lt.s32.totalorder %v2171, 300
          %vm2204 = vcmp.lt.s32.totalorder %v2172, 300
          %vm2205 = vcmp.lt.s32.totalorder %v2173, 300
          %vm2206 = vcmp.lt.s32.totalorder %v2174, 300
          %vm2207 = vcmp.lt.s32.totalorder %v2175, 300
          %vm2208 = vcmp.lt.s32.totalorder %v2176, 300
          %vm2209 = vcmp.lt.s32.totalorder %v2177, 300
          %vm2210 = vcmp.lt.s32.totalorder %v2178, 300
          %vm2211 = vcmp.lt.s32.totalorder %v2179, 300
          %vm2212 = vcmp.lt.s32.totalorder %v2180, 300
          %vm2213 = vcmp.lt.s32.totalorder %v2181, 300
          %vm2214 = vcmp.lt.s32.totalorder %v2182, 300
          %vm2215 = vcmp.lt.s32.totalorder %v2183, 300
          %vm2216 = vcmp.lt.s32.totalorder %v2184, 300
          %vm2217 = vcmp.lt.s32.totalorder %v2185, 300
          %v2218 = vsel %vm2186, 1, 0
          %v2219 = vsel %vm2187, 1, 0
          %v2220 = vsel %vm2188, 1, 0
          %v2221 = vsel %vm2189, 1, 0
          %v2222 = vsel %vm2190, 1, 0
          %v2223 = vsel %vm2191, 1, 0
          %v2224 = vsel %vm2192, 1, 0
          %v2225 = vsel %vm2193, 1, 0
          %v2226 = vsel %vm2194, 1, 0
          %v2227 = vsel %vm2195, 1, 0
          %v2228 = vsel %vm2196, 1, 0
          %v2229 = vsel %vm2197, 1, 0
          %v2230 = vsel %vm2198, 1, 0
          %v2231 = vsel %vm2199, 1, 0
          %v2232 = vsel %vm2200, 1, 0
          %v2233 = vsel %vm2201, 1, 0
          %v2234 = vsel %vm2202, 1, 0
          %v2235 = vsel %vm2203, 1, 0
          %v2236 = vsel %vm2204, 1, 0
          %v2237 = vsel %vm2205, 1, 0
          %v2238 = vsel %vm2206, 1, 0
          %v2239 = vsel %vm2207, 1, 0
          %v2240 = vsel %vm2208, 1, 0
          %v2241 = vsel %vm2209, 1, 0
          %v2242 = vsel %vm2210, 1, 0
          %v2243 = vsel %vm2211, 1, 0
          %v2244 = vsel %vm2212, 1, 0
          %v2245 = vsel %vm2213, 1, 0
          %v2246 = vsel %vm2214, 1, 0
          %v2247 = vsel %vm2215, 1, 0
          %v2248 = vsel %vm2216, 1, 0
          %v2249 = vsel %vm2217, 1, 0
          %vm2250 = vcmp.eq.s32.totalorder %v2218, 1
          %vm2251 = vcmp.eq.s32.totalorder %v2219, 1
          %vm2252 = vcmp.eq.s32.totalorder %v2220, 1
          %vm2253 = vcmp.eq.s32.totalorder %v2221, 1
          %vm2254 = vcmp.eq.s32.totalorder %v2222, 1
          %vm2255 = vcmp.eq.s32.totalorder %v2223, 1
          %vm2256 = vcmp.eq.s32.totalorder %v2224, 1
          %vm2257 = vcmp.eq.s32.totalorder %v2225, 1
          %vm2258 = vcmp.eq.s32.totalorder %v2226, 1
          %vm2259 = vcmp.eq.s32.totalorder %v2227, 1
          %vm2260 = vcmp.eq.s32.totalorder %v2228, 1
          %vm2261 = vcmp.eq.s32.totalorder %v2229, 1
          %vm2262 = vcmp.eq.s32.totalorder %v2230, 1
          %vm2263 = vcmp.eq.s32.totalorder %v2231, 1
          %vm2264 = vcmp.eq.s32.totalorder %v2232, 1
          %vm2265 = vcmp.eq.s32.totalorder %v2233, 1
          %vm2266 = vcmp.eq.s32.totalorder %v2234, 1
          %vm2267 = vcmp.eq.s32.totalorder %v2235, 1
          %vm2268 = vcmp.eq.s32.totalorder %v2236, 1
          %vm2269 = vcmp.eq.s32.totalorder %v2237, 1
          %vm2270 = vcmp.eq.s32.totalorder %v2238, 1
          %vm2271 = vcmp.eq.s32.totalorder %v2239, 1
          %vm2272 = vcmp.eq.s32.totalorder %v2240, 1
          %vm2273 = vcmp.eq.s32.totalorder %v2241, 1
          %vm2274 = vcmp.eq.s32.totalorder %v2242, 1
          %vm2275 = vcmp.eq.s32.totalorder %v2243, 1
          %vm2276 = vcmp.eq.s32.totalorder %v2244, 1
          %vm2277 = vcmp.eq.s32.totalorder %v2245, 1
          %vm2278 = vcmp.eq.s32.totalorder %v2246, 1
          %vm2279 = vcmp.eq.s32.totalorder %v2247, 1
          %vm2280 = vcmp.eq.s32.totalorder %v2248, 1
          %vm2281 = vcmp.eq.s32.totalorder %v2249, 1
          %v2282 = vsel %vm2250, %v1927, 0.0
          %v2283 = vsel %vm2251, %v1928, 0.0
          %v2284 = vsel %vm2252, %v1929, 0.0
          %v2285 = vsel %vm2253, %v1930, 0.0
          %v2286 = vsel %vm2254, %v1931, 0.0
          %v2287 = vsel %vm2255, %v1932, 0.0
          %v2288 = vsel %vm2256, %v1933, 0.0
          %v2289 = vsel %vm2257, %v1934, 0.0
          %v2290 = vsel %vm2258, %v1935, 0.0
          %v2291 = vsel %vm2259, %v1936, 0.0
          %v2292 = vsel %vm2260, %v1937, 0.0
          %v2293 = vsel %vm2261, %v1938, 0.0
          %v2294 = vsel %vm2262, %v1939, 0.0
          %v2295 = vsel %vm2263, %v1940, 0.0
          %v2296 = vsel %vm2264, %v1941, 0.0
          %v2297 = vsel %vm2265, %v1942, 0.0
          %v2298 = vsel %vm2266, %v1943, 0.0
          %v2299 = vsel %vm2267, %v1944, 0.0
          %v2300 = vsel %vm2268, %v1945, 0.0
          %v2301 = vsel %vm2269, %v1946, 0.0
          %v2302 = vsel %vm2270, %v1947, 0.0
          %v2303 = vsel %vm2271, %v1948, 0.0
          %v2304 = vsel %vm2272, %v1949, 0.0
          %v2305 = vsel %vm2273, %v1950, 0.0
          %v2306 = vsel %vm2274, %v1951, 0.0
          %v2307 = vsel %vm2275, %v1952, 0.0
          %v2308 = vsel %vm2276, %v1953, 0.0
          %v2309 = vsel %vm2277, %v1954, 0.0
          %v2310 = vsel %vm2278, %v1955, 0.0
          %v2311 = vsel %vm2279, %v1956, 0.0
          %v2312 = vsel %vm2280, %v1957, 0.0
          %v2313 = vsel %vm2281, %v1958, 0.0
          %v2314 = vadd.f32 %v2282, %v2283
          %v2315 = vadd.f32 %v2314, %v2284
          %v2316 = vadd.f32 %v2315, %v2285
          %v2317 = vadd.f32 %v2316, %v2286
          %v2318 = vadd.f32 %v2317, %v2287
          %v2319 = vadd.f32 %v2318, %v2288
          %v2320 = vadd.f32 %v2319, %v2289
          %v2321 = vadd.f32 %v2320, %v2290
          %v2322 = vadd.f32 %v2321, %v2291
          %v2323 = vadd.f32 %v2322, %v2292
          %v2324 = vadd.f32 %v2323, %v2293
          %v2325 = vadd.f32 %v2324, %v2294
          %v2326 = vadd.f32 %v2325, %v2295
          %v2327 = vadd.f32 %v2326, %v2296
          %v2328 = vadd.f32 %v2327, %v2297
          %v2329 = vadd.f32 %v2328, %v2298
          %v2330 = vadd.f32 %v2329, %v2299
          %v2331 = vadd.f32 %v2330, %v2300
          %v2332 = vadd.f32 %v2331, %v2301
          %v2333 = vadd.f32 %v2332, %v2302
          %v2334 = vadd.f32 %v2333, %v2303
          %v2335 = vadd.f32 %v2334, %v2304
          %v2336 = vadd.f32 %v2335, %v2305
          %v2337 = vadd.f32 %v2336, %v2306
          %v2338 = vadd.f32 %v2337, %v2307
          %v2339 = vadd.f32 %v2338, %v2308
          %v2340 = vadd.f32 %v2339, %v2309
          %v2341 = vadd.f32 %v2340, %v2310
          %v2342 = vadd.f32 %v2341, %v2311
          %v2343 = vadd.f32 %v2342, %v2312
          %v2344 = vadd.f32 %v2343, %v2313
          %v2345 = vrot.slane %v2344, 4
          %v2346 = vadd.f32 %v2344, %v2345
          %v2347 = vrot.slane %v2346, 2
          %v2348 = vadd.f32 %v2346, %v2347
          %v2349 = vrot.slane %v2348, 1
          %v2350 = vadd.f32 %v2348, %v2349
          %v2351 = vmul.f32 %v2282, %v2282
          %v2352 = vmul.f32 %v2283, %v2283
          %v2353 = vmul.f32 %v2284, %v2284
          %v2354 = vmul.f32 %v2285, %v2285
          %v2355 = vmul.f32 %v2286, %v2286
          %v2356 = vmul.f32 %v2287, %v2287
          %v2357 = vmul.f32 %v2288, %v2288
          %v2358 = vmul.f32 %v2289, %v2289
          %v2359 = vmul.f32 %v2290, %v2290
          %v2360 = vmul.f32 %v2291, %v2291
          %v2361 = vmul.f32 %v2292, %v2292
          %v2362 = vmul.f32 %v2293, %v2293
          %v2363 = vmul.f32 %v2294, %v2294
          %v2364 = vmul.f32 %v2295, %v2295
          %v2365 = vmul.f32 %v2296, %v2296
          %v2366 = vmul.f32 %v2297, %v2297
          %v2367 = vmul.f32 %v2298, %v2298
          %v2368 = vmul.f32 %v2299, %v2299
          %v2369 = vmul.f32 %v2300, %v2300
          %v2370 = vmul.f32 %v2301, %v2301
          %v2371 = vmul.f32 %v2302, %v2302
          %v2372 = vmul.f32 %v2303, %v2303
          %v2373 = vmul.f32 %v2304, %v2304
          %v2374 = vmul.f32 %v2305, %v2305
          %v2375 = vmul.f32 %v2306, %v2306
          %v2376 = vmul.f32 %v2307, %v2307
          %v2377 = vmul.f32 %v2308, %v2308
          %v2378 = vmul.f32 %v2309, %v2309
          %v2379 = vmul.f32 %v2310, %v2310
          %v2380 = vmul.f32 %v2311, %v2311
          %v2381 = vmul.f32 %v2312, %v2312
          %v2382 = vmul.f32 %v2313, %v2313
          %v2383 = vadd.f32 %v2351, %v2352
          %v2384 = vadd.f32 %v2383, %v2353
          %v2385 = vadd.f32 %v2384, %v2354
          %v2386 = vadd.f32 %v2385, %v2355
          %v2387 = vadd.f32 %v2386, %v2356
          %v2388 = vadd.f32 %v2387, %v2357
          %v2389 = vadd.f32 %v2388, %v2358
          %v2390 = vadd.f32 %v2389, %v2359
          %v2391 = vadd.f32 %v2390, %v2360
          %v2392 = vadd.f32 %v2391, %v2361
          %v2393 = vadd.f32 %v2392, %v2362
          %v2394 = vadd.f32 %v2393, %v2363
          %v2395 = vadd.f32 %v2394, %v2364
          %v2396 = vadd.f32 %v2395, %v2365
          %v2397 = vadd.f32 %v2396, %v2366
          %v2398 = vadd.f32 %v2397, %v2367
          %v2399 = vadd.f32 %v2398, %v2368
          %v2400 = vadd.f32 %v2399, %v2369
          %v2401 = vadd.f32 %v2400, %v2370
          %v2402 = vadd.f32 %v2401, %v2371
          %v2403 = vadd.f32 %v2402, %v2372
          %v2404 = vadd.f32 %v2403, %v2373
          %v2405 = vadd.f32 %v2404, %v2374
          %v2406 = vadd.f32 %v2405, %v2375
          %v2407 = vadd.f32 %v2406, %v2376
          %v2408 = vadd.f32 %v2407, %v2377
          %v2409 = vadd.f32 %v2408, %v2378
          %v2410 = vadd.f32 %v2409, %v2379
          %v2411 = vadd.f32 %v2410, %v2380
          %v2412 = vadd.f32 %v2411, %v2381
          %v2413 = vadd.f32 %v2412, %v2382
          %v2414 = vrot.slane %v2413, 4
          %v2415 = vadd.f32 %v2413, %v2414
          %v2416 = vrot.slane %v2415, 2
          %v2417 = vadd.f32 %v2415, %v2416
          %v2418 = vrot.slane %v2417, 1
          %v2419 = vadd.f32 %v2417, %v2418
          %vm2420 = vcmp.eq.s32.totalorder %v2120, 0
          %v2421 = vsel %vm2420, %v2350, 0.0
          %vm2422 = vcmp.eq.s32.totalorder %v2120, 1
          %v2423 = vsel %vm2422, %v2419, 0.0
          %v2424 = vadd.f32 %v2421, %v2423
          %2425 = vst [vmem:[%s612] sm:$0xff] %v2424
        $region102: #{gin_forward.6} parent=85 // pred_fallthru
          _
        %s2426 = smul.u32 32, %s38
        %p2427 = scmp.lt.s32.totalorder %s2426, 63
        %s2428 = scalar_select %p2427, %s2426, 63
        %s2429 = smul.addr %s2428, 4
        %s2430 = scalar_lea.vmem %s10, %s2429
        %p2431 = scmp.lt.s32.totalorder %s38, 1
        %s2432 = scalar_select %p2431, %s38, 1
        %s2433 = smul.addr %s2432, 8
        %s2434 = scalar_lea.vmem %s11, %s2433
        // Predicated region
        $region103: #{gin_forward.6} parent=85 // pred_check
          %p2435 = pneg %p261
        $region104: #{gin_forward.6} parent=85 // pred_check_branch
          %2437 = sbr.rel (%p2435) target = $region106
        $region105: #{gin_forward.6} parent=85 // pred_region
          %s2438 = smul.u32 32, %s38
        $region106: #{gin_forward.6} parent=85 // pred_fallthru
          _
        // Predicated region
        $region107: #{gin_forward.6} parent=85 // pred_check
          %p2439 = pneg %p287
        $region108: #{gin_forward.6} parent=85 // pred_check_branch
          %2441 = sbr.rel (%p2439) target = $region110
        $region109: #{gin_forward.6} parent=85 // pred_region
          _
        $region110: #{gin_forward.6} parent=85 // pred_fallthru
          _
      $region86: #{gin_forward.6} parent=5 // pred_fallthru
        _
      %p2442 = scmp.le.s32.totalorder 2, %s29
      // Predicated region
      $region111: #{gin_forward.6} parent=5 // pred_check
        %p2443 = pneg %p2442
      $region112: #{gin_forward.6} parent=5 // pred_check_branch
        %2445 = sbr.rel (%p2443) target = $region114
      $region113: #{gin_forward.6} parent=5 // pred_region
        %s2446 = ssub.s32 %s29, 2
        // Predicated region
        $region115: #{gin_forward.6} parent=113 // pred_check
          %p2447 = pneg %p267
        $region116: #{gin_forward.6} parent=113 // pred_check_branch
          %2449 = sbr.rel (%p2447) target = $region118
        $region117: #{gin_forward.6} parent=113 // pred_region
          %s2450 = smul.u32 32, %s40
          %p2451 = scmp.lt.s32.totalorder %s2450, 63
          %s2452 = scalar_select %p2451, %s2450, 63
          %s2453 = smul.addr %s2452, 4
          %s2454 = scalar_lea.vmem %s10, %s2453
        $region118: #{gin_forward.6} parent=113 // pred_fallthru
          _
        // Predicated region
        $region119: #{gin_forward.6} parent=113 // pred_check
          %p2455 = pneg %p293
        $region120: #{gin_forward.6} parent=113 // pred_check_branch
          %2457 = sbr.rel (%p2455) target = $region122
        $region121: #{gin_forward.6} parent=113 // pred_region
          %p2458 = scmp.lt.s32.totalorder %s40, 1
          %s2459 = scalar_select %p2458, %s40, 1
          %s2460 = smul.addr %s2459, 8
          %s2461 = scalar_lea.vmem %s11, %s2460
        $region122: #{gin_forward.6} parent=113 // pred_fallthru
          _
      $region114: #{gin_forward.6} parent=5 // pred_fallthru
        _
    $region6: #{gin_forward.6} parent=1 // loop_footer
      %s33 = sadd.s32 1, %s29
    $region7: #{gin_forward.6} parent=1 // loop_footer_branch
      %28 = sbr.rel target = $region3
    $region8: #{gin_forward.6} parent=1 // loop_exit
      _

// kernel: gin_forward.7
$region0: #{gin_forward.7}
  #allocation0 [shape = 'u32[]', space=smem, size = 0x4, offset = 0x4, fixed_abs, tag = 'smem constant byte address 0x4 - core index']
  #allocation1 [shape = 'u32[144,128]{1,0:T(1,128)}', space=vmem, size = 0x12000, scoped, tag = 'internal scratch']
  %s0 = inlined_call_operand.vmem [shape: bf16[512,128], index: 0, kind: input, shape index: {}]
  %s1 = inlined_call_operand.vmem [shape: f32[1,128], index: 1, kind: input, shape index: {}]
  %s2 = inlined_call_operand.vmem [shape: f32[1,128], index: 2, kind: input, shape index: {}]
  %s3 = inlined_call_operand.vmem [shape: bf16[512,128], index: 3, kind: output, shape index: {}]
  %s4 = sld [smem:[#allocation0]]
  $region22: #{gin_forward.7} parent=0
    _
  %s6 = ssub.s32 1, %s4
  %s7 = scalar_select 0, %s6, %s4
  // Predicated region
  $region2: #{gin_forward.7} parent=0 // pred_check
    _
  $region3: #{gin_forward.7} parent=0 // pred_check_branch
    %9 = sbr.rel (0) target = $region5
  $region4: #{gin_forward.7} parent=0 // pred_region
    _
  $region5: #{gin_forward.7} parent=0 // pred_fallthru
    _
  // Predicated region
  $region6: #{gin_forward.7} parent=0 // pred_check
    _
  $region7: #{gin_forward.7} parent=0 // pred_check_branch
    %11 = sbr.rel (0) target = $region9
  $region8: #{gin_forward.7} parent=0 // pred_region
    _
  $region9: #{gin_forward.7} parent=0 // pred_fallthru
    _
  // Predicated region
  $region10: #{gin_forward.7} parent=0 // pred_check
    _
  $region11: #{gin_forward.7} parent=0 // pred_check_branch
    %13 = sbr.rel (0) target = $region13
  $region12: #{gin_forward.7} parent=0 // pred_region
    _
  $region13: #{gin_forward.7} parent=0 // pred_fallthru
    _
  %v14 = vld [vmem:[%s0] sm:$0xf]
  %v15 = vld [vmem:[%s0 + $0x4] sm:$0xf]
  %v16 = vld [vmem:[%s0 + $0x8] sm:$0xf]
  %v17 = vld [vmem:[%s0 + $0xc] sm:$0xf]
  %v18 = vld [vmem:[%s0 + $0x10] sm:$0xf]
  %v19 = vld [vmem:[%s0 + $0x14] sm:$0xf]
  %v20 = vld [vmem:[%s0 + $0x18] sm:$0xf]
  %v21 = vld [vmem:[%s0 + $0x1c] sm:$0xf]
  %v22 = vld [vmem:[%s0 + $0x20] sm:$0xf]
  %v23 = vld [vmem:[%s0 + $0x24] sm:$0xf]
  %v24 = vld [vmem:[%s0 + $0x28] sm:$0xf]
  %v25 = vld [vmem:[%s0 + $0x2c] sm:$0xf]
  %v26 = vld [vmem:[%s0 + $0x30] sm:$0xf]
  %v27 = vld [vmem:[%s0 + $0x34] sm:$0xf]
  %v28 = vld [vmem:[%s0 + $0x38] sm:$0xf]
  %v29 = vld [vmem:[%s0 + $0x3c] sm:$0xf]
  %v30 = vld [vmem:[%s0 + $0x40] sm:$0xf]
  %v31 = vld [vmem:[%s0 + $0x44] sm:$0xf]
  %v32 = vld [vmem:[%s0 + $0x48] sm:$0xf]
  %v33 = vld [vmem:[%s0 + $0x4c] sm:$0xf]
  %v34 = vld [vmem:[%s0 + $0x50] sm:$0xf]
  %v35 = vld [vmem:[%s0 + $0x54] sm:$0xf]
  %v36 = vld [vmem:[%s0 + $0x58] sm:$0xf]
  %v37 = vld [vmem:[%s0 + $0x5c] sm:$0xf]
  %v38 = vld [vmem:[%s0 + $0x60] sm:$0xf]
  %v39 = vld [vmem:[%s0 + $0x64] sm:$0xf]
  %v40 = vld [vmem:[%s0 + $0x68] sm:$0xf]
  %v41 = vld [vmem:[%s0 + $0x6c] sm:$0xf]
  %v42 = vld [vmem:[%s0 + $0x70] sm:$0xf]
  %v43 = vld [vmem:[%s0 + $0x74] sm:$0xf]
  %v44 = vld [vmem:[%s0 + $0x78] sm:$0xf]
  %v45 = vld [vmem:[%s0 + $0x7c] sm:$0xf]
  %v46 = vld [vmem:[%s0 + $0x80] sm:$0xf]
  %v47 = vld [vmem:[%s0 + $0x84] sm:$0xf]
  %v48 = vld [vmem:[%s0 + $0x88] sm:$0xf]
  %v49 = vld [vmem:[%s0 + $0x8c] sm:$0xf]
  %v50 = vld [vmem:[%s0 + $0x90] sm:$0xf]
  %v51 = vld [vmem:[%s0 + $0x94] sm:$0xf]
  %v52 = vld [vmem:[%s0 + $0x98] sm:$0xf]
  %v53 = vld [vmem:[%s0 + $0x9c] sm:$0xf]
  %v54 = vld [vmem:[%s0 + $0xa0] sm:$0xf]
  %v55 = vld [vmem:[%s0 + $0xa4] sm:$0xf]
  %v56 = vld [vmem:[%s0 + $0xa8] sm:$0xf]
  %v57 = vld [vmem:[%s0 + $0xac] sm:$0xf]
  %v58 = vld [vmem:[%s0 + $0xb0] sm:$0xf]
  %v59 = vld [vmem:[%s0 + $0xb4] sm:$0xf]
  %v60 = vld [vmem:[%s0 + $0xb8] sm:$0xf]
  %v61 = vld [vmem:[%s0 + $0xbc] sm:$0xf]
  %v62 = vld [vmem:[%s0 + $0xc0] sm:$0xf]
  %v63 = vld [vmem:[%s0 + $0xc4] sm:$0xf]
  %v64 = vld [vmem:[%s0 + $0xc8] sm:$0xf]
  %v65 = vld [vmem:[%s0 + $0xcc] sm:$0xf]
  %v66 = vld [vmem:[%s0 + $0xd0] sm:$0xf]
  %v67 = vld [vmem:[%s0 + $0xd4] sm:$0xf]
  %v68 = vld [vmem:[%s0 + $0xd8] sm:$0xf]
  %v69 = vld [vmem:[%s0 + $0xdc] sm:$0xf]
  %v70 = vld [vmem:[%s0 + $0xe0] sm:$0xf]
  %v71 = vld [vmem:[%s0 + $0xe4] sm:$0xf]
  %v72 = vld [vmem:[%s0 + $0xe8] sm:$0xf]
  %v73 = vld [vmem:[%s0 + $0xec] sm:$0xf]
  %v74 = vld [vmem:[%s0 + $0xf0] sm:$0xf]
  %v75 = vld [vmem:[%s0 + $0xf4] sm:$0xf]
  %v76 = vld [vmem:[%s0 + $0xf8] sm:$0xf]
  %v77 = vld [vmem:[%s0 + $0xfc] sm:$0xf]
  %v78 = vunpack.c.l.bf16 %v14
  %v79 = vunpack.c.l.bf16 %v15
  %v80 = vunpack.c.l.bf16 %v16
  %v81 = vunpack.c.l.bf16 %v17
  %v82 = vunpack.c.l.bf16 %v18
  %v83 = vunpack.c.l.bf16 %v19
  %v84 = vunpack.c.l.bf16 %v20
  %v85 = vunpack.c.l.bf16 %v21
  %v86 = vunpack.c.l.bf16 %v22
  %v87 = vunpack.c.l.bf16 %v23
  %v88 = vunpack.c.l.bf16 %v24
  %v89 = vunpack.c.l.bf16 %v25
  %v90 = vunpack.c.l.bf16 %v26
  %v91 = vunpack.c.l.bf16 %v27
  %v92 = vunpack.c.l.bf16 %v28
  %v93 = vunpack.c.l.bf16 %v29
  %v94 = vunpack.c.l.bf16 %v30
  %v95 = vunpack.c.l.bf16 %v31
  %v96 = vunpack.c.l.bf16 %v32
  %v97 = vunpack.c.l.bf16 %v33
  %v98 = vunpack.c.l.bf16 %v34
  %v99 = vunpack.c.l.bf16 %v35
  %v100 = vunpack.c.l.bf16 %v36
  %v101 = vunpack.c.l.bf16 %v37
  %v102 = vunpack.c.l.bf16 %v38
  %v103 = vunpack.c.l.bf16 %v39
  %v104 = vunpack.c.l.bf16 %v40
  %v105 = vunpack.c.l.bf16 %v41
  %v106 = vunpack.c.l.bf16 %v42
  %v107 = vunpack.c.l.bf16 %v43
  %v108 = vunpack.c.l.bf16 %v44
  %v109 = vunpack.c.l.bf16 %v45
  %v110 = vunpack.c.l.bf16 %v46
  %v111 = vunpack.c.l.bf16 %v47
  %v112 = vunpack.c.l.bf16 %v48
  %v113 = vunpack.c.l.bf16 %v49
  %v114 = vunpack.c.l.bf16 %v50
  %v115 = vunpack.c.l.bf16 %v51
  %v116 = vunpack.c.l.bf16 %v52
  %v117 = vunpack.c.l.bf16 %v53
  %v118 = vunpack.c.l.bf16 %v54
  %v119 = vunpack.c.l.bf16 %v55
  %v120 = vunpack.c.l.bf16 %v56
  %v121 = vunpack.c.l.bf16 %v57
  %v122 = vunpack.c.l.bf16 %v58
  %v123 = vunpack.c.l.bf16 %v59
  %v124 = vunpack.c.l.bf16 %v60
  %v125 = vunpack.c.l.bf16 %v61
  %v126 = vunpack.c.l.bf16 %v62
  %v127 = vunpack.c.l.bf16 %v63
  %v128 = vunpack.c.l.bf16 %v64
  %v129 = vunpack.c.l.bf16 %v65
  %v130 = vunpack.c.l.bf16 %v66
  %v131 = vunpack.c.l.bf16 %v67
  %v132 = vunpack.c.l.bf16 %v68
  %v133 = vunpack.c.l.bf16 %v69
  %v134 = vunpack.c.l.bf16 %v70
  %v135 = vunpack.c.l.bf16 %v71
  %v136 = vunpack.c.l.bf16 %v72
  %v137 = vunpack.c.l.bf16 %v73
  %v138 = vunpack.c.l.bf16 %v74
  %v139 = vunpack.c.l.bf16 %v75
  %v140 = vunpack.c.l.bf16 %v76
  %v141 = vunpack.c.l.bf16 %v77
  %v142 = vld [vmem:[%s1] sm:$0x1]
  %v144 = vlaneseq
  %v145 = vshrl.u32 %v144, 7
  %v146 = vsub.s32 0, %v145
  %v147 = vrot.slane %v142, %v146
  %v149 = vmul.f32 %v78, %v147
  %v150 = vmul.f32 %v79, %v147
  %v151 = vmul.f32 %v80, %v147
  %v152 = vmul.f32 %v81, %v147
  %v153 = vmul.f32 %v82, %v147
  %v154 = vmul.f32 %v83, %v147
  %v155 = vmul.f32 %v84, %v147
  %v156 = vmul.f32 %v85, %v147
  %v157 = vmul.f32 %v86, %v147
  %v158 = vmul.f32 %v87, %v147
  %v159 = vmul.f32 %v88, %v147
  %v160 = vmul.f32 %v89, %v147
  %v161 = vmul.f32 %v90, %v147
  %v162 = vmul.f32 %v91, %v147
  %v163 = vmul.f32 %v92, %v147
  %v164 = vmul.f32 %v93, %v147
  %v165 = vmul.f32 %v94, %v147
  %v166 = vmul.f32 %v95, %v147
  %v167 = vmul.f32 %v96, %v147
  %v168 = vmul.f32 %v97, %v147
  %v169 = vmul.f32 %v98, %v147
  %v170 = vmul.f32 %v99, %v147
  %v171 = vmul.f32 %v100, %v147
  %v172 = vmul.f32 %v101, %v147
  %v173 = vmul.f32 %v102, %v147
  %v174 = vmul.f32 %v103, %v147
  %v175 = vmul.f32 %v104, %v147
  %v176 = vmul.f32 %v105, %v147
  %v177 = vmul.f32 %v106, %v147
  %v178 = vmul.f32 %v107, %v147
  %v179 = vmul.f32 %v108, %v147
  %v180 = vmul.f32 %v109, %v147
  %v181 = vmul.f32 %v110, %v147
  %v182 = vmul.f32 %v111, %v147
  %v183 = vmul.f32 %v112, %v147
  %v184 = vmul.f32 %v113, %v147
  %v185 = vmul.f32 %v114, %v147
  %v186 = vmul.f32 %v115, %v147
  %v187 = vmul.f32 %v116, %v147
  %v188 = vmul.f32 %v117, %v147
  %v189 = vmul.f32 %v118, %v147
  %v190 = vmul.f32 %v119, %v147
  %v191 = vmul.f32 %v120, %v147
  %v192 = vmul.f32 %v121, %v147
  %v193 = vmul.f32 %v122, %v147
  %v194 = vmul.f32 %v123, %v147
  %v195 = vmul.f32 %v124, %v147
  %v196 = vmul.f32 %v125, %v147
  %v197 = vmul.f32 %v126, %v147
  %v198 = vmul.f32 %v127, %v147
  %v199 = vmul.f32 %v128, %v147
  %v200 = vmul.f32 %v129, %v147
  %v201 = vmul.f32 %v130, %v147
  %v202 = vmul.f32 %v131, %v147
  %v203 = vmul.f32 %v132, %v147
  %v204 = vmul.f32 %v133, %v147
  %v205 = vmul.f32 %v134, %v147
  %v206 = vmul.f32 %v135, %v147
  %v207 = vmul.f32 %v136, %v147
  %v208 = vmul.f32 %v137, %v147
  %v209 = vmul.f32 %v138, %v147
  %v210 = vmul.f32 %v139, %v147
  %v211 = vmul.f32 %v140, %v147
  %v212 = vmul.f32 %v141, %v147
  %v213 = vld [vmem:[%s2] sm:$0x1]
  %v215 = vlaneseq
  %v216 = vshrl.u32 %v215, 7
  %v217 = vsub.s32 0, %v216
  %v218 = vrot.slane %v213, %v217
  %v220 = vadd.f32 %v149, %v218
  %v221 = vadd.f32 %v150, %v218
  %v222 = vadd.f32 %v151, %v218
  %v223 = vadd.f32 %v152, %v218
  %v224 = vadd.f32 %v153, %v218
  %v225 = vadd.f32 %v154, %v218
  %v226 = vadd.f32 %v155, %v218
  %v227 = vadd.f32 %v156, %v218
  %v228 = vadd.f32 %v157, %v218
  %v229 = vadd.f32 %v158, %v218
  %v230 = vadd.f32 %v159, %v218
  %v231 = vadd.f32 %v160, %v218
  %v232 = vadd.f32 %v161, %v218
  %v233 = vadd.f32 %v162, %v218
  %v234 = vadd.f32 %v163, %v218
  %v235 = vadd.f32 %v164, %v218
  %v236 = vadd.f32 %v165, %v218
  %v237 = vadd.f32 %v166, %v218
  %v238 = vadd.f32 %v167, %v218
  %v239 = vadd.f32 %v168, %v218
  %v240 = vadd.f32 %v169, %v218
  %v241 = vadd.f32 %v170, %v218
  %v242 = vadd.f32 %v171, %v218
  %v243 = vadd.f32 %v172, %v218
  %v244 = vadd.f32 %v173, %v218
  %v245 = vadd.f32 %v174, %v218
  %v246 = vadd.f32 %v175, %v218
  %v247 = vadd.f32 %v176, %v218
  %v248 = vadd.f32 %v177, %v218
  %v249 = vadd.f32 %v178, %v218
  %v250 = vadd.f32 %v179, %v218
  %v251 = vadd.f32 %v180, %v218
  %v252 = vadd.f32 %v181, %v218
  %v253 = vadd.f32 %v182, %v218
  %v254 = vadd.f32 %v183, %v218
  %v255 = vadd.f32 %v184, %v218
  %v256 = vadd.f32 %v185, %v218
  %v257 = vadd.f32 %v186, %v218
  %v258 = vadd.f32 %v187, %v218
  %v259 = vadd.f32 %v188, %v218
  %v260 = vadd.f32 %v189, %v218
  %v261 = vadd.f32 %v190, %v218
  %v262 = vadd.f32 %v191, %v218
  %v263 = vadd.f32 %v192, %v218
  %v264 = vadd.f32 %v193, %v218
  %v265 = vadd.f32 %v194, %v218
  %v266 = vadd.f32 %v195, %v218
  %v267 = vadd.f32 %v196, %v218
  %v268 = vadd.f32 %v197, %v218
  %v269 = vadd.f32 %v198, %v218
  %v270 = vadd.f32 %v199, %v218
  %v271 = vadd.f32 %v200, %v218
  %v272 = vadd.f32 %v201, %v218
  %v273 = vadd.f32 %v202, %v218
  %v274 = vadd.f32 %v203, %v218
  %v275 = vadd.f32 %v204, %v218
  %v276 = vadd.f32 %v205, %v218
  %v277 = vadd.f32 %v206, %v218
  %v278 = vadd.f32 %v207, %v218
  %v279 = vadd.f32 %v208, %v218
  %v280 = vadd.f32 %v209, %v218
  %v281 = vadd.f32 %v210, %v218
  %v282 = vadd.f32 %v211, %v218
  %v283 = vadd.f32 %v212, %v218
  %v284 = vmax.f32 %v220, 0.0
  %v285 = vmax.f32 %v221, 0.0
  %v286 = vmax.f32 %v222, 0.0
  %v287 = vmax.f32 %v223, 0.0
  %v288 = vmax.f32 %v224, 0.0
  %v289 = vmax.f32 %v225, 0.0
  %v290 = vmax.f32 %v226, 0.0
  %v291 = vmax.f32 %v227, 0.0
  %v292 = vmax.f32 %v228, 0.0
  %v293 = vmax.f32 %v229, 0.0
  %v294 = vmax.f32 %v230, 0.0
  %v295 = vmax.f32 %v231, 0.0
  %v296 = vmax.f32 %v232, 0.0
  %v297 = vmax.f32 %v233, 0.0
  %v298 = vmax.f32 %v234, 0.0
  %v299 = vmax.f32 %v235, 0.0
  %v300 = vmax.f32 %v236, 0.0
  %v301 = vmax.f32 %v237, 0.0
  %v302 = vmax.f32 %v238, 0.0
  %v303 = vmax.f32 %v239, 0.0
  %v304 = vmax.f32 %v240, 0.0
  %v305 = vmax.f32 %v241, 0.0
  %v306 = vmax.f32 %v242, 0.0
  %v307 = vmax.f32 %v243, 0.0
  %v308 = vmax.f32 %v244, 0.0
  %v309 = vmax.f32 %v245, 0.0
  %v310 = vmax.f32 %v246, 0.0
  %v311 = vmax.f32 %v247, 0.0
  %v312 = vmax.f32 %v248, 0.0
  %v313 = vmax.f32 %v249, 0.0
  %v314 = vmax.f32 %v250, 0.0
  %v315 = vmax.f32 %v251, 0.0
  %v316 = vmax.f32 %v252, 0.0
  %v317 = vmax.f32 %v253, 0.0
  %v318 = vmax.f32 %v254, 0.0
  %v319 = vmax.f32 %v255, 0.0
  %v320 = vmax.f32 %v256, 0.0
  %v321 = vmax.f32 %v257, 0.0
  %v322 = vmax.f32 %v258, 0.0
  %v323 = vmax.f32 %v259, 0.0
  %v324 = vmax.f32 %v260, 0.0
  %v325 = vmax.f32 %v261, 0.0
  %v326 = vmax.f32 %v262, 0.0
  %v327 = vmax.f32 %v263, 0.0
  %v328 = vmax.f32 %v264, 0.0
  %v329 = vmax.f32 %v265, 0.0
  %v330 = vmax.f32 %v266, 0.0
  %v331 = vmax.f32 %v267, 0.0
  %v332 = vmax.f32 %v268, 0.0
  %v333 = vmax.f32 %v269, 0.0
  %v334 = vmax.f32 %v270, 0.0
  %v335 = vmax.f32 %v271, 0.0
  %v336 = vmax.f32 %v272, 0.0
  %v337 = vmax.f32 %v273, 0.0
  %v338 = vmax.f32 %v274, 0.0
  %v339 = vmax.f32 %v275, 0.0
  %v340 = vmax.f32 %v276, 0.0
  %v341 = vmax.f32 %v277, 0.0
  %v342 = vmax.f32 %v278, 0.0
  %v343 = vmax.f32 %v279, 0.0
  %v344 = vmax.f32 %v280, 0.0
  %v345 = vmax.f32 %v281, 0.0
  %v346 = vmax.f32 %v282, 0.0
  %v347 = vmax.f32 %v283, 0.0
  %v348 = vpack.c.bf16 %v285, %v284
  %v349 = vpack.c.bf16 %v287, %v286
  %v350 = vpack.c.bf16 %v289, %v288
  %v351 = vpack.c.bf16 %v291, %v290
  %v352 = vpack.c.bf16 %v293, %v292
  %v353 = vpack.c.bf16 %v295, %v294
  %v354 = vpack.c.bf16 %v297, %v296
  %v355 = vpack.c.bf16 %v299, %v298
  %v356 = vpack.c.bf16 %v301, %v300
  %v357 = vpack.c.bf16 %v303, %v302
  %v358 = vpack.c.bf16 %v305, %v304
  %v359 = vpack.c.bf16 %v307, %v306
  %v360 = vpack.c.bf16 %v309, %v308
  %v361 = vpack.c.bf16 %v311, %v310
  %v362 = vpack.c.bf16 %v313, %v312
  %v363 = vpack.c.bf16 %v315, %v314
  %v364 = vpack.c.bf16 %v317, %v316
  %v365 = vpack.c.bf16 %v319, %v318
  %v366 = vpack.c.bf16 %v321, %v320
  %v367 = vpack.c.bf16 %v323, %v322
  %v368 = vpack.c.bf16 %v325, %v324
  %v369 = vpack.c.bf16 %v327, %v326
  %v370 = vpack.c.bf16 %v329, %v328
  %v371 = vpack.c.bf16 %v331, %v330
  %v372 = vpack.c.bf16 %v333, %v332
  %v373 = vpack.c.bf16 %v335, %v334
  %v374 = vpack.c.bf16 %v337, %v336
  %v375 = vpack.c.bf16 %v339, %v338
  %v376 = vpack.c.bf16 %v341, %v340
  %v377 = vpack.c.bf16 %v343, %v342
  %v378 = vpack.c.bf16 %v345, %v344
  %v379 = vpack.c.bf16 %v347, %v346
  %v412 = vunpack.c.l.b16 %v348
  %v413 = vunpack.c.h.b16 %v348
  %v414 = vunpack.c.l.b16 %v349
  %v415 = vunpack.c.h.b16 %v349
  %v416 = vunpack.c.l.b16 %v350
  %v417 = vunpack.c.h.b16 %v350
  %v418 = vunpack.c.l.b16 %v351
  %v419 = vunpack.c.h.b16 %v351
  %v420 = vunpack.c.l.b16 %v352
  %v421 = vunpack.c.h.b16 %v352
  %v422 = vunpack.c.l.b16 %v353
  %v423 = vunpack.c.h.b16 %v353
  %v424 = vunpack.c.l.b16 %v354
  %v425 = vunpack.c.h.b16 %v354
  %v426 = vunpack.c.l.b16 %v355
  %v427 = vunpack.c.h.b16 %v355
  %v428 = vunpack.c.l.b16 %v356
  %v429 = vunpack.c.h.b16 %v356
  %v430 = vunpack.c.l.b16 %v357
  %v431 = vunpack.c.h.b16 %v357
  %v432 = vunpack.c.l.b16 %v358
  %v433 = vunpack.c.h.b16 %v358
  %v434 = vunpack.c.l.b16 %v359
  %v435 = vunpack.c.h.b16 %v359
  %v436 = vunpack.c.l.b16 %v360
  %v437 = vunpack.c.h.b16 %v360
  %v438 = vunpack.c.l.b16 %v361
  %v439 = vunpack.c.h.b16 %v361
  %v440 = vunpack.c.l.b16 %v362
  %v441 = vunpack.c.h.b16 %v362
  %v442 = vunpack.c.l.b16 %v363
  %v443 = vunpack.c.h.b16 %v363
  %v444 = vunpack.c.l.b16 %v364
  %v445 = vunpack.c.h.b16 %v364
  %v446 = vunpack.c.l.b16 %v365
  %v447 = vunpack.c.h.b16 %v365
  %v448 = vunpack.c.l.b16 %v366
  %v449 = vunpack.c.h.b16 %v366
  %v450 = vunpack.c.l.b16 %v367
  %v451 = vunpack.c.h.b16 %v367
  %v452 = vunpack.c.l.b16 %v368
  %v453 = vunpack.c.h.b16 %v368
  %v454 = vunpack.c.l.b16 %v369
  %v455 = vunpack.c.h.b16 %v369
  %v456 = vunpack.c.l.b16 %v370
  %v457 = vunpack.c.h.b16 %v370
  %v458 = vunpack.c.l.b16 %v371
  %v459 = vunpack.c.h.b16 %v371
  %v460 = vunpack.c.l.b16 %v372
  %v461 = vunpack.c.h.b16 %v372
  %v462 = vunpack.c.l.b16 %v373
  %v463 = vunpack.c.h.b16 %v373
  %v464 = vunpack.c.l.b16 %v374
  %v465 = vunpack.c.h.b16 %v374
  %v466 = vunpack.c.l.b16 %v375
  %v467 = vunpack.c.h.b16 %v375
  %v468 = vunpack.c.l.b16 %v376
  %v469 = vunpack.c.h.b16 %v376
  %v470 = vunpack.c.l.b16 %v377
  %v471 = vunpack.c.h.b16 %v377
  %v472 = vunpack.c.l.b16 %v378
  %v473 = vunpack.c.h.b16 %v378
  %v474 = vunpack.c.l.b16 %v379
  %v475 = vunpack.c.h.b16 %v379
  %v476 = vpack.c.b16 %v412, %v412
  %v477 = vpack.c.b16 %v413, %v413
  %v478 = vpack.c.b16 %v414, %v414
  %v479 = vpack.c.b16 %v415, %v415
  %v480 = vpack.c.b16 %v416, %v416
  %v481 = vpack.c.b16 %v417, %v417
  %v482 = vpack.c.b16 %v418, %v418
  %v483 = vpack.c.b16 %v419, %v419
  %v484 = vpack.c.b16 %v420, %v420
  %v485 = vpack.c.b16 %v421, %v421
  %v486 = vpack.c.b16 %v422, %v422
  %v487 = vpack.c.b16 %v423, %v423
  %v488 = vpack.c.b16 %v424, %v424
  %v489 = vpack.c.b16 %v425, %v425
  %v490 = vpack.c.b16 %v426, %v426
  %v491 = vpack.c.b16 %v427, %v427
  %v492 = vpack.c.b16 %v428, %v428
  %v493 = vpack.c.b16 %v429, %v429
  %v494 = vpack.c.b16 %v430, %v430
  %v495 = vpack.c.b16 %v431, %v431
  %v496 = vpack.c.b16 %v432, %v432
  %v497 = vpack.c.b16 %v433, %v433
  %v498 = vpack.c.b16 %v434, %v434
  %v499 = vpack.c.b16 %v435, %v435
  %v500 = vpack.c.b16 %v436, %v436
  %v501 = vpack.c.b16 %v437, %v437
  %v502 = vpack.c.b16 %v438, %v438
  %v503 = vpack.c.b16 %v439, %v439
  %v504 = vpack.c.b16 %v440, %v440
  %v505 = vpack.c.b16 %v441, %v441
  %v506 = vpack.c.b16 %v442, %v442
  %v507 = vpack.c.b16 %v443, %v443
  %v508 = vpack.c.b16 %v444, %v444
  %v509 = vpack.c.b16 %v445, %v445
  %v510 = vpack.c.b16 %v446, %v446
  %v511 = vpack.c.b16 %v447, %v447
  %v512 = vpack.c.b16 %v448, %v448
  %v513 = vpack.c.b16 %v449, %v449
  %v514 = vpack.c.b16 %v450, %v450
  %v515 = vpack.c.b16 %v451, %v451
  %v516 = vpack.c.b16 %v452, %v452
  %v517 = vpack.c.b16 %v453, %v453
  %v518 = vpack.c.b16 %v454, %v454
  %v519 = vpack.c.b16 %v455, %v455
  %v520 = vpack.c.b16 %v456, %v456
  %v521 = vpack.c.b16 %v457, %v457
  %v522 = vpack.c.b16 %v458, %v458
  %v523 = vpack.c.b16 %v459, %v459
  %v524 = vpack.c.b16 %v460, %v460
  %v525 = vpack.c.b16 %v461, %v461
  %v526 = vpack.c.b16 %v462, %v462
  %v527 = vpack.c.b16 %v463, %v463
  %v528 = vpack.c.b16 %v464, %v464
  %v529 = vpack.c.b16 %v465, %v465
  %v530 = vpack.c.b16 %v466, %v466
  %v531 = vpack.c.b16 %v467, %v467
  %v532 = vpack.c.b16 %v468, %v468
  %v533 = vpack.c.b16 %v469, %v469
  %v534 = vpack.c.b16 %v470, %v470
  %v535 = vpack.c.b16 %v471, %v471
  %v536 = vpack.c.b16 %v472, %v472
  %v537 = vpack.c.b16 %v473, %v473
  %v538 = vpack.c.b16 %v474, %v474
  %v539 = vpack.c.b16 %v475, %v475
  %604 = vst [vmem:[%s3] sm:$0xf] %v476
  %605 = vst [vmem:[%s3 + $0x4] sm:$0xf] %v477
  %606 = vst [vmem:[%s3 + $0x8] sm:$0xf] %v478
  %607 = vst [vmem:[%s3 + $0xc] sm:$0xf] %v479
  %608 = vst [vmem:[%s3 + $0x10] sm:$0xf] %v480
  %609 = vst [vmem:[%s3 + $0x14] sm:$0xf] %v481
  %610 = vst [vmem:[%s3 + $0x18] sm:$0xf] %v482
  %611 = vst [vmem:[%s3 + $0x1c] sm:$0xf] %v483
  %612 = vst [vmem:[%s3 + $0x20] sm:$0xf] %v484
  %613 = vst [vmem:[%s3 + $0x24] sm:$0xf] %v485
  %614 = vst [vmem:[%s3 + $0x28] sm:$0xf] %v486
  %615 = vst [vmem:[%s3 + $0x2c] sm:$0xf] %v487
  %616 = vst [vmem:[%s3 + $0x30] sm:$0xf] %v488
  %617 = vst [vmem:[%s3 + $0x34] sm:$0xf] %v489
  %618 = vst [vmem:[%s3 + $0x38] sm:$0xf] %v490
  %619 = vst [vmem:[%s3 + $0x3c] sm:$0xf] %v491
  %620 = vst [vmem:[%s3 + $0x40] sm:$0xf] %v492
  %621 = vst [vmem:[%s3 + $0x44] sm:$0xf] %v493
  %622 = vst [vmem:[%s3 + $0x48] sm:$0xf] %v494
  %623 = vst [vmem:[%s3 + $0x4c] sm:$0xf] %v495
  %624 = vst [vmem:[%s3 + $0x50] sm:$0xf] %v496
  %625 = vst [vmem:[%s3 + $0x54] sm:$0xf] %v497
  %626 = vst [vmem:[%s3 + $0x58] sm:$0xf] %v498
  %627 = vst [vmem:[%s3 + $0x5c] sm:$0xf] %v499
  %628 = vst [vmem:[%s3 + $0x60] sm:$0xf] %v500
  %629 = vst [vmem:[%s3 + $0x64] sm:$0xf] %v501
  %630 = vst [vmem:[%s3 + $0x68] sm:$0xf] %v502
  %631 = vst [vmem:[%s3 + $0x6c] sm:$0xf] %v503
  %632 = vst [vmem:[%s3 + $0x70] sm:$0xf] %v504
  %633 = vst [vmem:[%s3 + $0x74] sm:$0xf] %v505
  %634 = vst [vmem:[%s3 + $0x78] sm:$0xf] %v506
  %635 = vst [vmem:[%s3 + $0x7c] sm:$0xf] %v507
  %636 = vst [vmem:[%s3 + $0x80] sm:$0xf] %v508
  %637 = vst [vmem:[%s3 + $0x84] sm:$0xf] %v509
  %638 = vst [vmem:[%s3 + $0x88] sm:$0xf] %v510
  %639 = vst [vmem:[%s3 + $0x8c] sm:$0xf] %v511
  %640 = vst [vmem:[%s3 + $0x90] sm:$0xf] %v512
  %641 = vst [vmem:[%s3 + $0x94] sm:$0xf] %v513
  %642 = vst [vmem:[%s3 + $0x98] sm:$0xf] %v514
  %643 = vst [vmem:[%s3 + $0x9c] sm:$0xf] %v515
  %644 = vst [vmem:[%s3 + $0xa0] sm:$0xf] %v516
  %645 = vst [vmem:[%s3 + $0xa4] sm:$0xf] %v517
  %646 = vst [vmem:[%s3 + $0xa8] sm:$0xf] %v518
  %647 = vst [vmem:[%s3 + $0xac] sm:$0xf] %v519
  %648 = vst [vmem:[%s3 + $0xb0] sm:$0xf] %v520
  %649 = vst [vmem:[%s3 + $0xb4] sm:$0xf] %v521
  %650 = vst [vmem:[%s3 + $0xb8] sm:$0xf] %v522
  %651 = vst [vmem:[%s3 + $0xbc] sm:$0xf] %v523
  %652 = vst [vmem:[%s3 + $0xc0] sm:$0xf] %v524
  %653 = vst [vmem:[%s3 + $0xc4] sm:$0xf] %v525
  %654 = vst [vmem:[%s3 + $0xc8] sm:$0xf] %v526
  %655 = vst [vmem:[%s3 + $0xcc] sm:$0xf] %v527
  %656 = vst [vmem:[%s3 + $0xd0] sm:$0xf] %v528
  %657 = vst [vmem:[%s3 + $0xd4] sm:$0xf] %v529
  %658 = vst [vmem:[%s3 + $0xd8] sm:$0xf] %v530
  %659 = vst [vmem:[%s3 + $0xdc] sm:$0xf] %v531
  %660 = vst [vmem:[%s3 + $0xe0] sm:$0xf] %v532
  %661 = vst [vmem:[%s3 + $0xe4] sm:$0xf] %v533
  %662 = vst [vmem:[%s3 + $0xe8] sm:$0xf] %v534
  %663 = vst [vmem:[%s3 + $0xec] sm:$0xf] %v535
  %664 = vst [vmem:[%s3 + $0xf0] sm:$0xf] %v536
  %665 = vst [vmem:[%s3 + $0xf4] sm:$0xf] %v537
  %666 = vst [vmem:[%s3 + $0xf8] sm:$0xf] %v538
  %667 = vst [vmem:[%s3 + $0xfc] sm:$0xf] %v539
  // Predicated region
  $region14: #{gin_forward.7} parent=0 // pred_check
    _
  $region15: #{gin_forward.7} parent=0 // pred_check_branch
    %669 = sbr.rel (0) target = $region17
  $region16: #{gin_forward.7} parent=0 // pred_region
    _
  $region17: #{gin_forward.7} parent=0 // pred_fallthru
    _
  // Predicated region
  $region18: #{gin_forward.7} parent=0 // pred_check
    _
  $region19: #{gin_forward.7} parent=0 // pred_check_branch
    %671 = sbr.rel (0) target = $region21
  $region20: #{gin_forward.7} parent=0 // pred_region
    _
  $region21: #{gin_forward.7} parent=0 // pred_fallthru
    _

// kernel: gin_forward.11
$region0: #{gin_forward.11}
  #allocation0 [shape = 'u32[]', space=smem, size = 0x4, offset = 0x4, fixed_abs, tag = 'smem constant byte address 0x4 - core index']
  #allocation1 [shape = 'u32[144,128]{1,0:T(1,128)}', space=vmem, size = 0x12000, scoped, tag = 'internal scratch']
  %s0 = inlined_call_operand.vmem [shape: bf16[512,128], index: 0, kind: input, shape index: {}]
  %s1 = inlined_call_operand.vmem [shape: f32[1,128], index: 1, kind: input, shape index: {}]
  %s2 = inlined_call_operand.vmem [shape: f32[1,128], index: 2, kind: input, shape index: {}]
  %s3 = inlined_call_operand.vmem [shape: bf16[128,128], index: 3, kind: input, shape index: {}]
  %s4 = inlined_call_operand.vmem [shape: f32[1,128], index: 4, kind: input, shape index: {}]
  %s5 = inlined_call_operand.vmem [shape: f32[512,128], index: 5, kind: output, shape index: {}]
  %s6 = sld [smem:[#allocation0]]
  $region30: #{gin_forward.11} parent=0
    _
  %s8 = ssub.s32 1, %s6
  %s9 = scalar_select 0, %s8, %s6
  // Predicated region
  $region2: #{gin_forward.11} parent=0 // pred_check
    _
  $region3: #{gin_forward.11} parent=0 // pred_check_branch
    %11 = sbr.rel (0) target = $region5
  $region4: #{gin_forward.11} parent=0 // pred_region
    _
  $region5: #{gin_forward.11} parent=0 // pred_fallthru
    _
  // Predicated region
  $region6: #{gin_forward.11} parent=0 // pred_check
    _
  $region7: #{gin_forward.11} parent=0 // pred_check_branch
    %13 = sbr.rel (0) target = $region9
  $region8: #{gin_forward.11} parent=0 // pred_region
    _
  $region9: #{gin_forward.11} parent=0 // pred_fallthru
    _
  // Predicated region
  $region10: #{gin_forward.11} parent=0 // pred_check
    _
  $region11: #{gin_forward.11} parent=0 // pred_check_branch
    %15 = sbr.rel (0) target = $region13
  $region12: #{gin_forward.11} parent=0 // pred_region
    _
  $region13: #{gin_forward.11} parent=0 // pred_fallthru
    _
  // Predicated region
  $region14: #{gin_forward.11} parent=0 // pred_check
    _
  $region15: #{gin_forward.11} parent=0 // pred_check_branch
    %17 = sbr.rel (0) target = $region17
  $region16: #{gin_forward.11} parent=0 // pred_region
    _
  $region17: #{gin_forward.11} parent=0 // pred_fallthru
    _
  // Predicated region
  $region18: #{gin_forward.11} parent=0 // pred_check
    _
  $region19: #{gin_forward.11} parent=0 // pred_check_branch
    %19 = sbr.rel (0) target = $region21
  $region20: #{gin_forward.11} parent=0 // pred_region
    _
  $region21: #{gin_forward.11} parent=0 // pred_fallthru
    _
  %v21 = vld [vmem:[%s0] sm:$0xf]
  %v22 = vld [vmem:[%s0 + $0x4] sm:$0xf]
  %v23 = vld [vmem:[%s0 + $0x8] sm:$0xf]
  %v24 = vld [vmem:[%s0 + $0xc] sm:$0xf]
  %v25 = vld [vmem:[%s0 + $0x10] sm:$0xf]
  %v26 = vld [vmem:[%s0 + $0x14] sm:$0xf]
  %v27 = vld [vmem:[%s0 + $0x18] sm:$0xf]
  %v28 = vld [vmem:[%s0 + $0x1c] sm:$0xf]
  %v29 = vld [vmem:[%s0 + $0x20] sm:$0xf]
  %v30 = vld [vmem:[%s0 + $0x24] sm:$0xf]
  %v31 = vld [vmem:[%s0 + $0x28] sm:$0xf]
  %v32 = vld [vmem:[%s0 + $0x2c] sm:$0xf]
  %v33 = vld [vmem:[%s0 + $0x30] sm:$0xf]
  %v34 = vld [vmem:[%s0 + $0x34] sm:$0xf]
  %v35 = vld [vmem:[%s0 + $0x38] sm:$0xf]
  %v36 = vld [vmem:[%s0 + $0x3c] sm:$0xf]
  %v37 = vld [vmem:[%s0 + $0x40] sm:$0xf]
  %v38 = vld [vmem:[%s0 + $0x44] sm:$0xf]
  %v39 = vld [vmem:[%s0 + $0x48] sm:$0xf]
  %v40 = vld [vmem:[%s0 + $0x4c] sm:$0xf]
  %v41 = vld [vmem:[%s0 + $0x50] sm:$0xf]
  %v42 = vld [vmem:[%s0 + $0x54] sm:$0xf]
  %v43 = vld [vmem:[%s0 + $0x58] sm:$0xf]
  %v44 = vld [vmem:[%s0 + $0x5c] sm:$0xf]
  %v45 = vld [vmem:[%s0 + $0x60] sm:$0xf]
  %v46 = vld [vmem:[%s0 + $0x64] sm:$0xf]
  %v47 = vld [vmem:[%s0 + $0x68] sm:$0xf]
  %v48 = vld [vmem:[%s0 + $0x6c] sm:$0xf]
  %v49 = vld [vmem:[%s0 + $0x70] sm:$0xf]
  %v50 = vld [vmem:[%s0 + $0x74] sm:$0xf]
  %v51 = vld [vmem:[%s0 + $0x78] sm:$0xf]
  %v52 = vld [vmem:[%s0 + $0x7c] sm:$0xf]
  %v53 = vld [vmem:[%s0 + $0x80] sm:$0xf]
  %v54 = vld [vmem:[%s0 + $0x84] sm:$0xf]
  %v55 = vld [vmem:[%s0 + $0x88] sm:$0xf]
  %v56 = vld [vmem:[%s0 + $0x8c] sm:$0xf]
  %v57 = vld [vmem:[%s0 + $0x90] sm:$0xf]
  %v58 = vld [vmem:[%s0 + $0x94] sm:$0xf]
  %v59 = vld [vmem:[%s0 + $0x98] sm:$0xf]
  %v60 = vld [vmem:[%s0 + $0x9c] sm:$0xf]
  %v61 = vld [vmem:[%s0 + $0xa0] sm:$0xf]
  %v62 = vld [vmem:[%s0 + $0xa4] sm:$0xf]
  %v63 = vld [vmem:[%s0 + $0xa8] sm:$0xf]
  %v64 = vld [vmem:[%s0 + $0xac] sm:$0xf]
  %v65 = vld [vmem:[%s0 + $0xb0] sm:$0xf]
  %v66 = vld [vmem:[%s0 + $0xb4] sm:$0xf]
  %v67 = vld [vmem:[%s0 + $0xb8] sm:$0xf]
  %v68 = vld [vmem:[%s0 + $0xbc] sm:$0xf]
  %v69 = vld [vmem:[%s0 + $0xc0] sm:$0xf]
  %v70 = vld [vmem:[%s0 + $0xc4] sm:$0xf]
  %v71 = vld [vmem:[%s0 + $0xc8] sm:$0xf]
  %v72 = vld [vmem:[%s0 + $0xcc] sm:$0xf]
  %v73 = vld [vmem:[%s0 + $0xd0] sm:$0xf]
  %v74 = vld [vmem:[%s0 + $0xd4] sm:$0xf]
  %v75 = vld [vmem:[%s0 + $0xd8] sm:$0xf]
  %v76 = vld [vmem:[%s0 + $0xdc] sm:$0xf]
  %v77 = vld [vmem:[%s0 + $0xe0] sm:$0xf]
  %v78 = vld [vmem:[%s0 + $0xe4] sm:$0xf]
  %v79 = vld [vmem:[%s0 + $0xe8] sm:$0xf]
  %v80 = vld [vmem:[%s0 + $0xec] sm:$0xf]
  %v81 = vld [vmem:[%s0 + $0xf0] sm:$0xf]
  %v82 = vld [vmem:[%s0 + $0xf4] sm:$0xf]
  %v83 = vld [vmem:[%s0 + $0xf8] sm:$0xf]
  %v84 = vld [vmem:[%s0 + $0xfc] sm:$0xf]
  %v85 = vunpack.c.l.bf16 %v21
  %v86 = vunpack.c.l.bf16 %v22
  %v87 = vunpack.c.l.bf16 %v23
  %v88 = vunpack.c.l.bf16 %v24
  %v89 = vunpack.c.l.bf16 %v25
  %v90 = vunpack.c.l.bf16 %v26
  %v91 = vunpack.c.l.bf16 %v27
  %v92 = vunpack.c.l.bf16 %v28
  %v93 = vunpack.c.l.bf16 %v29
  %v94 = vunpack.c.l.bf16 %v30
  %v95 = vunpack.c.l.bf16 %v31
  %v96 = vunpack.c.l.bf16 %v32
  %v97 = vunpack.c.l.bf16 %v33
  %v98 = vunpack.c.l.bf16 %v34
  %v99 = vunpack.c.l.bf16 %v35
  %v100 = vunpack.c.l.bf16 %v36
  %v101 = vunpack.c.l.bf16 %v37
  %v102 = vunpack.c.l.bf16 %v38
  %v103 = vunpack.c.l.bf16 %v39
  %v104 = vunpack.c.l.bf16 %v40
  %v105 = vunpack.c.l.bf16 %v41
  %v106 = vunpack.c.l.bf16 %v42
  %v107 = vunpack.c.l.bf16 %v43
  %v108 = vunpack.c.l.bf16 %v44
  %v109 = vunpack.c.l.bf16 %v45
  %v110 = vunpack.c.l.bf16 %v46
  %v111 = vunpack.c.l.bf16 %v47
  %v112 = vunpack.c.l.bf16 %v48
  %v113 = vunpack.c.l.bf16 %v49
  %v114 = vunpack.c.l.bf16 %v50
  %v115 = vunpack.c.l.bf16 %v51
  %v116 = vunpack.c.l.bf16 %v52
  %v117 = vunpack.c.l.bf16 %v53
  %v118 = vunpack.c.l.bf16 %v54
  %v119 = vunpack.c.l.bf16 %v55
  %v120 = vunpack.c.l.bf16 %v56
  %v121 = vunpack.c.l.bf16 %v57
  %v122 = vunpack.c.l.bf16 %v58
  %v123 = vunpack.c.l.bf16 %v59
  %v124 = vunpack.c.l.bf16 %v60
  %v125 = vunpack.c.l.bf16 %v61
  %v126 = vunpack.c.l.bf16 %v62
  %v127 = vunpack.c.l.bf16 %v63
  %v128 = vunpack.c.l.bf16 %v64
  %v129 = vunpack.c.l.bf16 %v65
  %v130 = vunpack.c.l.bf16 %v66
  %v131 = vunpack.c.l.bf16 %v67
  %v132 = vunpack.c.l.bf16 %v68
  %v133 = vunpack.c.l.bf16 %v69
  %v134 = vunpack.c.l.bf16 %v70
  %v135 = vunpack.c.l.bf16 %v71
  %v136 = vunpack.c.l.bf16 %v72
  %v137 = vunpack.c.l.bf16 %v73
  %v138 = vunpack.c.l.bf16 %v74
  %v139 = vunpack.c.l.bf16 %v75
  %v140 = vunpack.c.l.bf16 %v76
  %v141 = vunpack.c.l.bf16 %v77
  %v142 = vunpack.c.l.bf16 %v78
  %v143 = vunpack.c.l.bf16 %v79
  %v144 = vunpack.c.l.bf16 %v80
  %v145 = vunpack.c.l.bf16 %v81
  %v146 = vunpack.c.l.bf16 %v82
  %v147 = vunpack.c.l.bf16 %v83
  %v148 = vunpack.c.l.bf16 %v84
  %v149 = vld [vmem:[%s1] sm:$0x1]
  %v151 = vlaneseq
  %v152 = vshrl.u32 %v151, 7
  %v153 = vsub.s32 0, %v152
  %v154 = vrot.slane %v149, %v153
  %v156 = vmul.f32 %v85, %v154
  %v157 = vmul.f32 %v86, %v154
  %v158 = vmul.f32 %v87, %v154
  %v159 = vmul.f32 %v88, %v154
  %v160 = vmul.f32 %v89, %v154
  %v161 = vmul.f32 %v90, %v154
  %v162 = vmul.f32 %v91, %v154
  %v163 = vmul.f32 %v92, %v154
  %v164 = vmul.f32 %v93, %v154
  %v165 = vmul.f32 %v94, %v154
  %v166 = vmul.f32 %v95, %v154
  %v167 = vmul.f32 %v96, %v154
  %v168 = vmul.f32 %v97, %v154
  %v169 = vmul.f32 %v98, %v154
  %v170 = vmul.f32 %v99, %v154
  %v171 = vmul.f32 %v100, %v154
  %v172 = vmul.f32 %v101, %v154
  %v173 = vmul.f32 %v102, %v154
  %v174 = vmul.f32 %v103, %v154
  %v175 = vmul.f32 %v104, %v154
  %v176 = vmul.f32 %v105, %v154
  %v177 = vmul.f32 %v106, %v154
  %v178 = vmul.f32 %v107, %v154
  %v179 = vmul.f32 %v108, %v154
  %v180 = vmul.f32 %v109, %v154
  %v181 = vmul.f32 %v110, %v154
  %v182 = vmul.f32 %v111, %v154
  %v183 = vmul.f32 %v112, %v154
  %v184 = vmul.f32 %v113, %v154
  %v185 = vmul.f32 %v114, %v154
  %v186 = vmul.f32 %v115, %v154
  %v187 = vmul.f32 %v116, %v154
  %v188 = vmul.f32 %v117, %v154
  %v189 = vmul.f32 %v118, %v154
  %v190 = vmul.f32 %v119, %v154
  %v191 = vmul.f32 %v120, %v154
  %v192 = vmul.f32 %v121, %v154
  %v193 = vmul.f32 %v122, %v154
  %v194 = vmul.f32 %v123, %v154
  %v195 = vmul.f32 %v124, %v154
  %v196 = vmul.f32 %v125, %v154
  %v197 = vmul.f32 %v126, %v154
  %v198 = vmul.f32 %v127, %v154
  %v199 = vmul.f32 %v128, %v154
  %v200 = vmul.f32 %v129, %v154
  %v201 = vmul.f32 %v130, %v154
  %v202 = vmul.f32 %v131, %v154
  %v203 = vmul.f32 %v132, %v154
  %v204 = vmul.f32 %v133, %v154
  %v205 = vmul.f32 %v134, %v154
  %v206 = vmul.f32 %v135, %v154
  %v207 = vmul.f32 %v136, %v154
  %v208 = vmul.f32 %v137, %v154
  %v209 = vmul.f32 %v138, %v154
  %v210 = vmul.f32 %v139, %v154
  %v211 = vmul.f32 %v140, %v154
  %v212 = vmul.f32 %v141, %v154
  %v213 = vmul.f32 %v142, %v154
  %v214 = vmul.f32 %v143, %v154
  %v215 = vmul.f32 %v144, %v154
  %v216 = vmul.f32 %v145, %v154
  %v217 = vmul.f32 %v146, %v154
  %v218 = vmul.f32 %v147, %v154
  %v219 = vmul.f32 %v148, %v154
  %v220 = vld [vmem:[%s2] sm:$0x1]
  %v222 = vlaneseq
  %v223 = vshrl.u32 %v222, 7
  %v224 = vsub.s32 0, %v223
  %v225 = vrot.slane %v220, %v224
  %v227 = vadd.f32 %v156, %v225
  %v228 = vadd.f32 %v157, %v225
  %v229 = vadd.f32 %v158, %v225
  %v230 = vadd.f32 %v159, %v225
  %v231 = vadd.f32 %v160, %v225
  %v232 = vadd.f32 %v161, %v225
  %v233 = vadd.f32 %v162, %v225
  %v234 = vadd.f32 %v163, %v225
  %v235 = vadd.f32 %v164, %v225
  %v236 = vadd.f32 %v165, %v225
  %v237 = vadd.f32 %v166, %v225
  %v238 = vadd.f32 %v167, %v225
  %v239 = vadd.f32 %v168, %v225
  %v240 = vadd.f32 %v169, %v225
  %v241 = vadd.f32 %v170, %v225
  %v242 = vadd.f32 %v171, %v225
  %v243 = vadd.f32 %v172, %v225
  %v244 = vadd.f32 %v173, %v225
  %v245 = vadd.f32 %v174, %v225
  %v246 = vadd.f32 %v175, %v225
  %v247 = vadd.f32 %v176, %v225
  %v248 = vadd.f32 %v177, %v225
  %v249 = vadd.f32 %v178, %v225
  %v250 = vadd.f32 %v179, %v225
  %v251 = vadd.f32 %v180, %v225
  %v252 = vadd.f32 %v181, %v225
  %v253 = vadd.f32 %v182, %v225
  %v254 = vadd.f32 %v183, %v225
  %v255 = vadd.f32 %v184, %v225
  %v256 = vadd.f32 %v185, %v225
  %v257 = vadd.f32 %v186, %v225
  %v258 = vadd.f32 %v187, %v225
  %v259 = vadd.f32 %v188, %v225
  %v260 = vadd.f32 %v189, %v225
  %v261 = vadd.f32 %v190, %v225
  %v262 = vadd.f32 %v191, %v225
  %v263 = vadd.f32 %v192, %v225
  %v264 = vadd.f32 %v193, %v225
  %v265 = vadd.f32 %v194, %v225
  %v266 = vadd.f32 %v195, %v225
  %v267 = vadd.f32 %v196, %v225
  %v268 = vadd.f32 %v197, %v225
  %v269 = vadd.f32 %v198, %v225
  %v270 = vadd.f32 %v199, %v225
  %v271 = vadd.f32 %v200, %v225
  %v272 = vadd.f32 %v201, %v225
  %v273 = vadd.f32 %v202, %v225
  %v274 = vadd.f32 %v203, %v225
  %v275 = vadd.f32 %v204, %v225
  %v276 = vadd.f32 %v205, %v225
  %v277 = vadd.f32 %v206, %v225
  %v278 = vadd.f32 %v207, %v225
  %v279 = vadd.f32 %v208, %v225
  %v280 = vadd.f32 %v209, %v225
  %v281 = vadd.f32 %v210, %v225
  %v282 = vadd.f32 %v211, %v225
  %v283 = vadd.f32 %v212, %v225
  %v284 = vadd.f32 %v213, %v225
  %v285 = vadd.f32 %v214, %v225
  %v286 = vadd.f32 %v215, %v225
  %v287 = vadd.f32 %v216, %v225
  %v288 = vadd.f32 %v217, %v225
  %v289 = vadd.f32 %v218, %v225
  %v290 = vadd.f32 %v219, %v225
  %v291 = vmax.f32 %v227, 0.0
  %v292 = vmax.f32 %v228, 0.0
  %v293 = vmax.f32 %v229, 0.0
  %v294 = vmax.f32 %v230, 0.0
  %v295 = vmax.f32 %v231, 0.0
  %v296 = vmax.f32 %v232, 0.0
  %v297 = vmax.f32 %v233, 0.0
  %v298 = vmax.f32 %v234, 0.0
  %v299 = vmax.f32 %v235, 0.0
  %v300 = vmax.f32 %v236, 0.0
  %v301 = vmax.f32 %v237, 0.0
  %v302 = vmax.f32 %v238, 0.0
  %v303 = vmax.f32 %v239, 0.0
  %v304 = vmax.f32 %v240, 0.0
  %v305 = vmax.f32 %v241, 0.0
  %v306 = vmax.f32 %v242, 0.0
  %v307 = vmax.f32 %v243, 0.0
  %v308 = vmax.f32 %v244, 0.0
  %v309 = vmax.f32 %v245, 0.0
  %v310 = vmax.f32 %v246, 0.0
  %v311 = vmax.f32 %v247, 0.0
  %v312 = vmax.f32 %v248, 0.0
  %v313 = vmax.f32 %v249, 0.0
  %v314 = vmax.f32 %v250, 0.0
  %v315 = vmax.f32 %v251, 0.0
  %v316 = vmax.f32 %v252, 0.0
  %v317 = vmax.f32 %v253, 0.0
  %v318 = vmax.f32 %v254, 0.0
  %v319 = vmax.f32 %v255, 0.0
  %v320 = vmax.f32 %v256, 0.0
  %v321 = vmax.f32 %v257, 0.0
  %v322 = vmax.f32 %v258, 0.0
  %v323 = vmax.f32 %v259, 0.0
  %v324 = vmax.f32 %v260, 0.0
  %v325 = vmax.f32 %v261, 0.0
  %v326 = vmax.f32 %v262, 0.0
  %v327 = vmax.f32 %v263, 0.0
  %v328 = vmax.f32 %v264, 0.0
  %v329 = vmax.f32 %v265, 0.0
  %v330 = vmax.f32 %v266, 0.0
  %v331 = vmax.f32 %v267, 0.0
  %v332 = vmax.f32 %v268, 0.0
  %v333 = vmax.f32 %v269, 0.0
  %v334 = vmax.f32 %v270, 0.0
  %v335 = vmax.f32 %v271, 0.0
  %v336 = vmax.f32 %v272, 0.0
  %v337 = vmax.f32 %v273, 0.0
  %v338 = vmax.f32 %v274, 0.0
  %v339 = vmax.f32 %v275, 0.0
  %v340 = vmax.f32 %v276, 0.0
  %v341 = vmax.f32 %v277, 0.0
  %v342 = vmax.f32 %v278, 0.0
  %v343 = vmax.f32 %v279, 0.0
  %v344 = vmax.f32 %v280, 0.0
  %v345 = vmax.f32 %v281, 0.0
  %v346 = vmax.f32 %v282, 0.0
  %v347 = vmax.f32 %v283, 0.0
  %v348 = vmax.f32 %v284, 0.0
  %v349 = vmax.f32 %v285, 0.0
  %v350 = vmax.f32 %v286, 0.0
  %v351 = vmax.f32 %v287, 0.0
  %v352 = vmax.f32 %v288, 0.0
  %v353 = vmax.f32 %v289, 0.0
  %v354 = vmax.f32 %v290, 0.0
  %v355 = vpack.c.bf16 %v292, %v291
  %v356 = vpack.c.bf16 %v294, %v293
  %v357 = vpack.c.bf16 %v296, %v295
  %v358 = vpack.c.bf16 %v298, %v297
  %v359 = vpack.c.bf16 %v300, %v299
  %v360 = vpack.c.bf16 %v302, %v301
  %v361 = vpack.c.bf16 %v304, %v303
  %v362 = vpack.c.bf16 %v306, %v305
  %v363 = vpack.c.bf16 %v308, %v307
  %v364 = vpack.c.bf16 %v310, %v309
  %v365 = vpack.c.bf16 %v312, %v311
  %v366 = vpack.c.bf16 %v314, %v313
  %v367 = vpack.c.bf16 %v316, %v315
  %v368 = vpack.c.bf16 %v318, %v317
  %v369 = vpack.c.bf16 %v320, %v319
  %v370 = vpack.c.bf16 %v322, %v321
  %v371 = vpack.c.bf16 %v324, %v323
  %v372 = vpack.c.bf16 %v326, %v325
  %v373 = vpack.c.bf16 %v328, %v327
  %v374 = vpack.c.bf16 %v330, %v329
  %v375 = vpack.c.bf16 %v332, %v331
  %v376 = vpack.c.bf16 %v334, %v333
  %v377 = vpack.c.bf16 %v336, %v335
  %v378 = vpack.c.bf16 %v338, %v337
  %v379 = vpack.c.bf16 %v340, %v339
  %v380 = vpack.c.bf16 %v342, %v341
  %v381 = vpack.c.bf16 %v344, %v343
  %v382 = vpack.c.bf16 %v346, %v345
  %v383 = vpack.c.bf16 %v348, %v347
  %v384 = vpack.c.bf16 %v350, %v349
  %v385 = vpack.c.bf16 %v352, %v351
  %v386 = vpack.c.bf16 %v354, %v353
  %v387 = vld [vmem:[%s3] sm:$0xf]
  %v388 = vld [vmem:[%s3 + $0x4] sm:$0xf]
  %v389 = vld [vmem:[%s3 + $0x8] sm:$0xf]
  %v390 = vld [vmem:[%s3 + $0xc] sm:$0xf]
  %v391 = vld [vmem:[%s3 + $0x10] sm:$0xf]
  %v392 = vld [vmem:[%s3 + $0x14] sm:$0xf]
  %v393 = vld [vmem:[%s3 + $0x18] sm:$0xf]
  %v394 = vld [vmem:[%s3 + $0x1c] sm:$0xf]
  %v395 = vld [vmem:[%s3 + $0x20] sm:$0xf]
  %v396 = vld [vmem:[%s3 + $0x24] sm:$0xf]
  %v397 = vld [vmem:[%s3 + $0x28] sm:$0xf]
  %v398 = vld [vmem:[%s3 + $0x2c] sm:$0xf]
  %v399 = vld [vmem:[%s3 + $0x30] sm:$0xf]
  %v400 = vld [vmem:[%s3 + $0x34] sm:$0xf]
  %v401 = vld [vmem:[%s3 + $0x38] sm:$0xf]
  %v402 = vld [vmem:[%s3 + $0x3c] sm:$0xf]
  %v403 = vld [vmem:[%s4] sm:$0x1]
  %v405 = vlaneseq
  %v406 = vshrl.u32 %v405, 7
  %v407 = vsub.s32 0, %v406
  %v408 = vrot.slane %v403, %v407
  %v426 = vunpack.c.l.b16 %v387
  %v427 = vunpack.c.l.b16 %v388
  %v428 = vunpack.c.l.b16 %v389
  %v429 = vunpack.c.l.b16 %v390
  %v430 = vunpack.c.l.b16 %v391
  %v431 = vunpack.c.l.b16 %v392
  %v432 = vunpack.c.l.b16 %v393
  %v433 = vunpack.c.l.b16 %v394
  %v434 = vunpack.c.l.b16 %v395
  %v435 = vunpack.c.l.b16 %v396
  %v436 = vunpack.c.l.b16 %v397
  %v437 = vunpack.c.l.b16 %v398
  %v438 = vunpack.c.l.b16 %v399
  %v439 = vunpack.c.l.b16 %v400
  %v440 = vunpack.c.l.b16 %v401
  %v441 = vunpack.c.l.b16 %v402
  %v442 = vpack.c.b16 %v427, %v426
  %v443 = vpack.c.b16 %v429, %v428
  %v444 = vpack.c.b16 %v431, %v430
  %v445 = vpack.c.b16 %v433, %v432
  %v446 = vpack.c.b16 %v435, %v434
  %v447 = vpack.c.b16 %v437, %v436
  %v448 = vpack.c.b16 %v439, %v438
  %v449 = vpack.c.b16 %v441, %v440
  %458 = vmatprep.subr.bf16.mxu0 0
  %459 = vmatpush1.bf16.msra.mxu0 %v442
  %460 = vmatprep.subr.bf16.mxu0 0
  %461 = vmatpush1.bf16.msra.mxu0 %v443
  %462 = vmatprep.subr.bf16.mxu0 0
  %463 = vmatpush1.bf16.msra.mxu0 %v444
  %464 = vmatprep.subr.bf16.mxu0 0
  %465 = vmatpush1.bf16.msra.mxu0 %v445
  %466 = vmatprep.subr.bf16.mxu0 0
  %467 = vmatpush1.bf16.msra.mxu0 %v446
  %468 = vmatprep.subr.bf16.mxu0 0
  %469 = vmatpush1.bf16.msra.mxu0 %v447
  %470 = vmatprep.subr.bf16.mxu0 0
  %471 = vmatpush1.bf16.msra.mxu0 %v448
  %472 = vmatprep.subr.bf16.mxu0 0
  %473 = vmatpush1.bf16.msra.mxu0 %v449
  %474 = vmatprep.subr.bf16.mxu0 0
  %475 = vmatpush1.bf16.msra.mxu0 0
  %476 = vmatprep.subr.bf16.mxu0 0
  %477 = vmatpush1.bf16.msra.mxu0 0
  %478 = vmatprep.subr.bf16.mxu0 0
  %479 = vmatpush1.bf16.msra.mxu0 0
  %480 = vmatprep.subr.bf16.mxu0 0
  %481 = vmatpush1.bf16.msra.mxu0 0
  %482 = vmatprep.subr.bf16.mxu0 0
  %483 = vmatpush1.bf16.msra.mxu0 0
  %484 = vmatprep.subr.bf16.mxu0 0
  %485 = vmatpush1.bf16.msra.mxu0 0
  %486 = vmatprep.subr.bf16.mxu0 0
  %487 = vmatpush1.bf16.msra.mxu0 0
  %488 = vmatprep.subr.bf16.mxu0 0
  %489 = vmatpush1.bf16.msra.mxu0 0
  %490 = vmatprep.mubr.bf16.mxu0 0
  %491 = vmatmul.mubr.bf16.gmra.mrb[0].mxu0 %v355
  %v492 = vpop.f32.mrb[0].mxu0
  %v493 = vadd.f32 %v408, %v492
  %v494 = vpop.f32.mrb[0].mxu0
  %v495 = vpop.f32.mrb[0].mxu0
  %v496 = vadd.f32 %v408, %v495
  %v497 = vpop.f32.mrb[0].mxu0
  %498 = vmatprep.mubr.bf16.mxu0 0
  %499 = vmatmul.mubr.bf16.gmra.mrb[0].mxu0 %v356
  %v500 = vpop.f32.mrb[0].mxu0
  %v501 = vadd.f32 %v408, %v500
  %v502 = vpop.f32.mrb[0].mxu0
  %v503 = vpop.f32.mrb[0].mxu0
  %v504 = vadd.f32 %v408, %v503
  %v505 = vpop.f32.mrb[0].mxu0
  %506 = vmatprep.mubr.bf16.mxu0 0
  %507 = vmatmul.mubr.bf16.gmra.mrb[0].mxu0 %v357
  %v508 = vpop.f32.mrb[0].mxu0
  %v509 = vadd.f32 %v408, %v508
  %v510 = vpop.f32.mrb[0].mxu0
  %v511 = vpop.f32.mrb[0].mxu0
  %v512 = vadd.f32 %v408, %v511
  %v513 = vpop.f32.mrb[0].mxu0
  %514 = vmatprep.mubr.bf16.mxu0 0
  %515 = vmatmul.mubr.bf16.gmra.mrb[0].mxu0 %v358
  %v516 = vpop.f32.mrb[0].mxu0
  %v517 = vadd.f32 %v408, %v516
  %v518 = vpop.f32.mrb[0].mxu0
  %v519 = vpop.f32.mrb[0].mxu0
  %v520 = vadd.f32 %v408, %v519
  %v521 = vpop.f32.mrb[0].mxu0
  %522 = vmatprep.mubr.bf16.mxu0 0
  %523 = vmatmul.mubr.bf16.gmra.mrb[0].mxu0 %v359
  %v524 = vpop.f32.mrb[0].mxu0
  %v525 = vadd.f32 %v408, %v524
  %v526 = vpop.f32.mrb[0].mxu0
  %v527 = vpop.f32.mrb[0].mxu0
  %v528 = vadd.f32 %v408, %v527
  %v529 = vpop.f32.mrb[0].mxu0
  %530 = vmatprep.mubr.bf16.mxu0 0
  %531 = vmatmul.mubr.bf16.gmra.mrb[0].mxu0 %v360
  %v532 = vpop.f32.mrb[0].mxu0
  %v533 = vadd.f32 %v408, %v532
  %v534 = vpop.f32.mrb[0].mxu0
  %v535 = vpop.f32.mrb[0].mxu0
  %v536 = vadd.f32 %v408, %v535
  %v537 = vpop.f32.mrb[0].mxu0
  %538 = vmatprep.mubr.bf16.mxu0 0
  %539 = vmatmul.mubr.bf16.gmra.mrb[0].mxu0 %v361
  %v540 = vpop.f32.mrb[0].mxu0
  %v541 = vadd.f32 %v408, %v540
  %v542 = vpop.f32.mrb[0].mxu0
  %v543 = vpop.f32.mrb[0].mxu0
  %v544 = vadd.f32 %v408, %v543
  %v545 = vpop.f32.mrb[0].mxu0
  %546 = vmatprep.mubr.bf16.mxu0 0
  %547 = vmatmul.mubr.bf16.gmra.mrb[0].mxu0 %v362
  %v548 = vpop.f32.mrb[0].mxu0
  %v549 = vadd.f32 %v408, %v548
  %v550 = vpop.f32.mrb[0].mxu0
  %v551 = vpop.f32.mrb[0].mxu0
  %v552 = vadd.f32 %v408, %v551
  %v553 = vpop.f32.mrb[0].mxu0
  %554 = vmatprep.mubr.bf16.mxu0 0
  %555 = vmatmul.mubr.bf16.gmra.mrb[0].mxu0 %v363
  %v556 = vpop.f32.mrb[0].mxu0
  %v557 = vadd.f32 %v408, %v556
  %v558 = vpop.f32.mrb[0].mxu0
  %v559 = vpop.f32.mrb[0].mxu0
  %v560 = vadd.f32 %v408, %v559
  %v561 = vpop.f32.mrb[0].mxu0
  %562 = vmatprep.mubr.bf16.mxu0 0
  %563 = vmatmul.mubr.bf16.gmra.mrb[0].mxu0 %v364
  %v564 = vpop.f32.mrb[0].mxu0
  %v565 = vadd.f32 %v408, %v564
  %v566 = vpop.f32.mrb[0].mxu0
  %v567 = vpop.f32.mrb[0].mxu0
  %v568 = vadd.f32 %v408, %v567
  %v569 = vpop.f32.mrb[0].mxu0
  %570 = vmatprep.mubr.bf16.mxu0 0
  %571 = vmatmul.mubr.bf16.gmra.mrb[0].mxu0 %v365
  %v572 = vpop.f32.mrb[0].mxu0
  %v573 = vadd.f32 %v408, %v572
  %v574 = vpop.f32.mrb[0].mxu0
  %v575 = vpop.f32.mrb[0].mxu0
  %v576 = vadd.f32 %v408, %v575
  %v577 = vpop.f32.mrb[0].mxu0
  %578 = vmatprep.mubr.bf16.mxu0 0
  %579 = vmatmul.mubr.bf16.gmra.mrb[0].mxu0 %v366
  %v580 = vpop.f32.mrb[0].mxu0
  %v581 = vadd.f32 %v408, %v580
  %v582 = vpop.f32.mrb[0].mxu0
  %v583 = vpop.f32.mrb[0].mxu0
  %v584 = vadd.f32 %v408, %v583
  %v585 = vpop.f32.mrb[0].mxu0
  %586 = vmatprep.mubr.bf16.mxu0 0
  %587 = vmatmul.mubr.bf16.gmra.mrb[0].mxu0 %v367
  %v588 = vpop.f32.mrb[0].mxu0
  %v589 = vadd.f32 %v408, %v588
  %v590 = vpop.f32.mrb[0].mxu0
  %v591 = vpop.f32.mrb[0].mxu0
  %v592 = vadd.f32 %v408, %v591
  %v593 = vpop.f32.mrb[0].mxu0
  %594 = vmatprep.mubr.bf16.mxu0 0
  %595 = vmatmul.mubr.bf16.gmra.mrb[0].mxu0 %v368
  %v596 = vpop.f32.mrb[0].mxu0
  %v597 = vadd.f32 %v408, %v596
  %v598 = vpop.f32.mrb[0].mxu0
  %v599 = vpop.f32.mrb[0].mxu0
  %v600 = vadd.f32 %v408, %v599
  %v601 = vpop.f32.mrb[0].mxu0
  %602 = vmatprep.mubr.bf16.mxu0 0
  %603 = vmatmul.mubr.bf16.gmra.mrb[0].mxu0 %v369
  %v604 = vpop.f32.mrb[0].mxu0
  %v605 = vadd.f32 %v408, %v604
  %v606 = vpop.f32.mrb[0].mxu0
  %v607 = vpop.f32.mrb[0].mxu0
  %v608 = vadd.f32 %v408, %v607
  %v609 = vpop.f32.mrb[0].mxu0
  %610 = vmatprep.mubr.bf16.mxu0 0
  %611 = vmatmul.mubr.bf16.gmra.mrb[0].mxu0 %v370
  %v612 = vpop.f32.mrb[0].mxu0
  %v613 = vadd.f32 %v408, %v612
  %v614 = vpop.f32.mrb[0].mxu0
  %v615 = vpop.f32.mrb[0].mxu0
  %v616 = vadd.f32 %v408, %v615
  %v617 = vpop.f32.mrb[0].mxu0
  %618 = vmatprep.mubr.bf16.mxu0 0
  %619 = vmatmul.mubr.bf16.gmra.mrb[0].mxu0 %v371
  %v620 = vpop.f32.mrb[0].mxu0
  %v621 = vadd.f32 %v408, %v620
  %v622 = vpop.f32.mrb[0].mxu0
  %v623 = vpop.f32.mrb[0].mxu0
  %v624 = vadd.f32 %v408, %v623
  %v625 = vpop.f32.mrb[0].mxu0
  %626 = vmatprep.mubr.bf16.mxu0 0
  %627 = vmatmul.mubr.bf16.gmra.mrb[0].mxu0 %v372
  %v628 = vpop.f32.mrb[0].mxu0
  %v629 = vadd.f32 %v408, %v628
  %v630 = vpop.f32.mrb[0].mxu0
  %v631 = vpop.f32.mrb[0].mxu0
  %v632 = vadd.f32 %v408, %v631
  %v633 = vpop.f32.mrb[0].mxu0
  %634 = vmatprep.mubr.bf16.mxu0 0
  %635 = vmatmul.mubr.bf16.gmra.mrb[0].mxu0 %v373
  %v636 = vpop.f32.mrb[0].mxu0
  %v637 = vadd.f32 %v408, %v636
  %v638 = vpop.f32.mrb[0].mxu0
  %v639 = vpop.f32.mrb[0].mxu0
  %v640 = vadd.f32 %v408, %v639
  %v641 = vpop.f32.mrb[0].mxu0
  %642 = vmatprep.mubr.bf16.mxu0 0
  %643 = vmatmul.mubr.bf16.gmra.mrb[0].mxu0 %v374
  %v644 = vpop.f32.mrb[0].mxu0
  %v645 = vadd.f32 %v408, %v644
  %v646 = vpop.f32.mrb[0].mxu0
  %v647 = vpop.f32.mrb[0].mxu0
  %v648 = vadd.f32 %v408, %v647
  %v649 = vpop.f32.mrb[0].mxu0
  %650 = vmatprep.mubr.bf16.mxu0 0
  %651 = vmatmul.mubr.bf16.gmra.mrb[0].mxu0 %v375
  %v652 = vpop.f32.mrb[0].mxu0
  %v653 = vadd.f32 %v408, %v652
  %v654 = vpop.f32.mrb[0].mxu0
  %v655 = vpop.f32.mrb[0].mxu0
  %v656 = vadd.f32 %v408, %v655
  %v657 = vpop.f32.mrb[0].mxu0
  %658 = vmatprep.mubr.bf16.mxu0 0
  %659 = vmatmul.mubr.bf16.gmra.mrb[0].mxu0 %v376
  %v660 = vpop.f32.mrb[0].mxu0
  %v661 = vadd.f32 %v408, %v660
  %v662 = vpop.f32.mrb[0].mxu0
  %v663 = vpop.f32.mrb[0].mxu0
  %v664 = vadd.f32 %v408, %v663
  %v665 = vpop.f32.mrb[0].mxu0
  %666 = vmatprep.mubr.bf16.mxu0 0
  %667 = vmatmul.mubr.bf16.gmra.mrb[0].mxu0 %v377
  %v668 = vpop.f32.mrb[0].mxu0
  %v669 = vadd.f32 %v408, %v668
  %v670 = vpop.f32.mrb[0].mxu0
  %v671 = vpop.f32.mrb[0].mxu0
  %v672 = vadd.f32 %v408, %v671
  %v673 = vpop.f32.mrb[0].mxu0
  %674 = vmatprep.mubr.bf16.mxu0 0
  %675 = vmatmul.mubr.bf16.gmra.mrb[0].mxu0 %v378
  %v676 = vpop.f32.mrb[0].mxu0
  %v677 = vadd.f32 %v408, %v676
  %v678 = vpop.f32.mrb[0].mxu0
  %v679 = vpop.f32.mrb[0].mxu0
  %v680 = vadd.f32 %v408, %v679
  %v681 = vpop.f32.mrb[0].mxu0
  %682 = vmatprep.mubr.bf16.mxu0 0
  %683 = vmatmul.mubr.bf16.gmra.mrb[0].mxu0 %v379
  %v684 = vpop.f32.mrb[0].mxu0
  %v685 = vadd.f32 %v408, %v684
  %v686 = vpop.f32.mrb[0].mxu0
  %v687 = vpop.f32.mrb[0].mxu0
  %v688 = vadd.f32 %v408, %v687
  %v689 = vpop.f32.mrb[0].mxu0
  %690 = vmatprep.mubr.bf16.mxu0 0
  %691 = vmatmul.mubr.bf16.gmra.mrb[0].mxu0 %v380
  %v692 = vpop.f32.mrb[0].mxu0
  %v693 = vadd.f32 %v408, %v692
  %v694 = vpop.f32.mrb[0].mxu0
  %v695 = vpop.f32.mrb[0].mxu0
  %v696 = vadd.f32 %v408, %v695
  %v697 = vpop.f32.mrb[0].mxu0
  %698 = vmatprep.mubr.bf16.mxu0 0
  %699 = vmatmul.mubr.bf16.gmra.mrb[0].mxu0 %v381
  %v700 = vpop.f32.mrb[0].mxu0
  %v701 = vadd.f32 %v408, %v700
  %v702 = vpop.f32.mrb[0].mxu0
  %v703 = vpop.f32.mrb[0].mxu0
  %v704 = vadd.f32 %v408, %v703
  %v705 = vpop.f32.mrb[0].mxu0
  %706 = vmatprep.mubr.bf16.mxu0 0
  %707 = vmatmul.mubr.bf16.gmra.mrb[0].mxu0 %v382
  %v708 = vpop.f32.mrb[0].mxu0
  %v709 = vadd.f32 %v408, %v708
  %v710 = vpop.f32.mrb[0].mxu0
  %v711 = vpop.f32.mrb[0].mxu0
  %v712 = vadd.f32 %v408, %v711
  %v713 = vpop.f32.mrb[0].mxu0
  %714 = vmatprep.mubr.bf16.mxu0 0
  %715 = vmatmul.mubr.bf16.gmra.mrb[0].mxu0 %v383
  %v716 = vpop.f32.mrb[0].mxu0
  %v717 = vadd.f32 %v408, %v716
  %v718 = vpop.f32.mrb[0].mxu0
  %v719 = vpop.f32.mrb[0].mxu0
  %v720 = vadd.f32 %v408, %v719
  %v721 = vpop.f32.mrb[0].mxu0
  %722 = vmatprep.mubr.bf16.mxu0 0
  %723 = vmatmul.mubr.bf16.gmra.mrb[0].mxu0 %v384
  %v724 = vpop.f32.mrb[0].mxu0
  %v725 = vadd.f32 %v408, %v724
  %v726 = vpop.f32.mrb[0].mxu0
  %v727 = vpop.f32.mrb[0].mxu0
  %v728 = vadd.f32 %v408, %v727
  %v729 = vpop.f32.mrb[0].mxu0
  %730 = vmatprep.mubr.bf16.mxu0 0
  %731 = vmatmul.mubr.bf16.gmra.mrb[0].mxu0 %v385
  %v732 = vpop.f32.mrb[0].mxu0
  %v733 = vadd.f32 %v408, %v732
  %v734 = vpop.f32.mrb[0].mxu0
  %v735 = vpop.f32.mrb[0].mxu0
  %v736 = vadd.f32 %v408, %v735
  %v737 = vpop.f32.mrb[0].mxu0
  %738 = vmatprep.mubr.bf16.mxu0 0
  %739 = vmatmul.mubr.bf16.gmra.mrb[0].mxu0 %v386
  %v740 = vpop.f32.mrb[0].mxu0
  %v741 = vadd.f32 %v408, %v740
  %v742 = vpop.f32.mrb[0].mxu0
  %v743 = vpop.f32.mrb[0].mxu0
  %v744 = vadd.f32 %v408, %v743
  %v745 = vpop.f32.mrb[0].mxu0
  %746 = vdwg.mxu0
  %747 = vst [vmem:[%s5] sm:$0xff] %v493
  %748 = vst [vmem:[%s5 + $0x8] sm:$0xff] %v496
  %749 = vst [vmem:[%s5 + $0x10] sm:$0xff] %v501
  %750 = vst [vmem:[%s5 + $0x18] sm:$0xff] %v504
  %751 = vst [vmem:[%s5 + $0x20] sm:$0xff] %v509
  %752 = vst [vmem:[%s5 + $0x28] sm:$0xff] %v512
  %753 = vst [vmem:[%s5 + $0x30] sm:$0xff] %v517
  %754 = vst [vmem:[%s5 + $0x38] sm:$0xff] %v520
  %755 = vst [vmem:[%s5 + $0x40] sm:$0xff] %v525
  %756 = vst [vmem:[%s5 + $0x48] sm:$0xff] %v528
  %757 = vst [vmem:[%s5 + $0x50] sm:$0xff] %v533
  %758 = vst [vmem:[%s5 + $0x58] sm:$0xff] %v536
  %759 = vst [vmem:[%s5 + $0x60] sm:$0xff] %v541
  %760 = vst [vmem:[%s5 + $0x68] sm:$0xff] %v544
  %761 = vst [vmem:[%s5 + $0x70] sm:$0xff] %v549
  %762 = vst [vmem:[%s5 + $0x78] sm:$0xff] %v552
  %763 = vst [vmem:[%s5 + $0x80] sm:$0xff] %v557
  %764 = vst [vmem:[%s5 + $0x88] sm:$0xff] %v560
  %765 = vst [vmem:[%s5 + $0x90] sm:$0xff] %v565
  %766 = vst [vmem:[%s5 + $0x98] sm:$0xff] %v568
  %767 = vst [vmem:[%s5 + $0xa0] sm:$0xff] %v573
  %768 = vst [vmem:[%s5 + $0xa8] sm:$0xff] %v576
  %769 = vst [vmem:[%s5 + $0xb0] sm:$0xff] %v581
  %770 = vst [vmem:[%s5 + $0xb8] sm:$0xff] %v584
  %771 = vst [vmem:[%s5 + $0xc0] sm:$0xff] %v589
  %772 = vst [vmem:[%s5 + $0xc8] sm:$0xff] %v592
  %773 = vst [vmem:[%s5 + $0xd0] sm:$0xff] %v597
  %774 = vst [vmem:[%s5 + $0xd8] sm:$0xff] %v600
  %775 = vst [vmem:[%s5 + $0xe0] sm:$0xff] %v605
  %776 = vst [vmem:[%s5 + $0xe8] sm:$0xff] %v608
  %777 = vst [vmem:[%s5 + $0xf0] sm:$0xff] %v613
  %778 = vst [vmem:[%s5 + $0xf8] sm:$0xff] %v616
  %779 = vst [vmem:[%s5 + $0x100] sm:$0xff] %v621
  %780 = vst [vmem:[%s5 + $0x108] sm:$0xff] %v624
  %781 = vst [vmem:[%s5 + $0x110] sm:$0xff] %v629
  %782 = vst [vmem:[%s5 + $0x118] sm:$0xff] %v632
  %783 = vst [vmem:[%s5 + $0x120] sm:$0xff] %v637
  %784 = vst [vmem:[%s5 + $0x128] sm:$0xff] %v640
  %785 = vst [vmem:[%s5 + $0x130] sm:$0xff] %v645
  %786 = vst [vmem:[%s5 + $0x138] sm:$0xff] %v648
  %787 = vst [vmem:[%s5 + $0x140] sm:$0xff] %v653
  %788 = vst [vmem:[%s5 + $0x148] sm:$0xff] %v656
  %789 = vst [vmem:[%s5 + $0x150] sm:$0xff] %v661
  %790 = vst [vmem:[%s5 + $0x158] sm:$0xff] %v664
  %791 = vst [vmem:[%s5 + $0x160] sm:$0xff] %v669
  %792 = vst [vmem:[%s5 + $0x168] sm:$0xff] %v672
  %793 = vst [vmem:[%s5 + $0x170] sm:$0xff] %v677
  %794 = vst [vmem:[%s5 + $0x178] sm:$0xff] %v680
  %795 = vst [vmem:[%s5 + $0x180] sm:$0xff] %v685
  %796 = vst [vmem:[%s5 + $0x188] sm:$0xff] %v688
  %797 = vst [vmem:[%s5 + $0x190] sm:$0xff] %v693
  %798 = vst [vmem:[%s5 + $0x198] sm:$0xff] %v696
  %799 = vst [vmem:[%s5 + $0x1a0] sm:$0xff] %v701
  %800 = vst [vmem:[%s5 + $0x1a8] sm:$0xff] %v704
  %801 = vst [vmem:[%s5 + $0x1b0] sm:$0xff] %v709
  %802 = vst [vmem:[%s5 + $0x1b8] sm:$0xff] %v712
  %803 = vst [vmem:[%s5 + $0x1c0] sm:$0xff] %v717
  %804 = vst [vmem:[%s5 + $0x1c8] sm:$0xff] %v720
  %805 = vst [vmem:[%s5 + $0x1d0] sm:$0xff] %v725
  %806 = vst [vmem:[%s5 + $0x1d8] sm:$0xff] %v728
  %807 = vst [vmem:[%s5 + $0x1e0] sm:$0xff] %v733
  %808 = vst [vmem:[%s5 + $0x1e8] sm:$0xff] %v736
  %809 = vst [vmem:[%s5 + $0x1f0] sm:$0xff] %v741
  %810 = vst [vmem:[%s5 + $0x1f8] sm:$0xff] %v744
  // Predicated region
  $region22: #{gin_forward.11} parent=0 // pred_check
    _
  $region23: #{gin_forward.11} parent=0 // pred_check_branch
    %812 = sbr.rel (0) target = $region25
  $region24: #{gin_forward.11} parent=0 // pred_region
    _
  $region25: #{gin_forward.11} parent=0 // pred_fallthru
    _
  // Predicated region
  $region26: #{gin_forward.11} parent=0 // pred_check
    _
  $region27: #{gin_forward.11} parent=0 // pred_check_branch
    %814 = sbr.rel (0) target = $region29
  $region28: #{gin_forward.11} parent=0 // pred_region
    _
  $region29: #{gin_forward.11} parent=0 // pred_fallthru
    _

</llo_original>
